<compile_context>
chip_gen: v7x
topology: tpu7x:2x2x1
jax: 0.10.0
libtpu: 0.0.40
codegen_flags: <defaults>
</compile_context>

<pallas_src>
import math
import functools

import jax
import jax.numpy as jnp
from jax.experimental import pallas as pl
from jax.experimental.pallas import tpu as pltpu


_VMEM_LIMIT = 48 * 1024 * 1024      # safe on v5e/v6e (128 MiB) and v7x (64 MiB)
_TILE_BUDGET = 20 * 1024 * 1024     # per-step VMEM working-set budget
_ROW_TILE_WANT = 512                # mem-bound kernels ~85% of HBM roofline
_APPROX_RECIP = True                # EUP reciprocal in softmax (set False to validate)


# ----------------------------------------------------------------------------
# Pallas kernels
# ----------------------------------------------------------------------------

def _ln(x, g, b):
    """LayerNorm over the last axis (eps = 1e-5, torch default)."""
    mu = jnp.mean(x, axis=-1, keepdims=True)
    xc = x - mu
    var = jnp.mean(xc * xc, axis=-1, keepdims=True)
    return xc * jax.lax.rsqrt(var + 1e-5) * g + b


def _recip(x):
    if _APPROX_RECIP:
        return pl.reciprocal(x, approx=True)
    return 1.0 / x


def _layernorm_kernel(x_ref, g_ref, b_ref, o_ref):
    o_ref[...] = _ln(x_ref[...], g_ref[...], b_ref[...])


def _pre_norm_kernel(x_ref, pos_ref, g_ref, b_ref, mem_ref, memk_ref, memv_ref):
    """pre_norm(src) -> memory (f32, returned) plus bf16 K-input (memory+pos)
    and bf16 V-input (memory) slabs reused by every layer's kv_ca kernel."""
    xn = _ln(x_ref[...], g_ref[...], b_ref[...])
    mem_ref[...] = xn
    memk_ref[...] = (xn + pos_ref[...]).astype(memk_ref.dtype)
    memv_ref[...] = xn.astype(memv_ref.dtype)


def _ln_qkv_sa_kernel(x_ref, qp_ref, g_ref, b_ref,
                      wq_ref, bq_ref, wk_ref, bk_ref, wv_ref, bv_ref,
                      qo_ref, ko_ref, vo_ref):
    """Self-attn input block: norm1(tgt); q=k=(normed+qpos)@Wq/Wk, v=normed@Wv.
    1/sqrt(hd) already folded into wq/bq.  Outputs are bf16."""
    xn = _ln(x_ref[...], g_ref[...], b_ref[...])
    xqk = (xn + qp_ref[...]).astype(jnp.bfloat16)
    xv = xn.astype(jnp.bfloat16)
    qo_ref[...] = (jnp.dot(xqk, wq_ref[...], preferred_element_type=jnp.float32)
                   + bq_ref[...]).astype(qo_ref.dtype)
    ko_ref[...] = (jnp.dot(xqk, wk_ref[...], preferred_element_type=jnp.float32)
                   + bk_ref[...]).astype(ko_ref.dtype)
    vo_ref[...] = (jnp.dot(xv, wv_ref[...], preferred_element_type=jnp.float32)
                   + bv_ref[...]).astype(vo_ref.dtype)


def _ln_q_ca_kernel(x_ref, qp_ref, g_ref, b_ref, wq_ref, bq_ref, qo_ref):
    """Cross-attn query: (norm2(tgt) + query_pos) @ Wq (scale folded in)."""
    xn = _ln(x_ref[...], g_ref[...], b_ref[...])
    xq = (xn + qp_ref[...]).astype(jnp.bfloat16)
    qo_ref[...] = (jnp.dot(xq, wq_ref[...], preferred_element_type=jnp.float32)
                   + bq_ref[...]).astype(qo_ref.dtype)


def _kv_ca_kernel(kin_ref, vin_ref, wk_ref, bk_ref, wv_ref, bv_ref,
                  ko_ref, vo_ref):
    """Cross-attn K/V: K = (memory+pos)@Wk, V = memory@Wv (bf16 in / bf16 out)."""
    ko_ref[...] = (jnp.dot(kin_ref[...], wk_ref[...],
                           preferred_element_type=jnp.float32)
                   + bk_ref[...]).astype(ko_ref.dtype)
    vo_ref[...] = (jnp.dot(vin_ref[...], wv_ref[...],
                           preferred_element_type=jnp.float32)
                   + bv_ref[...]).astype(vo_ref.dtype)


def _attn_block_kernel(nhead, has_mask, *refs):
    """Per-(batch, query-tile) all-heads attention + out-proj + residual add.
    q: (1,TL,E) bf16, k/v: (1,S,E) bf16, [m: (1,1,S) f32 additive],
    res: (1,TL,E) f32, wo: (E,E) bf16 (in->out), bo: (1,E) f32,
    cat_ref: (TL,E) bf16 VMEM scratch collecting all heads' outputs.
    Scores are pre-scaled (1/sqrt(hd) folded into the Q projection)."""
    if has_mask:
        (q_ref, k_ref, v_ref, m_ref, res_ref, wo_ref, bo_ref,
         o_ref, cat_ref) = refs
    else:
        (q_ref, k_ref, v_ref, res_ref, wo_ref, bo_ref, o_ref, cat_ref) = refs
        m_ref = None
    l = q_ref.shape[1]
    s_len = k_ref.shape[1]
    e = q_ref.shape[-1]
    hd = e // nhead

    if has_mask:
        madd = jnp.broadcast_to(m_ref[0], (l, s_len))   # hoisted out of loop

    for h_i in range(nhead):                            # static unroll
        lo = h_i * hd
        q = q_ref[0, :, lo:lo + hd]                     # (TL, hd) bf16
        k = k_ref[0, :, lo:lo + hd]                     # (S,  hd) bf16
        v = v_ref[0, :, lo:lo + hd]                     # (S,  hd) bf16
        s = jax.lax.dot_general(q, k, (((1,), (1,)), ((), ())),
                                preferred_element_type=jnp.float32)  # (TL, S)
        if has_mask:
            s = s + madd
        s = s - jnp.max(s, axis=-1, keepdims=True)
        p = jnp.exp(s)
        p = p * _recip(jnp.sum(p, axis=-1, keepdims=True))
        oh = jnp.dot(p.astype(jnp.bfloat16), v,
                     preferred_element_type=jnp.float32)              # (TL, hd)
        cat_ref[:, lo:lo + hd] = oh.astype(jnp.bfloat16)

    # single full-contraction (K = E) out projection + residual + bias
    o_ref[0] = (res_ref[0] + bo_ref[...] +
                jnp.dot(cat_ref[...], wo_ref[...],
                        preferred_element_type=jnp.float32))


def _ffn_kernel(x_ref, g_ref, b_ref, w1_ref, b1_ref, w2_ref, b2_ref, o_ref):
    """Fused norm3 -> lin1 -> ReLU -> lin2 -> residual.  The (tile, dff)
    intermediate never leaves VMEM."""
    x = x_ref[...]
    xn = _ln(x, g_ref[...], b_ref[...])
    h = jnp.dot(xn.astype(jnp.bfloat16), w1_ref[...],
                preferred_element_type=jnp.float32) + b1_ref[...]
    h = jnp.maximum(h, 0.0)
    y = jnp.dot(h.astype(jnp.bfloat16), w2_ref[...],
                preferred_element_type=jnp.float32) + b2_ref[...]
    o_ref[...] = x + y


# ----------------------------------------------------------------------------
# pallas_call wrappers
# ----------------------------------------------------------------------------

def _pick_row_tile(n, row_bytes, const_bytes, want=_ROW_TILE_WANT):
    """Row tile for token-major kernels.  Never collapses a large n into one
    block: a fixed tile + cdiv grid keeps DMA/compute pipelining and megacore
    sharding; the budget check keeps the working set inside scoped VMEM."""
    if n <= want:
        return n
    tm = want
    while tm > 64 and tm * row_bytes + const_bytes > _TILE_BUDGET:
        tm //= 2
    return tm


def _row_call(kernel, n, outs, row_inputs, const_inputs, extra_row_bytes=0):
    """Row-tiled pallas_call over (n, *) slabs.  row_inputs are tiled over the
    token axis (grid = cdiv(n, tile), edge block padded/masked by Pallas);
    const_inputs (weights / biases / LN params, all 2-D) are passed whole."""
    row_bytes = extra_row_bytes
    for a in row_inputs:
        row_bytes += 2 * a.shape[1] * a.dtype.itemsize          # double-buffered
    for cols, dt in outs:
        row_bytes += 2 * cols * jnp.dtype(dt).itemsize
    const_bytes = sum(2 * a.size * a.dtype.itemsize for a in const_inputs)
    tm = _pick_row_tile(n, row_bytes, const_bytes)

    in_specs = [pl.BlockSpec((tm, a.shape[1]), lambda i: (i, 0))
                for a in row_inputs]
    in_specs += [pl.BlockSpec(a.shape, lambda i: (0, 0)) for a in const_inputs]
    out_shape = tuple(jax.ShapeDtypeStruct((n, c), dt) for c, dt in outs)
    out_specs = tuple(pl.BlockSpec((tm, c), lambda i: (i, 0)) for c, _ in outs)
    if len(outs) == 1:
        out_shape, out_specs = out_shape[0], out_specs[0]
    return pl.pallas_call(
        kernel,
        out_shape=out_shape,
        grid=(pl.cdiv(n, tm),),
        in_specs=in_specs,
        out_specs=out_specs,
        compiler_params=pltpu.CompilerParams(
            dimension_semantics=("parallel",),
            vmem_limit_bytes=_VMEM_LIMIT),
    )(*row_inputs, *const_inputs)


def layernorm(x2d, g, b):
    n, d = x2d.shape
    return _row_call(_layernorm_kernel, n, [(d, jnp.float32)], [x2d], [g, b])


def pre_norm_block(src2d, pos2d, g, b):
    n, d = src2d.shape
    return _row_call(_pre_norm_kernel, n,
                     [(d, jnp.float32), (d, jnp.bfloat16), (d, jnp.bfloat16)],
                     [src2d, pos2d], [g, b])


def ln_qkv_sa(x2d, qp2d, g, b, wq_t, bq, wk_t, bk, wv_t, bv):
    n, e = x2d.shape
    return _row_call(_ln_qkv_sa_kernel, n,
                     [(e, jnp.bfloat16)] * 3, [x2d, qp2d],
                     [g, b, wq_t, bq, wk_t, bk, wv_t, bv])


def ln_q_ca(x2d, qp2d, g, b, wq_t, bq):
    n, e = x2d.shape
    return _row_call(_ln_q_ca_kernel, n, [(e, jnp.bfloat16)], [x2d, qp2d],
                     [g, b, wq_t, bq])


def kv_ca(kin2d, vin2d, wk_t, bk, wv_t, bv):
    n, e = kin2d.shape
    return _row_call(_kv_ca_kernel, n, [(e, jnp.bfloat16)] * 2, [kin2d, vin2d],
                     [wk_t, bk, wv_t, bv])


def ffn_block(x2d, g, b, w1_t, b1, w2_t, b2):
    n, e = x2d.shape
    dff = w1_t.shape[1]
    return _row_call(_ffn_kernel, n, [(e, jnp.float32)], [x2d],
                     [g, b, w1_t, b1, w2_t, b2],
                     extra_row_bytes=dff * 4)


def attention_block(q, k, v, res, wo_t, bo, nhead, mask_add=None):
    """q/res: (B,L,E) bf16/f32; k/v: (B,S,E) bf16; mask_add: (B,1,S) f32 or
    None (self-attn path carries no mask at all)."""
    b, l, e = q.shape
    s = k.shape[1]
    tl = l if l <= 128 else 128          # 2nd parallel axis: query tiles
    n_l = pl.cdiv(l, tl)

    q_spec = pl.BlockSpec((1, tl, e), lambda i, j: (i, j, 0))
    kv_spec = pl.BlockSpec((1, s, e), lambda i, j: (i, 0, 0))
    res_spec = pl.BlockSpec((1, tl, e), lambda i, j: (i, j, 0))

    in_specs = [q_spec, kv_spec, kv_spec]
    args = [q, k, v]
    if mask_add is not None:
        in_specs.append(pl.BlockSpec((1, 1, s), lambda i, j: (i, 0, 0)))
        args.append(mask_add)
    in_specs += [pl.BlockSpec((e, e), lambda i, j: (0, 0)),
                 pl.BlockSpec((1, e), lambda i, j: (0, 0))]
    args += [res, wo_t, bo]
    in_specs.insert(len(in_specs) - 2, res_spec)  # res goes before wo/bo

    return pl.pallas_call(
        functools.partial(_attn_block_kernel, nhead, mask_add is not None),
        out_shape=jax.ShapeDtypeStruct((b, l, e), jnp.float32),
        grid=(b, n_l),
        in_specs=in_specs,
        out_specs=res_spec,
        scratch_shapes=[pltpu.VMEM((tl, e), jnp.bfloat16)],
        compiler_params=pltpu.CompilerParams(
            dimension_semantics=("parallel", "parallel"),
            vmem_limit_bytes=_VMEM_LIMIT),
    )(*args)


# ----------------------------------------------------------------------------
# Model glue (runs under a single jax.jit)
# ----------------------------------------------------------------------------

def decoder_layer(tgt, qp_2d, memk_2d, memv_2d, mem_mask, lp, nhead):
    """TransformerDecoderLayer.forward_pre, sa_first=True, dropout=identity."""
    b, nq, e = tgt.shape
    s = memk_2d.shape[0] // b

    # --- self-attention block (no key-padding mask in the reference)
    tgt_2d = tgt.reshape(b * nq, e)
    q, k, v = ln_qkv_sa(tgt_2d, qp_2d, lp["norm1_g"], lp["norm1_b"],
                        lp["sa_wq_t"], lp["sa_bq"], lp["sa_wk_t"], lp["sa_bk"],
                        lp["sa_wv_t"], lp["sa_bv"])
    tgt = attention_block(q.reshape(b, nq, e), k.reshape(b, nq, e),
                          v.reshape(b, nq, e), tgt,
                          lp["sa_wo_t"], lp["sa_bo"], nhead, mask_add=None)

    # --- cross-attention block
    tgt_2d = tgt.reshape(b * nq, e)
    qx = ln_q_ca(tgt_2d, qp_2d, lp["norm2_g"], lp["norm2_b"],
                 lp["ca_wq_t"], lp["ca_bq"])
    ck, cv = kv_ca(memk_2d, memv_2d, lp["ca_wk_t"], lp["ca_bk"],
                   lp["ca_wv_t"], lp["ca_bv"])
    tgt = attention_block(qx.reshape(b, nq, e), ck.reshape(b, s, e),
                          cv.reshape(b, s, e), tgt,
                          lp["ca_wo_t"], lp["ca_bo"], nhead, mask_add=mem_mask)

    # --- feed-forward block (fully fused, residual included)
    tgt_2d = tgt.reshape(b * nq, e)
    y = ffn_block(tgt_2d, lp["norm3_g"], lp["norm3_b"],
                  lp["lin1_t"], lp["lin1_b"], lp["lin2_t"], lp["lin2_b"])
    return y.reshape(b, nq, e)


@functools.partial(jax.jit, static_argnames=("nhead", "num_layers"))
def cross_attention_forward(params, src, mask, query_embed, pos_embed,
                            nhead, num_layers):
    """Cross_Attention.forward (normalize_before=True path)."""
    bs, c, h, w = src.shape
    s = h * w
    nq = query_embed.shape[0]

    # batch-major token layout: (B, tokens, C)
    src_b = jnp.transpose(src.reshape(bs, c, s), (0, 2, 1))        # (B, S, C)
    pos_b = jnp.transpose(pos_embed.reshape(bs, c, s), (0, 2, 1))  # (B, S, C)

    # pre_norm(src) -> memory (f32, returned) + bf16 K/V input slabs (reused
    # by all layers; per-layer Wk/Wv differ so K/V themselves are per-layer)
    memory_2d, memk_2d, memv_2d = pre_norm_block(
        src_b.reshape(bs * s, c), pos_b.reshape(bs * s, c),
        params["pre_norm_g"], params["pre_norm_b"])
    memory_b = memory_2d.reshape(bs, s, c)

    # key_padding_mask -> one additive (B,1,S) slab shared by all heads
    mem_mask = jnp.where(mask.reshape(bs, 1, s), -1e30, 0.0).astype(jnp.float32)

    qp_2d = jnp.broadcast_to(query_embed[None], (bs, nq, c)).reshape(bs * nq, c)
    tgt = jnp.zeros((bs, nq, c), jnp.float32)

    for li in range(num_layers):
        tgt = decoder_layer(tgt, qp_2d, memk_2d, memv_2d, mem_mask,
                            params["layers"][li], nhead)

    out = layernorm(tgt.reshape(bs * nq, c),
                    params["dec_norm_g"], params["dec_norm_b"]).reshape(bs, nq, c)

    hs = out[None]                                     # == hs.transpose(1, 2)
    memory_out = jnp.transpose(memory_b, (0, 2, 1)).reshape(bs, c, h, w)
    return hs, memory_out, [], []                      # attn lists stay empty


# ----------------------------------------------------------------------------
# Parameters: torch-layout init + one-time prep (transpose + bf16 + scale fold)
# ----------------------------------------------------------------------------

def _xavier(key, shape):
    fan_out, fan_in = shape
    limit = math.sqrt(6.0 / (fan_in + fan_out))
    return jax.random.uniform(key, shape, jnp.float32, -limit, limit)


def _init_mha(key, e):
    k1, k2 = jax.random.split(key)
    return dict(
        in_w=_xavier(k1, (3 * e, e)), in_b=jnp.zeros((3 * e,), jnp.float32),
        out_w=_xavier(k2, (e, e)), out_b=jnp.zeros((e,), jnp.float32),
    )


def _init_layer(key, e, dff):
    ks = jax.random.split(key, 4)
    return dict(
        self_attn=_init_mha(ks[0], e),
        cross_attn=_init_mha(ks[1], e),
        lin1_w=_xavier(ks[2], (dff, e)), lin1_b=jnp.zeros((dff,), jnp.float32),
        lin2_w=_xavier(ks[3], (e, dff)), lin2_b=jnp.zeros((e,), jnp.float32),
        norm1_g=jnp.ones((e,), jnp.float32), norm1_b=jnp.zeros((e,), jnp.float32),
        norm2_g=jnp.ones((e,), jnp.float32), norm2_b=jnp.zeros((e,), jnp.float32),
        norm3_g=jnp.ones((e,), jnp.float32), norm3_b=jnp.zeros((e,), jnp.float32),
    )


def init_params(key, e, dff, num_layers):
    ks = jax.random.split(key, num_layers)
    return dict(
        layers=[_init_layer(ks[i], e, dff) for i in range(num_layers)],
        dec_norm_g=jnp.ones((e,), jnp.float32),
        dec_norm_b=jnp.zeros((e,), jnp.float32),
        pre_norm_g=jnp.ones((e,), jnp.float32),
        pre_norm_b=jnp.zeros((e,), jnp.float32),
    )


def prepare_params(params, nhead, d_model):
    """One-time weight prep: split packed in_proj, pre-transpose to (Din,Dout),
    cast matmul weights to bf16, fold 1/sqrt(hd) into the Q projections,
    reshape biases/LN params to (1, D) rows."""
    e = d_model
    scale = 1.0 / math.sqrt(e // nhead)
    bf16, f32 = jnp.bfloat16, jnp.float32
    row = lambda x: x.reshape(1, -1).astype(f32)
    wt = lambda wmat: wmat.T.astype(bf16)

    def split_in_proj(wmat, bvec):
        return (wmat[:e], wmat[e:2 * e], wmat[2 * e:],
                bvec[:e], bvec[e:2 * e], bvec[2 * e:])

    def prep_layer(lp):
        swq, swk, swv, sbq, sbk, sbv = split_in_proj(
            lp["self_attn"]["in_w"], lp["self_attn"]["in_b"])
        cwq, cwk, cwv, cbq, cbk, cbv = split_in_proj(
            lp["cross_attn"]["in_w"], lp["cross_attn"]["in_b"])
        return dict(
            sa_wq_t=wt(swq * scale), sa_bq=row(sbq * scale),
            sa_wk_t=wt(swk), sa_bk=row(sbk),
            sa_wv_t=wt(swv), sa_bv=row(sbv),
            sa_wo_t=wt(lp["self_attn"]["out_w"]),
            sa_bo=row(lp["self_attn"]["out_b"]),
            ca_wq_t=wt(cwq * scale), ca_bq=row(cbq * scale),
            ca_wk_t=wt(cwk), ca_bk=row(cbk),
            ca_wv_t=wt(cwv), ca_bv=row(cbv),
            ca_wo_t=wt(lp["cross_attn"]["out_w"]),
            ca_bo=row(lp["cross_attn"]["out_b"]),
            lin1_t=wt(lp["lin1_w"]), lin1_b=row(lp["lin1_b"]),
            lin2_t=wt(lp["lin2_w"]), lin2_b=row(lp["lin2_b"]),
            norm1_g=row(lp["norm1_g"]), norm1_b=row(lp["norm1_b"]),
            norm2_g=row(lp["norm2_g"]), norm2_b=row(lp["norm2_b"]),
            norm3_g=row(lp["norm3_g"]), norm3_b=row(lp["norm3_b"]),
        )

    return dict(
        layers=[prep_layer(lp) for lp in params["layers"]],
        pre_norm_g=row(params["pre_norm_g"]), pre_norm_b=row(params["pre_norm_b"]),
        dec_norm_g=row(params["dec_norm_g"]), dec_norm_b=row(params["dec_norm_b"]),
    )


# ----------------------------------------------------------------------------
# Driver
# ----------------------------------------------------------------------------

if __name__ == "__main__":
    d_model, nhead, dim_feedforward, num_decoder_layers = 32, 4, 64, 2
    bs, h, w, num_queries = 2, 4, 4, 8

    root = jax.random.PRNGKey(0)
    kp, ks, kq, kpos = jax.random.split(root, 4)

    raw_params = init_params(kp, d_model, dim_feedforward, num_decoder_layers)
    params = prepare_params(raw_params, nhead, d_model)   # one-time weight prep

    src = jax.random.normal(ks, (bs, d_model, h, w), jnp.float32)
    pos_embed = jax.random.normal(kpos, (bs, d_model, h, w), jnp.float32)
    query_embed = jax.random.normal(kq, (num_queries, d_model), jnp.float32)
    # pad out the last column of each row (boolean key_padding_mask)
    mask = jnp.zeros((bs, h, w), dtype=bool).at[:, :, w - 1].set(True)

    hs, memory_out, attn_rollout, self_attn = cross_attention_forward(
        params, src, mask, query_embed, pos_embed,
        nhead=nhead, num_layers=num_decoder_layers)

    jax.block_until_ready(hs)
    jax.block_until_ready(memory_out)

    assert hs.shape == (1, bs, num_queries, d_model)
    assert memory_out.shape == (bs, d_model, h, w)
    assert attn_rollout == [] and self_attn == []
    assert bool(jnp.all(jnp.isfinite(hs)))

    print("KERNEL_OK")
</pallas_src>

<mosaic_0001>
module attributes {stable_mosaic.version = 11 : i64} {
  func.func @_ln_qkv_sa_kernel(%arg0: i32, %arg1: memref<16x32xf32, #tpu.memory_space<vmem>>, %arg2: memref<16x32xf32, #tpu.memory_space<vmem>>, %arg3: memref<1x32xf32, #tpu.memory_space<vmem>>, %arg4: memref<1x32xf32, #tpu.memory_space<vmem>>, %arg5: memref<32x32xbf16, #tpu.memory_space<vmem>>, %arg6: memref<1x32xf32, #tpu.memory_space<vmem>>, %arg7: memref<32x32xbf16, #tpu.memory_space<vmem>>, %arg8: memref<1x32xf32, #tpu.memory_space<vmem>>, %arg9: memref<32x32xbf16, #tpu.memory_space<vmem>>, %arg10: memref<1x32xf32, #tpu.memory_space<vmem>>, %arg11: memref<16x32xbf16, #tpu.memory_space<vmem>>, %arg12: memref<16x32xbf16, #tpu.memory_space<vmem>>, %arg13: memref<16x32xbf16, #tpu.memory_space<vmem>>) attributes {dimension_semantics = [#tpu.dimension_semantics<parallel>], iteration_bounds = array<i64: 1>, scalar_prefetch = 0 : i64, scratch_operands = 0 : i64, tpu.core_type = #tpu.core_type<tc>, window_params = [{transform_indices = @transform_0, window_bounds = array<i64: 16, 32>}, {transform_indices = @transform_1, window_bounds = array<i64: 16, 32>}, {pipeline_mode = #tpu.pipeline_mode<synchronous>, transform_indices = @transform_2, window_bounds = array<i64: 1, 32>}, {pipeline_mode = #tpu.pipeline_mode<synchronous>, transform_indices = @transform_3, window_bounds = array<i64: 1, 32>}, {pipeline_mode = #tpu.pipeline_mode<synchronous>, transform_indices = @transform_4, window_bounds = array<i64: 32, 32>}, {pipeline_mode = #tpu.pipeline_mode<synchronous>, transform_indices = @transform_5, window_bounds = array<i64: 1, 32>}, {pipeline_mode = #tpu.pipeline_mode<synchronous>, transform_indices = @transform_6, window_bounds = array<i64: 32, 32>}, {pipeline_mode = #tpu.pipeline_mode<synchronous>, transform_indices = @transform_7, window_bounds = array<i64: 1, 32>}, {pipeline_mode = #tpu.pipeline_mode<synchronous>, transform_indices = @transform_8, window_bounds = array<i64: 32, 32>}, {pipeline_mode = #tpu.pipeline_mode<synchronous>, transform_indices = @transform_9, window_bounds = array<i64: 1, 32>}, {transform_indices = @transform_10, window_bounds = array<i64: 16, 32>}, {transform_indices = @transform_11, window_bounds = array<i64: 16, 32>}, {transform_indices = @transform_12, window_bounds = array<i64: 16, 32>}]} {
    %c0 = arith.constant 0 : index
    %c0_0 = arith.constant 0 : index
    %0 = vector.load %arg1[%c0, %c0_0] : memref<16x32xf32, #tpu.memory_space<vmem>>, vector<16x32xf32>
    %c0_1 = arith.constant 0 : index
    %c0_2 = arith.constant 0 : index
    %1 = vector.load %arg3[%c0_1, %c0_2] : memref<1x32xf32, #tpu.memory_space<vmem>>, vector<1x32xf32>
    %c0_3 = arith.constant 0 : index
    %c0_4 = arith.constant 0 : index
    %2 = vector.load %arg4[%c0_3, %c0_4] : memref<1x32xf32, #tpu.memory_space<vmem>>, vector<1x32xf32>
    %cst = arith.constant dense<0.000000e+00> : vector<16xf32>
    %3 = vector.multi_reduction <add>, %0, %cst [1] : vector<16x32xf32> to vector<16xf32>
    %4 = vector.shape_cast %3 : vector<16xf32> to vector<16x1xf32>
    %cst_5 = arith.constant 3.200000e+01 : f32
    %5 = vector.broadcast %cst_5 : f32 to vector<16x1xf32>
    %6 = arith.divf %4, %5 : vector<16x1xf32>
    %7 = vector.broadcast %6 : vector<16x1xf32> to vector<16x32xf32>
    %8 = arith.subf %0, %7 : vector<16x32xf32>
    %9 = arith.mulf %8, %8 : vector<16x32xf32>
    %cst_6 = arith.constant dense<0.000000e+00> : vector<16xf32>
    %10 = vector.multi_reduction <add>, %9, %cst_6 [1] : vector<16x32xf32> to vector<16xf32>
    %11 = vector.shape_cast %10 : vector<16xf32> to vector<16x1xf32>
    %cst_7 = arith.constant 3.200000e+01 : f32
    %12 = vector.broadcast %cst_7 : f32 to vector<16x1xf32>
    %13 = arith.divf %11, %12 : vector<16x1xf32>
    %cst_8 = arith.constant 9.99999974E-6 : f32
    %14 = vector.broadcast %cst_8 : f32 to vector<16x1xf32>
    %15 = arith.addf %13, %14 : vector<16x1xf32>
    %16 = math.rsqrt %15 : vector<16x1xf32>
    %17 = vector.broadcast %16 : vector<16x1xf32> to vector<16x32xf32>
    %18 = arith.mulf %8, %17 : vector<16x32xf32>
    %19 = vector.broadcast %1 : vector<1x32xf32> to vector<16x32xf32>
    %20 = arith.mulf %18, %19 : vector<16x32xf32>
    %21 = vector.broadcast %2 : vector<1x32xf32> to vector<16x32xf32>
    %22 = arith.addf %20, %21 : vector<16x32xf32>
    %c0_9 = arith.constant 0 : index
    %c0_10 = arith.constant 0 : index
    %23 = vector.load %arg2[%c0_9, %c0_10] : memref<16x32xf32, #tpu.memory_space<vmem>>, vector<16x32xf32>
    %24 = arith.addf %22, %23 : vector<16x32xf32>
    %25 = arith.truncf %24 : vector<16x32xf32> to vector<16x32xbf16>
    %26 = arith.truncf %22 : vector<16x32xf32> to vector<16x32xbf16>
    %c0_11 = arith.constant 0 : index
    %c0_12 = arith.constant 0 : index
    %27 = vector.load %arg5[%c0_11, %c0_12] : memref<32x32xbf16, #tpu.memory_space<vmem>>, vector<32x32xbf16>
    %cst_13 = arith.constant dense<0.000000e+00> : vector<16x32xf32>
    %28 = tpu.matmul %25, %27, %cst_13 {dimension_numbers = #tpu.dot_dimension_numbers<[1], [0], [0], [1], [0, 0, 1, 1], [], []>} : vector<16x32xbf16>, vector<32x32xbf16>, vector<16x32xf32> -> vector<16x32xf32>
    %c0_14 = arith.constant 0 : index
    %c0_15 = arith.constant 0 : index
    %29 = vector.load %arg6[%c0_14, %c0_15] : memref<1x32xf32, #tpu.memory_space<vmem>>, vector<1x32xf32>
    %30 = vector.broadcast %29 : vector<1x32xf32> to vector<16x32xf32>
    %31 = arith.addf %28, %30 : vector<16x32xf32>
    %32 = arith.truncf %31 : vector<16x32xf32> to vector<16x32xbf16>
    %c0_16 = arith.constant 0 : index
    %c0_17 = arith.constant 0 : index
    %33 = vector.load %arg11[%c0_16, %c0_17] : memref<16x32xbf16, #tpu.memory_space<vmem>>, vector<16x32xbf16>
    tpu.vector_store %arg11[%c0_16, %c0_17], %32 {strides = array<i32>} : memref<16x32xbf16, #tpu.memory_space<vmem>>, vector<16x32xbf16>,
    %c0_18 = arith.constant 0 : index
    %c0_19 = arith.constant 0 : index
    %34 = vector.load %arg7[%c0_18, %c0_19] : memref<32x32xbf16, #tpu.memory_space<vmem>>, vector<32x32xbf16>
    %cst_20 = arith.constant dense<0.000000e+00> : vector<16x32xf32>
    %35 = tpu.matmul %25, %34, %cst_20 {dimension_numbers = #tpu.dot_dimension_numbers<[1], [0], [0], [1], [0, 0, 1, 1], [], []>} : vector<16x32xbf16>, vector<32x32xbf16>, vector<16x32xf32> -> vector<16x32xf32>
    %c0_21 = arith.constant 0 : index
    %c0_22 = arith.constant 0 : index
    %36 = vector.load %arg8[%c0_21, %c0_22] : memref<1x32xf32, #tpu.memory_space<vmem>>, vector<1x32xf32>
    %37 = vector.broadcast %36 : vector<1x32xf32> to vector<16x32xf32>
    %38 = arith.addf %35, %37 : vector<16x32xf32>
    %39 = arith.truncf %38 : vector<16x32xf32> to vector<16x32xbf16>
    %c0_23 = arith.constant 0 : index
    %c0_24 = arith.constant 0 : index
    %40 = vector.load %arg12[%c0_23, %c0_24] : memref<16x32xbf16, #tpu.memory_space<vmem>>, vector<16x32xbf16>
    tpu.vector_store %arg12[%c0_23, %c0_24], %39 {strides = array<i32>} : memref<16x32xbf16, #tpu.memory_space<vmem>>, vector<16x32xbf16>,
    %c0_25 = arith.constant 0 : index
    %c0_26 = arith.constant 0 : index
    %41 = vector.load %arg9[%c0_25, %c0_26] : memref<32x32xbf16, #tpu.memory_space<vmem>>, vector<32x32xbf16>
    %cst_27 = arith.constant dense<0.000000e+00> : vector<16x32xf32>
    %42 = tpu.matmul %26, %41, %cst_27 {dimension_numbers = #tpu.dot_dimension_numbers<[1], [0], [0], [1], [0, 0, 1, 1], [], []>} : vector<16x32xbf16>, vector<32x32xbf16>, vector<16x32xf32> -> vector<16x32xf32>
    %c0_28 = arith.constant 0 : index
    %c0_29 = arith.constant 0 : index
    %43 = vector.load %arg10[%c0_28, %c0_29] : memref<1x32xf32, #tpu.memory_space<vmem>>, vector<1x32xf32>
    %44 = vector.broadcast %43 : vector<1x32xf32> to vector<16x32xf32>
    %45 = arith.addf %42, %44 : vector<16x32xf32>
    %46 = arith.truncf %45 : vector<16x32xf32> to vector<16x32xbf16>
    %c0_30 = arith.constant 0 : index
    %c0_31 = arith.constant 0 : index
    %47 = vector.load %arg13[%c0_30, %c0_31] : memref<16x32xbf16, #tpu.memory_space<vmem>>, vector<16x32xbf16>
    tpu.vector_store %arg13[%c0_30, %c0_31], %46 {strides = array<i32>} : memref<16x32xbf16, #tpu.memory_space<vmem>>, vector<16x32xbf16>,
    return
  }
  func.func @transform_0(%arg0: i32) -> (i32, i32) {
    %c0_i32 = arith.constant 0 : i32
    %c0_i32_0 = arith.constant 0 : i32
    return %arg0, %c0_i32 : i32, i32
  }
  func.func @transform_1(%arg0: i32) -> (i32, i32) {
    %c0_i32 = arith.constant 0 : i32
    %c0_i32_0 = arith.constant 0 : i32
    return %arg0, %c0_i32 : i32, i32
  }
  func.func @transform_2(%arg0: i32) -> (i32, i32) {
    %c0_i32 = arith.constant 0 : i32
    %c0_i32_0 = arith.constant 0 : i32
    %c0_i32_1 = arith.constant 0 : i32
    return %c0_i32, %c0_i32_0 : i32, i32
  }
  func.func @transform_3(%arg0: i32) -> (i32, i32) {
    %c0_i32 = arith.constant 0 : i32
    %c0_i32_0 = arith.constant 0 : i32
    %c0_i32_1 = arith.constant 0 : i32
    return %c0_i32, %c0_i32_0 : i32, i32
  }
  func.func @transform_4(%arg0: i32) -> (i32, i32) {
    %c0_i32 = arith.constant 0 : i32
    %c0_i32_0 = arith.constant 0 : i32
    %c0_i32_1 = arith.constant 0 : i32
    return %c0_i32, %c0_i32_0 : i32, i32
  }
  func.func @transform_5(%arg0: i32) -> (i32, i32) {
    %c0_i32 = arith.constant 0 : i32
    %c0_i32_0 = arith.constant 0 : i32
    %c0_i32_1 = arith.constant 0 : i32
    return %c0_i32, %c0_i32_0 : i32, i32
  }
  func.func @transform_6(%arg0: i32) -> (i32, i32) {
    %c0_i32 = arith.constant 0 : i32
    %c0_i32_0 = arith.constant 0 : i32
    %c0_i32_1 = arith.constant 0 : i32
    return %c0_i32, %c0_i32_0 : i32, i32
  }
  func.func @transform_7(%arg0: i32) -> (i32, i32) {
    %c0_i32 = arith.constant 0 : i32
    %c0_i32_0 = arith.constant 0 : i32
    %c0_i32_1 = arith.constant 0 : i32
    return %c0_i32, %c0_i32_0 : i32, i32
  }
  func.func @transform_8(%arg0: i32) -> (i32, i32) {
    %c0_i32 = arith.constant 0 : i32
    %c0_i32_0 = arith.constant 0 : i32
    %c0_i32_1 = arith.constant 0 : i32
    return %c0_i32, %c0_i32_0 : i32, i32
  }
  func.func @transform_9(%arg0: i32) -> (i32, i32) {
    %c0_i32 = arith.constant 0 : i32
    %c0_i32_0 = arith.constant 0 : i32
    %c0_i32_1 = arith.constant 0 : i32
    return %c0_i32, %c0_i32_0 : i32, i32
  }
  func.func @transform_10(%arg0: i32) -> (i32, i32) {
    %c0_i32 = arith.constant 0 : i32
    %c0_i32_0 = arith.constant 0 : i32
    return %arg0, %c0_i32 : i32, i32
  }
  func.func @transform_11(%arg0: i32) -> (i32, i32) {
    %c0_i32 = arith.constant 0 : i32
    %c0_i32_0 = arith.constant 0 : i32
    return %arg0, %c0_i32 : i32, i32
  }
  func.func @transform_12(%arg0: i32) -> (i32, i32) {
    %c0_i32 = arith.constant 0 : i32
    %c0_i32_0 = arith.constant 0 : i32
    return %arg0, %c0_i32 : i32, i32
  }
}

module attributes {stable_mosaic.version = 11 : i64} {
  func.func @_attn_block_kernel(%arg0: i32, %arg1: i32, %arg2: memref<1x8x32xbf16, #tpu.memory_space<vmem>>, %arg3: memref<1x8x32xbf16, #tpu.memory_space<vmem>>, %arg4: memref<1x8x32xbf16, #tpu.memory_space<vmem>>, %arg5: memref<1x8x32xf32, #tpu.memory_space<vmem>>, %arg6: memref<32x32xbf16, #tpu.memory_space<vmem>>, %arg7: memref<1x32xf32, #tpu.memory_space<vmem>>, %arg8: memref<1x8x32xf32, #tpu.memory_space<vmem>>, %arg9: memref<8x32xbf16, #tpu.memory_space<vmem>>) attributes {dimension_semantics = [#tpu.dimension_semantics<parallel>, #tpu.dimension_semantics<parallel>], iteration_bounds = array<i64: 2, 1>, scalar_prefetch = 0 : i64, scratch_operands = 1 : i64, tpu.core_type = #tpu.core_type<tc>, window_params = [{transform_indices = @transform_0, window_bounds = array<i64: 1, 8, 32>}, {transform_indices = @transform_1, window_bounds = array<i64: 1, 8, 32>}, {transform_indices = @transform_2, window_bounds = array<i64: 1, 8, 32>}, {transform_indices = @transform_3, window_bounds = array<i64: 1, 8, 32>}, {pipeline_mode = #tpu.pipeline_mode<synchronous>, transform_indices = @transform_4, window_bounds = array<i64: 32, 32>}, {pipeline_mode = #tpu.pipeline_mode<synchronous>, transform_indices = @transform_5, window_bounds = array<i64: 1, 32>}, {transform_indices = @transform_6, window_bounds = array<i64: 1, 8, 32>}]} {
    %c0 = arith.constant 0 : index
    %c0_0 = arith.constant 0 : index
    %c0_1 = arith.constant 0 : index
    %0 = vector.load %arg2[%c0, %c0_0, %c0_1] : memref<1x8x32xbf16, #tpu.memory_space<vmem>>, vector<1x8x8xbf16>
    %1 = vector.shape_cast %0 : vector<1x8x8xbf16> to vector<8x8xbf16>
    %c0_2 = arith.constant 0 : index
    %c0_3 = arith.constant 0 : index
    %c0_4 = arith.constant 0 : index
    %2 = vector.load %arg3[%c0_2, %c0_3, %c0_4] : memref<1x8x32xbf16, #tpu.memory_space<vmem>>, vector<1x8x8xbf16>
    %3 = vector.shape_cast %2 : vector<1x8x8xbf16> to vector<8x8xbf16>
    %c0_5 = arith.constant 0 : index
    %c0_6 = arith.constant 0 : index
    %c0_7 = arith.constant 0 : index
    %4 = vector.load %arg4[%c0_5, %c0_6, %c0_7] : memref<1x8x32xbf16, #tpu.memory_space<vmem>>, vector<1x8x8xbf16>
    %5 = vector.shape_cast %4 : vector<1x8x8xbf16> to vector<8x8xbf16>
    %cst = arith.constant dense<0.000000e+00> : vector<8x8xf32>
    %6 = tpu.matmul %1, %3, %cst {dimension_numbers = #tpu.dot_dimension_numbers<[1], [1], [0], [0], [0, 0, 1, 0], [], []>} : vector<8x8xbf16>, vector<8x8xbf16>, vector<8x8xf32> -> vector<8x8xf32>
    %cst_8 = arith.constant dense<0xFF800000> : vector<8xf32>
    %7 = vector.multi_reduction <maximumf>, %6, %cst_8 [1] : vector<8x8xf32> to vector<8xf32>
    %8 = vector.shape_cast %7 : vector<8xf32> to vector<8x1xf32>
    %9 = vector.broadcast %8 : vector<8x1xf32> to vector<8x8xf32>
    %10 = arith.subf %6, %9 : vector<8x8xf32>
    %11 = math.exp %10 : vector<8x8xf32>
    %cst_9 = arith.constant dense<0.000000e+00> : vector<8xf32>
    %12 = vector.multi_reduction <add>, %11, %cst_9 [1] : vector<8x8xf32> to vector<8xf32>
    %13 = vector.shape_cast %12 : vector<8xf32> to vector<8x1xf32>
    %14 = tpu.reciprocal %13 {approx = true} : vector<8x1xf32> -> vector<8x1xf32>
    %15 = vector.broadcast %14 : vector<8x1xf32> to vector<8x8xf32>
    %16 = arith.mulf %11, %15 : vector<8x8xf32>
    %17 = arith.truncf %16 : vector<8x8xf32> to vector<8x8xbf16>
    %cst_10 = arith.constant dense<0.000000e+00> : vector<8x8xf32>
    %18 = tpu.matmul %17, %5, %cst_10 {dimension_numbers = #tpu.dot_dimension_numbers<[1], [0], [0], [1], [0, 0, 1, 1], [], []>} : vector<8x8xbf16>, vector<8x8xbf16>, vector<8x8xf32> -> vector<8x8xf32>
    %19 = arith.truncf %18 : vector<8x8xf32> to vector<8x8xbf16>
    %c0_11 = arith.constant 0 : index
    %c0_12 = arith.constant 0 : index
    %20 = vector.load %arg9[%c0_11, %c0_12] : memref<8x32xbf16, #tpu.memory_space<vmem>>, vector<8x8xbf16>
    tpu.vector_store %arg9[%c0_11, %c0_12], %19 {strides = array<i32>} : memref<8x32xbf16, #tpu.memory_space<vmem>>, vector<8x8xbf16>,
    %c0_13 = arith.constant 0 : index
    %c0_14 = arith.constant 0 : index
    %c8 = arith.constant 8 : index
    %21 = vector.load %arg2[%c0_13, %c0_14, %c8] : memref<1x8x32xbf16, #tpu.memory_space<vmem>>, vector<1x8x8xbf16>
    %22 = vector.shape_cast %21 : vector<1x8x8xbf16> to vector<8x8xbf16>
    %c0_15 = arith.constant 0 : index
    %c0_16 = arith.constant 0 : index
    %c8_17 = arith.constant 8 : index
    %23 = vector.load %arg3[%c0_15, %c0_16, %c8_17] : memref<1x8x32xbf16, #tpu.memory_space<vmem>>, vector<1x8x8xbf16>
    %24 = vector.shape_cast %23 : vector<1x8x8xbf16> to vector<8x8xbf16>
    %c0_18 = arith.constant 0 : index
    %c0_19 = arith.constant 0 : index
    %c8_20 = arith.constant 8 : index
    %25 = vector.load %arg4[%c0_18, %c0_19, %c8_20] : memref<1x8x32xbf16, #tpu.memory_space<vmem>>, vector<1x8x8xbf16>
    %26 = vector.shape_cast %25 : vector<1x8x8xbf16> to vector<8x8xbf16>
    %cst_21 = arith.constant dense<0.000000e+00> : vector<8x8xf32>
    %27 = tpu.matmul %22, %24, %cst_21 {dimension_numbers = #tpu.dot_dimension_numbers<[1], [1], [0], [0], [0, 0, 1, 0], [], []>} : vector<8x8xbf16>, vector<8x8xbf16>, vector<8x8xf32> -> vector<8x8xf32>
    %cst_22 = arith.constant dense<0xFF800000> : vector<8xf32>
    %28 = vector.multi_reduction <maximumf>, %27, %cst_22 [1] : vector<8x8xf32> to vector<8xf32>
    %29 = vector.shape_cast %28 : vector<8xf32> to vector<8x1xf32>
    %30 = vector.broadcast %29 : vector<8x1xf32> to vector<8x8xf32>
    %31 = arith.subf %27, %30 : vector<8x8xf32>
    %32 = math.exp %31 : vector<8x8xf32>
    %cst_23 = arith.constant dense<0.000000e+00> : vector<8xf32>
    %33 = vector.multi_reduction <add>, %32, %cst_23 [1] : vector<8x8xf32> to vector<8xf32>
    %34 = vector.shape_cast %33 : vector<8xf32> to vector<8x1xf32>
    %35 = tpu.reciprocal %34 {approx = true} : vector<8x1xf32> -> vector<8x1xf32>
    %36 = vector.broadcast %35 : vector<8x1xf32> to vector<8x8xf32>
    %37 = arith.mulf %32, %36 : vector<8x8xf32>
    %38 = arith.truncf %37 : vector<8x8xf32> to vector<8x8xbf16>
    %cst_24 = arith.constant dense<0.000000e+00> : vector<8x8xf32>
    %39 = tpu.matmul %38, %26, %cst_24 {dimension_numbers = #tpu.dot_dimension_numbers<[1], [0], [0], [1], [0, 0, 1, 1], [], []>} : vector<8x8xbf16>, vector<8x8xbf16>, vector<8x8xf32> -> vector<8x8xf32>
    %40 = arith.truncf %39 : vector<8x8xf32> to vector<8x8xbf16>
    %c0_25 = arith.constant 0 : index
    %c8_26 = arith.constant 8 : index
    %41 = vector.load %arg9[%c0_25, %c8_26] : memref<8x32xbf16, #tpu.memory_space<vmem>>, vector<8x8xbf16>
    tpu.vector_store %arg9[%c0_25, %c8_26], %40 {strides = array<i32>} : memref<8x32xbf16, #tpu.memory_space<vmem>>, vector<8x8xbf16>,
    %c0_27 = arith.constant 0 : index
    %c0_28 = arith.constant 0 : index
    %c16 = arith.constant 16 : index
    %42 = vector.load %arg2[%c0_27, %c0_28, %c16] : memref<1x8x32xbf16, #tpu.memory_space<vmem>>, vector<1x8x8xbf16>
    %43 = vector.shape_cast %42 : vector<1x8x8xbf16> to vector<8x8xbf16>
    %c0_29 = arith.constant 0 : index
    %c0_30 = arith.constant 0 : index
    %c16_31 = arith.constant 16 : index
    %44 = vector.load %arg3[%c0_29, %c0_30, %c16_31] : memref<1x8x32xbf16, #tpu.memory_space<vmem>>, vector<1x8x8xbf16>
    %45 = vector.shape_cast %44 : vector<1x8x8xbf16> to vector<8x8xbf16>
    %c0_32 = arith.constant 0 : index
    %c0_33 = arith.constant 0 : index
    %c16_34 = arith.constant 16 : index
    %46 = vector.load %arg4[%c0_32, %c0_33, %c16_34] : memref<1x8x32xbf16, #tpu.memory_space<vmem>>, vector<1x8x8xbf16>
    %47 = vector.shape_cast %46 : vector<1x8x8xbf16> to vector<8x8xbf16>
    %cst_35 = arith.constant dense<0.000000e+00> : vector<8x8xf32>
    %48 = tpu.matmul %43, %45, %cst_35 {dimension_numbers = #tpu.dot_dimension_numbers<[1], [1], [0], [0], [0, 0, 1, 0], [], []>} : vector<8x8xbf16>, vector<8x8xbf16>, vector<8x8xf32> -> vector<8x8xf32>
    %cst_36 = arith.constant dense<0xFF800000> : vector<8xf32>
    %49 = vector.multi_reduction <maximumf>, %48, %cst_36 [1] : vector<8x8xf32> to vector<8xf32>
    %50 = vector.shape_cast %49 : vector<8xf32> to vector<8x1xf32>
    %51 = vector.broadcast %50 : vector<8x1xf32> to vector<8x8xf32>
    %52 = arith.subf %48, %51 : vector<8x8xf32>
    %53 = math.exp %52 : vector<8x8xf32>
    %cst_37 = arith.constant dense<0.000000e+00> : vector<8xf32>
    %54 = vector.multi_reduction <add>, %53, %cst_37 [1] : vector<8x8xf32> to vector<8xf32>
    %55 = vector.shape_cast %54 : vector<8xf32> to vector<8x1xf32>
    %56 = tpu.reciprocal %55 {approx = true} : vector<8x1xf32> -> vector<8x1xf32>
    %57 = vector.broadcast %56 : vector<8x1xf32> to vector<8x8xf32>
    %58 = arith.mulf %53, %57 : vector<8x8xf32>
    %59 = arith.truncf %58 : vector<8x8xf32> to vector<8x8xbf16>
    %cst_38 = arith.constant dense<0.000000e+00> : vector<8x8xf32>
    %60 = tpu.matmul %59, %47, %cst_38 {dimension_numbers = #tpu.dot_dimension_numbers<[1], [0], [0], [1], [0, 0, 1, 1], [], []>} : vector<8x8xbf16>, vector<8x8xbf16>, vector<8x8xf32> -> vector<8x8xf32>
    %61 = arith.truncf %60 : vector<8x8xf32> to vector<8x8xbf16>
    %c0_39 = arith.constant 0 : index
    %c16_40 = arith.constant 16 : index
    %62 = vector.load %arg9[%c0_39, %c16_40] : memref<8x32xbf16, #tpu.memory_space<vmem>>, vector<8x8xbf16>
    tpu.vector_store %arg9[%c0_39, %c16_40], %61 {strides = array<i32>} : memref<8x32xbf16, #tpu.memory_space<vmem>>, vector<8x8xbf16>,
    %c0_41 = arith.constant 0 : index
    %c0_42 = arith.constant 0 : index
    %c24 = arith.constant 24 : index
    %63 = vector.load %arg2[%c0_41, %c0_42, %c24] : memref<1x8x32xbf16, #tpu.memory_space<vmem>>, vector<1x8x8xbf16>
    %64 = vector.shape_cast %63 : vector<1x8x8xbf16> to vector<8x8xbf16>
    %c0_43 = arith.constant 0 : index
    %c0_44 = arith.constant 0 : index
    %c24_45 = arith.constant 24 : index
    %65 = vector.load %arg3[%c0_43, %c0_44, %c24_45] : memref<1x8x32xbf16, #tpu.memory_space<vmem>>, vector<1x8x8xbf16>
    %66 = vector.shape_cast %65 : vector<1x8x8xbf16> to vector<8x8xbf16>
    %c0_46 = arith.constant 0 : index
    %c0_47 = arith.constant 0 : index
    %c24_48 = arith.constant 24 : index
    %67 = vector.load %arg4[%c0_46, %c0_47, %c24_48] : memref<1x8x32xbf16, #tpu.memory_space<vmem>>, vector<1x8x8xbf16>
    %68 = vector.shape_cast %67 : vector<1x8x8xbf16> to vector<8x8xbf16>
    %cst_49 = arith.constant dense<0.000000e+00> : vector<8x8xf32>
    %69 = tpu.matmul %64, %66, %cst_49 {dimension_numbers = #tpu.dot_dimension_numbers<[1], [1], [0], [0], [0, 0, 1, 0], [], []>} : vector<8x8xbf16>, vector<8x8xbf16>, vector<8x8xf32> -> vector<8x8xf32>
    %cst_50 = arith.constant dense<0xFF800000> : vector<8xf32>
    %70 = vector.multi_reduction <maximumf>, %69, %cst_50 [1] : vector<8x8xf32> to vector<8xf32>
    %71 = vector.shape_cast %70 : vector<8xf32> to vector<8x1xf32>
    %72 = vector.broadcast %71 : vector<8x1xf32> to vector<8x8xf32>
    %73 = arith.subf %69, %72 : vector<8x8xf32>
    %74 = math.exp %73 : vector<8x8xf32>
    %cst_51 = arith.constant dense<0.000000e+00> : vector<8xf32>
    %75 = vector.multi_reduction <add>, %74, %cst_51 [1] : vector<8x8xf32> to vector<8xf32>
    %76 = vector.shape_cast %75 : vector<8xf32> to vector<8x1xf32>
    %77 = tpu.reciprocal %76 {approx = true} : vector<8x1xf32> -> vector<8x1xf32>
    %78 = vector.broadcast %77 : vector<8x1xf32> to vector<8x8xf32>
    %79 = arith.mulf %74, %78 : vector<8x8xf32>
    %80 = arith.truncf %79 : vector<8x8xf32> to vector<8x8xbf16>
    %cst_52 = arith.constant dense<0.000000e+00> : vector<8x8xf32>
    %81 = tpu.matmul %80, %68, %cst_52 {dimension_numbers = #tpu.dot_dimension_numbers<[1], [0], [0], [1], [0, 0, 1, 1], [], []>} : vector<8x8xbf16>, vector<8x8xbf16>, vector<8x8xf32> -> vector<8x8xf32>
    %82 = arith.truncf %81 : vector<8x8xf32> to vector<8x8xbf16>
    %c0_53 = arith.constant 0 : index
    %c24_54 = arith.constant 24 : index
    %83 = vector.load %arg9[%c0_53, %c24_54] : memref<8x32xbf16, #tpu.memory_space<vmem>>, vector<8x8xbf16>
    tpu.vector_store %arg9[%c0_53, %c24_54], %82 {strides = array<i32>} : memref<8x32xbf16, #tpu.memory_space<vmem>>, vector<8x8xbf16>,
    %c0_55 = arith.constant 0 : index
    %c0_56 = arith.constant 0 : index
    %c0_57 = arith.constant 0 : index
    %84 = vector.load %arg5[%c0_55, %c0_56, %c0_57] : memref<1x8x32xf32, #tpu.memory_space<vmem>>, vector<1x8x32xf32>
    %85 = vector.shape_cast %84 : vector<1x8x32xf32> to vector<8x32xf32>
    %c0_58 = arith.constant 0 : index
    %c0_59 = arith.constant 0 : index
    %86 = vector.load %arg7[%c0_58, %c0_59] : memref<1x32xf32, #tpu.memory_space<vmem>>, vector<1x32xf32>
    %87 = vector.broadcast %86 : vector<1x32xf32> to vector<8x32xf32>
    %88 = arith.addf %85, %87 : vector<8x32xf32>
    %c0_60 = arith.constant 0 : index
    %c0_61 = arith.constant 0 : index
    %89 = vector.load %arg9[%c0_60, %c0_61] : memref<8x32xbf16, #tpu.memory_space<vmem>>, vector<8x32xbf16>
    %c0_62 = arith.constant 0 : index
    %c0_63 = arith.constant 0 : index
    %90 = vector.load %arg6[%c0_62, %c0_63] : memref<32x32xbf16, #tpu.memory_space<vmem>>, vector<32x32xbf16>
    %cst_64 = arith.constant dense<0.000000e+00> : vector<8x32xf32>
    %91 = tpu.matmul %89, %90, %cst_64 {dimension_numbers = #tpu.dot_dimension_numbers<[1], [0], [0], [1], [0, 0, 1, 1], [], []>} : vector<8x32xbf16>, vector<32x32xbf16>, vector<8x32xf32> -> vector<8x32xf32>
    %92 = arith.addf %88, %91 : vector<8x32xf32>
    %c0_65 = arith.constant 0 : index
    %c0_66 = arith.constant 0 : index
    %c0_67 = arith.constant 0 : index
    %93 = vector.load %arg8[%c0_65, %c0_66, %c0_67] : memref<1x8x32xf32, #tpu.memory_space<vmem>>, vector<1x8x32xf32>
    %94 = vector.shape_cast %93 : vector<1x8x32xf32> to vector<8x32xf32>
    %95 = vector.shape_cast %92 : vector<8x32xf32> to vector<1x8x32xf32>
    tpu.vector_store %arg8[%c0_65, %c0_66, %c0_67], %95 {strides = array<i32>} : memref<1x8x32xf32, #tpu.memory_space<vmem>>, vector<1x8x32xf32>,
    return
  }
  func.func @transform_0(%arg0: i32, %arg1: i32) -> (i32, i32, i32) {
    %c0_i32 = arith.constant 0 : i32
    %c0_i32_0 = arith.constant 0 : i32
    return %arg0, %arg1, %c0_i32 : i32, i32, i32
  }
  func.func @transform_1(%arg0: i32, %arg1: i32) -> (i32, i32, i32) {
    %c0_i32 = arith.constant 0 : i32
    %c0_i32_0 = arith.constant 0 : i32
    %c0_i32_1 = arith.constant 0 : i32
    return %arg0, %c0_i32, %c0_i32_0 : i32, i32, i32
  }
  func.func @transform_2(%arg0: i32, %arg1: i32) -> (i32, i32, i32) {
    %c0_i32 = arith.constant 0 : i32
    %c0_i32_0 = arith.constant 0 : i32
    %c0_i32_1 = arith.constant 0 : i32
    return %arg0, %c0_i32, %c0_i32_0 : i32, i32, i32
  }
  func.func @transform_3(%arg0: i32, %arg1: i32) -> (i32, i32, i32) {
    %c0_i32 = arith.constant 0 : i32
    %c0_i32_0 = arith.constant 0 : i32
    return %arg0, %arg1, %c0_i32 : i32, i32, i32
  }
  func.func @transform_4(%arg0: i32, %arg1: i32) -> (i32, i32) {
    %c0_i32 = arith.constant 0 : i32
    %c0_i32_0 = arith.constant 0 : i32
    %c0_i32_1 = arith.constant 0 : i32
    return %c0_i32, %c0_i32_0 : i32, i32
  }
  func.func @transform_5(%arg0: i32, %arg1: i32) -> (i32, i32) {
    %c0_i32 = arith.constant 0 : i32
    %c0_i32_0 = arith.constant 0 : i32
    %c0_i32_1 = arith.constant 0 : i32
    return %c0_i32, %c0_i32_0 : i32, i32
  }
  func.func @transform_6(%arg0: i32, %arg1: i32) -> (i32, i32, i32) {
    %c0_i32 = arith.constant 0 : i32
    %c0_i32_0 = arith.constant 0 : i32
    return %arg0, %arg1, %c0_i32 : i32, i32, i32
  }
}

module attributes {stable_mosaic.version = 11 : i64} {
  func.func @_pre_norm_kernel(%arg0: i32, %arg1: memref<32x32xf32, #tpu.memory_space<vmem>>, %arg2: memref<32x32xf32, #tpu.memory_space<vmem>>, %arg3: memref<1x32xf32, #tpu.memory_space<vmem>>, %arg4: memref<1x32xf32, #tpu.memory_space<vmem>>, %arg5: memref<32x32xf32, #tpu.memory_space<vmem>>, %arg6: memref<32x32xbf16, #tpu.memory_space<vmem>>, %arg7: memref<32x32xbf16, #tpu.memory_space<vmem>>) attributes {dimension_semantics = [#tpu.dimension_semantics<parallel>], iteration_bounds = array<i64: 1>, scalar_prefetch = 0 : i64, scratch_operands = 0 : i64, tpu.core_type = #tpu.core_type<tc>, window_params = [{transform_indices = @transform_0, window_bounds = array<i64: 32, 32>}, {transform_indices = @transform_1, window_bounds = array<i64: 32, 32>}, {pipeline_mode = #tpu.pipeline_mode<synchronous>, transform_indices = @transform_2, window_bounds = array<i64: 1, 32>}, {pipeline_mode = #tpu.pipeline_mode<synchronous>, transform_indices = @transform_3, window_bounds = array<i64: 1, 32>}, {transform_indices = @transform_4, window_bounds = array<i64: 32, 32>}, {transform_indices = @transform_5, window_bounds = array<i64: 32, 32>}, {transform_indices = @transform_6, window_bounds = array<i64: 32, 32>}]} {
    %c0 = arith.constant 0 : index
    %c0_0 = arith.constant 0 : index
    %0 = vector.load %arg1[%c0, %c0_0] : memref<32x32xf32, #tpu.memory_space<vmem>>, vector<32x32xf32>
    %c0_1 = arith.constant 0 : index
    %c0_2 = arith.constant 0 : index
    %1 = vector.load %arg3[%c0_1, %c0_2] : memref<1x32xf32, #tpu.memory_space<vmem>>, vector<1x32xf32>
    %c0_3 = arith.constant 0 : index
    %c0_4 = arith.constant 0 : index
    %2 = vector.load %arg4[%c0_3, %c0_4] : memref<1x32xf32, #tpu.memory_space<vmem>>, vector<1x32xf32>
    %cst = arith.constant dense<0.000000e+00> : vector<32xf32>
    %3 = vector.multi_reduction <add>, %0, %cst [1] : vector<32x32xf32> to vector<32xf32>
    %4 = vector.shape_cast %3 : vector<32xf32> to vector<32x1xf32>
    %cst_5 = arith.constant 3.200000e+01 : f32
    %5 = vector.broadcast %cst_5 : f32 to vector<32x1xf32>
    %6 = arith.divf %4, %5 : vector<32x1xf32>
    %7 = vector.broadcast %6 : vector<32x1xf32> to vector<32x32xf32>
    %8 = arith.subf %0, %7 : vector<32x32xf32>
    %9 = arith.mulf %8, %8 : vector<32x32xf32>
    %cst_6 = arith.constant dense<0.000000e+00> : vector<32xf32>
    %10 = vector.multi_reduction <add>, %9, %cst_6 [1] : vector<32x32xf32> to vector<32xf32>
    %11 = vector.shape_cast %10 : vector<32xf32> to vector<32x1xf32>
    %cst_7 = arith.constant 3.200000e+01 : f32
    %12 = vector.broadcast %cst_7 : f32 to vector<32x1xf32>
    %13 = arith.divf %11, %12 : vector<32x1xf32>
    %cst_8 = arith.constant 9.99999974E-6 : f32
    %14 = vector.broadcast %cst_8 : f32 to vector<32x1xf32>
    %15 = arith.addf %13, %14 : vector<32x1xf32>
    %16 = math.rsqrt %15 : vector<32x1xf32>
    %17 = vector.broadcast %16 : vector<32x1xf32> to vector<32x32xf32>
    %18 = arith.mulf %8, %17 : vector<32x32xf32>
    %19 = vector.broadcast %1 : vector<1x32xf32> to vector<32x32xf32>
    %20 = arith.mulf %18, %19 : vector<32x32xf32>
    %21 = vector.broadcast %2 : vector<1x32xf32> to vector<32x32xf32>
    %22 = arith.addf %20, %21 : vector<32x32xf32>
    %c0_9 = arith.constant 0 : index
    %c0_10 = arith.constant 0 : index
    %23 = vector.load %arg5[%c0_9, %c0_10] : memref<32x32xf32, #tpu.memory_space<vmem>>, vector<32x32xf32>
    tpu.vector_store %arg5[%c0_9, %c0_10], %22 {strides = array<i32>} : memref<32x32xf32, #tpu.memory_space<vmem>>, vector<32x32xf32>,
    %c0_11 = arith.constant 0 : index
    %c0_12 = arith.constant 0 : index
    %24 = vector.load %arg2[%c0_11, %c0_12] : memref<32x32xf32, #tpu.memory_space<vmem>>, vector<32x32xf32>
    %25 = arith.addf %22, %24 : vector<32x32xf32>
    %26 = arith.truncf %25 : vector<32x32xf32> to vector<32x32xbf16>
    %c0_13 = arith.constant 0 : index
    %c0_14 = arith.constant 0 : index
    %27 = vector.load %arg6[%c0_13, %c0_14] : memref<32x32xbf16, #tpu.memory_space<vmem>>, vector<32x32xbf16>
    tpu.vector_store %arg6[%c0_13, %c0_14], %26 {strides = array<i32>} : memref<32x32xbf16, #tpu.memory_space<vmem>>, vector<32x32xbf16>,
    %28 = arith.truncf %22 : vector<32x32xf32> to vector<32x32xbf16>
    %c0_15 = arith.constant 0 : index
    %c0_16 = arith.constant 0 : index
    %29 = vector.load %arg7[%c0_15, %c0_16] : memref<32x32xbf16, #tpu.memory_space<vmem>>, vector<32x32xbf16>
    tpu.vector_store %arg7[%c0_15, %c0_16], %28 {strides = array<i32>} : memref<32x32xbf16, #tpu.memory_space<vmem>>, vector<32x32xbf16>,
    return
  }
  func.func @transform_0(%arg0: i32) -> (i32, i32) {
    %c0_i32 = arith.constant 0 : i32
    %c0_i32_0 = arith.constant 0 : i32
    return %arg0, %c0_i32 : i32, i32
  }
  func.func @transform_1(%arg0: i32) -> (i32, i32) {
    %c0_i32 = arith.constant 0 : i32
    %c0_i32_0 = arith.constant 0 : i32
    return %arg0, %c0_i32 : i32, i32
  }
  func.func @transform_2(%arg0: i32) -> (i32, i32) {
    %c0_i32 = arith.constant 0 : i32
    %c0_i32_0 = arith.constant 0 : i32
    %c0_i32_1 = arith.constant 0 : i32
    return %c0_i32, %c0_i32_0 : i32, i32
  }
  func.func @transform_3(%arg0: i32) -> (i32, i32) {
    %c0_i32 = arith.constant 0 : i32
    %c0_i32_0 = arith.constant 0 : i32
    %c0_i32_1 = arith.constant 0 : i32
    return %c0_i32, %c0_i32_0 : i32, i32
  }
  func.func @transform_4(%arg0: i32) -> (i32, i32) {
    %c0_i32 = arith.constant 0 : i32
    %c0_i32_0 = arith.constant 0 : i32
    return %arg0, %c0_i32 : i32, i32
  }
  func.func @transform_5(%arg0: i32) -> (i32, i32) {
    %c0_i32 = arith.constant 0 : i32
    %c0_i32_0 = arith.constant 0 : i32
    return %arg0, %c0_i32 : i32, i32
  }
  func.func @transform_6(%arg0: i32) -> (i32, i32) {
    %c0_i32 = arith.constant 0 : i32
    %c0_i32_0 = arith.constant 0 : i32
    return %arg0, %c0_i32 : i32, i32
  }
}

module attributes {stable_mosaic.version = 11 : i64} {
  func.func @_ln_q_ca_kernel(%arg0: i32, %arg1: memref<16x32xf32, #tpu.memory_space<vmem>>, %arg2: memref<16x32xf32, #tpu.memory_space<vmem>>, %arg3: memref<1x32xf32, #tpu.memory_space<vmem>>, %arg4: memref<1x32xf32, #tpu.memory_space<vmem>>, %arg5: memref<32x32xbf16, #tpu.memory_space<vmem>>, %arg6: memref<1x32xf32, #tpu.memory_space<vmem>>, %arg7: memref<16x32xbf16, #tpu.memory_space<vmem>>) attributes {dimension_semantics = [#tpu.dimension_semantics<parallel>], iteration_bounds = array<i64: 1>, scalar_prefetch = 0 : i64, scratch_operands = 0 : i64, tpu.core_type = #tpu.core_type<tc>, window_params = [{transform_indices = @transform_0, window_bounds = array<i64: 16, 32>}, {transform_indices = @transform_1, window_bounds = array<i64: 16, 32>}, {pipeline_mode = #tpu.pipeline_mode<synchronous>, transform_indices = @transform_2, window_bounds = array<i64: 1, 32>}, {pipeline_mode = #tpu.pipeline_mode<synchronous>, transform_indices = @transform_3, window_bounds = array<i64: 1, 32>}, {pipeline_mode = #tpu.pipeline_mode<synchronous>, transform_indices = @transform_4, window_bounds = array<i64: 32, 32>}, {pipeline_mode = #tpu.pipeline_mode<synchronous>, transform_indices = @transform_5, window_bounds = array<i64: 1, 32>}, {transform_indices = @transform_6, window_bounds = array<i64: 16, 32>}]} {
    %c0 = arith.constant 0 : index
    %c0_0 = arith.constant 0 : index
    %0 = vector.load %arg1[%c0, %c0_0] : memref<16x32xf32, #tpu.memory_space<vmem>>, vector<16x32xf32>
    %c0_1 = arith.constant 0 : index
    %c0_2 = arith.constant 0 : index
    %1 = vector.load %arg3[%c0_1, %c0_2] : memref<1x32xf32, #tpu.memory_space<vmem>>, vector<1x32xf32>
    %c0_3 = arith.constant 0 : index
    %c0_4 = arith.constant 0 : index
    %2 = vector.load %arg4[%c0_3, %c0_4] : memref<1x32xf32, #tpu.memory_space<vmem>>, vector<1x32xf32>
    %cst = arith.constant dense<0.000000e+00> : vector<16xf32>
    %3 = vector.multi_reduction <add>, %0, %cst [1] : vector<16x32xf32> to vector<16xf32>
    %4 = vector.shape_cast %3 : vector<16xf32> to vector<16x1xf32>
    %cst_5 = arith.constant 3.200000e+01 : f32
    %5 = vector.broadcast %cst_5 : f32 to vector<16x1xf32>
    %6 = arith.divf %4, %5 : vector<16x1xf32>
    %7 = vector.broadcast %6 : vector<16x1xf32> to vector<16x32xf32>
    %8 = arith.subf %0, %7 : vector<16x32xf32>
    %9 = arith.mulf %8, %8 : vector<16x32xf32>
    %cst_6 = arith.constant dense<0.000000e+00> : vector<16xf32>
    %10 = vector.multi_reduction <add>, %9, %cst_6 [1] : vector<16x32xf32> to vector<16xf32>
    %11 = vector.shape_cast %10 : vector<16xf32> to vector<16x1xf32>
    %cst_7 = arith.constant 3.200000e+01 : f32
    %12 = vector.broadcast %cst_7 : f32 to vector<16x1xf32>
    %13 = arith.divf %11, %12 : vector<16x1xf32>
    %cst_8 = arith.constant 9.99999974E-6 : f32
    %14 = vector.broadcast %cst_8 : f32 to vector<16x1xf32>
    %15 = arith.addf %13, %14 : vector<16x1xf32>
    %16 = math.rsqrt %15 : vector<16x1xf32>
    %17 = vector.broadcast %16 : vector<16x1xf32> to vector<16x32xf32>
    %18 = arith.mulf %8, %17 : vector<16x32xf32>
    %19 = vector.broadcast %1 : vector<1x32xf32> to vector<16x32xf32>
    %20 = arith.mulf %18, %19 : vector<16x32xf32>
    %21 = vector.broadcast %2 : vector<1x32xf32> to vector<16x32xf32>
    %22 = arith.addf %20, %21 : vector<16x32xf32>
    %c0_9 = arith.constant 0 : index
    %c0_10 = arith.constant 0 : index
    %23 = vector.load %arg2[%c0_9, %c0_10] : memref<16x32xf32, #tpu.memory_space<vmem>>, vector<16x32xf32>
    %24 = arith.addf %22, %23 : vector<16x32xf32>
    %25 = arith.truncf %24 : vector<16x32xf32> to vector<16x32xbf16>
    %c0_11 = arith.constant 0 : index
    %c0_12 = arith.constant 0 : index
    %26 = vector.load %arg5[%c0_11, %c0_12] : memref<32x32xbf16, #tpu.memory_space<vmem>>, vector<32x32xbf16>
    %cst_13 = arith.constant dense<0.000000e+00> : vector<16x32xf32>
    %27 = tpu.matmul %25, %26, %cst_13 {dimension_numbers = #tpu.dot_dimension_numbers<[1], [0], [0], [1], [0, 0, 1, 1], [], []>} : vector<16x32xbf16>, vector<32x32xbf16>, vector<16x32xf32> -> vector<16x32xf32>
    %c0_14 = arith.constant 0 : index
    %c0_15 = arith.constant 0 : index
    %28 = vector.load %arg6[%c0_14, %c0_15] : memref<1x32xf32, #tpu.memory_space<vmem>>, vector<1x32xf32>
    %29 = vector.broadcast %28 : vector<1x32xf32> to vector<16x32xf32>
    %30 = arith.addf %27, %29 : vector<16x32xf32>
    %31 = arith.truncf %30 : vector<16x32xf32> to vector<16x32xbf16>
    %c0_16 = arith.constant 0 : index
    %c0_17 = arith.constant 0 : index
    %32 = vector.load %arg7[%c0_16, %c0_17] : memref<16x32xbf16, #tpu.memory_space<vmem>>, vector<16x32xbf16>
    tpu.vector_store %arg7[%c0_16, %c0_17], %31 {strides = array<i32>} : memref<16x32xbf16, #tpu.memory_space<vmem>>, vector<16x32xbf16>,
    return
  }
  func.func @transform_0(%arg0: i32) -> (i32, i32) {
    %c0_i32 = arith.constant 0 : i32
    %c0_i32_0 = arith.constant 0 : i32
    return %arg0, %c0_i32 : i32, i32
  }
  func.func @transform_1(%arg0: i32) -> (i32, i32) {
    %c0_i32 = arith.constant 0 : i32
    %c0_i32_0 = arith.constant 0 : i32
    return %arg0, %c0_i32 : i32, i32
  }
  func.func @transform_2(%arg0: i32) -> (i32, i32) {
    %c0_i32 = arith.constant 0 : i32
    %c0_i32_0 = arith.constant 0 : i32
    %c0_i32_1 = arith.constant 0 : i32
    return %c0_i32, %c0_i32_0 : i32, i32
  }
  func.func @transform_3(%arg0: i32) -> (i32, i32) {
    %c0_i32 = arith.constant 0 : i32
    %c0_i32_0 = arith.constant 0 : i32
    %c0_i32_1 = arith.constant 0 : i32
    return %c0_i32, %c0_i32_0 : i32, i32
  }
  func.func @transform_4(%arg0: i32) -> (i32, i32) {
    %c0_i32 = arith.constant 0 : i32
    %c0_i32_0 = arith.constant 0 : i32
    %c0_i32_1 = arith.constant 0 : i32
    return %c0_i32, %c0_i32_0 : i32, i32
  }
  func.func @transform_5(%arg0: i32) -> (i32, i32) {
    %c0_i32 = arith.constant 0 : i32
    %c0_i32_0 = arith.constant 0 : i32
    %c0_i32_1 = arith.constant 0 : i32
    return %c0_i32, %c0_i32_0 : i32, i32
  }
  func.func @transform_6(%arg0: i32) -> (i32, i32) {
    %c0_i32 = arith.constant 0 : i32
    %c0_i32_0 = arith.constant 0 : i32
    return %arg0, %c0_i32 : i32, i32
  }
}

module attributes {stable_mosaic.version = 11 : i64} {
  func.func @_kv_ca_kernel(%arg0: i32, %arg1: memref<32x32xbf16, #tpu.memory_space<vmem>>, %arg2: memref<32x32xbf16, #tpu.memory_space<vmem>>, %arg3: memref<32x32xbf16, #tpu.memory_space<vmem>>, %arg4: memref<1x32xf32, #tpu.memory_space<vmem>>, %arg5: memref<32x32xbf16, #tpu.memory_space<vmem>>, %arg6: memref<1x32xf32, #tpu.memory_space<vmem>>, %arg7: memref<32x32xbf16, #tpu.memory_space<vmem>>, %arg8: memref<32x32xbf16, #tpu.memory_space<vmem>>) attributes {dimension_semantics = [#tpu.dimension_semantics<parallel>], iteration_bounds = array<i64: 1>, scalar_prefetch = 0 : i64, scratch_operands = 0 : i64, tpu.core_type = #tpu.core_type<tc>, window_params = [{transform_indices = @transform_0, window_bounds = array<i64: 32, 32>}, {transform_indices = @transform_1, window_bounds = array<i64: 32, 32>}, {pipeline_mode = #tpu.pipeline_mode<synchronous>, transform_indices = @transform_2, window_bounds = array<i64: 32, 32>}, {pipeline_mode = #tpu.pipeline_mode<synchronous>, transform_indices = @transform_3, window_bounds = array<i64: 1, 32>}, {pipeline_mode = #tpu.pipeline_mode<synchronous>, transform_indices = @transform_4, window_bounds = array<i64: 32, 32>}, {pipeline_mode = #tpu.pipeline_mode<synchronous>, transform_indices = @transform_5, window_bounds = array<i64: 1, 32>}, {transform_indices = @transform_6, window_bounds = array<i64: 32, 32>}, {transform_indices = @transform_7, window_bounds = array<i64: 32, 32>}]} {
    %c0 = arith.constant 0 : index
    %c0_0 = arith.constant 0 : index
    %0 = vector.load %arg1[%c0, %c0_0] : memref<32x32xbf16, #tpu.memory_space<vmem>>, vector<32x32xbf16>
    %c0_1 = arith.constant 0 : index
    %c0_2 = arith.constant 0 : index
    %1 = vector.load %arg3[%c0_1, %c0_2] : memref<32x32xbf16, #tpu.memory_space<vmem>>, vector<32x32xbf16>
    %cst = arith.constant dense<0.000000e+00> : vector<32x32xf32>
    %2 = tpu.matmul %0, %1, %cst {dimension_numbers = #tpu.dot_dimension_numbers<[1], [0], [0], [1], [0, 0, 1, 1], [], []>} : vector<32x32xbf16>, vector<32x32xbf16>, vector<32x32xf32> -> vector<32x32xf32>
    %c0_3 = arith.constant 0 : index
    %c0_4 = arith.constant 0 : index
    %3 = vector.load %arg4[%c0_3, %c0_4] : memref<1x32xf32, #tpu.memory_space<vmem>>, vector<1x32xf32>
    %4 = vector.broadcast %3 : vector<1x32xf32> to vector<32x32xf32>
    %5 = arith.addf %2, %4 : vector<32x32xf32>
    %6 = arith.truncf %5 : vector<32x32xf32> to vector<32x32xbf16>
    %c0_5 = arith.constant 0 : index
    %c0_6 = arith.constant 0 : index
    %7 = vector.load %arg7[%c0_5, %c0_6] : memref<32x32xbf16, #tpu.memory_space<vmem>>, vector<32x32xbf16>
    tpu.vector_store %arg7[%c0_5, %c0_6], %6 {strides = array<i32>} : memref<32x32xbf16, #tpu.memory_space<vmem>>, vector<32x32xbf16>,
    %c0_7 = arith.constant 0 : index
    %c0_8 = arith.constant 0 : index
    %8 = vector.load %arg2[%c0_7, %c0_8] : memref<32x32xbf16, #tpu.memory_space<vmem>>, vector<32x32xbf16>
    %c0_9 = arith.constant 0 : index
    %c0_10 = arith.constant 0 : index
    %9 = vector.load %arg5[%c0_9, %c0_10] : memref<32x32xbf16, #tpu.memory_space<vmem>>, vector<32x32xbf16>
    %cst_11 = arith.constant dense<0.000000e+00> : vector<32x32xf32>
    %10 = tpu.matmul %8, %9, %cst_11 {dimension_numbers = #tpu.dot_dimension_numbers<[1], [0], [0], [1], [0, 0, 1, 1], [], []>} : vector<32x32xbf16>, vector<32x32xbf16>, vector<32x32xf32> -> vector<32x32xf32>
    %c0_12 = arith.constant 0 : index
    %c0_13 = arith.constant 0 : index
    %11 = vector.load %arg6[%c0_12, %c0_13] : memref<1x32xf32, #tpu.memory_space<vmem>>, vector<1x32xf32>
    %12 = vector.broadcast %11 : vector<1x32xf32> to vector<32x32xf32>
    %13 = arith.addf %10, %12 : vector<32x32xf32>
    %14 = arith.truncf %13 : vector<32x32xf32> to vector<32x32xbf16>
    %c0_14 = arith.constant 0 : index
    %c0_15 = arith.constant 0 : index
    %15 = vector.load %arg8[%c0_14, %c0_15] : memref<32x32xbf16, #tpu.memory_space<vmem>>, vector<32x32xbf16>
    tpu.vector_store %arg8[%c0_14, %c0_15], %14 {strides = array<i32>} : memref<32x32xbf16, #tpu.memory_space<vmem>>, vector<32x32xbf16>,
    return
  }
  func.func @transform_0(%arg0: i32) -> (i32, i32) {
    %c0_i32 = arith.constant 0 : i32
    %c0_i32_0 = arith.constant 0 : i32
    return %arg0, %c0_i32 : i32, i32
  }
  func.func @transform_1(%arg0: i32) -> (i32, i32) {
    %c0_i32 = arith.constant 0 : i32
    %c0_i32_0 = arith.constant 0 : i32
    return %arg0, %c0_i32 : i32, i32
  }
  func.func @transform_2(%arg0: i32) -> (i32, i32) {
    %c0_i32 = arith.constant 0 : i32
    %c0_i32_0 = arith.constant 0 : i32
    %c0_i32_1 = arith.constant 0 : i32
    return %c0_i32, %c0_i32_0 : i32, i32
  }
  func.func @transform_3(%arg0: i32) -> (i32, i32) {
    %c0_i32 = arith.constant 0 : i32
    %c0_i32_0 = arith.constant 0 : i32
    %c0_i32_1 = arith.constant 0 : i32
    return %c0_i32, %c0_i32_0 : i32, i32
  }
  func.func @transform_4(%arg0: i32) -> (i32, i32) {
    %c0_i32 = arith.constant 0 : i32
    %c0_i32_0 = arith.constant 0 : i32
    %c0_i32_1 = arith.constant 0 : i32
    return %c0_i32, %c0_i32_0 : i32, i32
  }
  func.func @transform_5(%arg0: i32) -> (i32, i32) {
    %c0_i32 = arith.constant 0 : i32
    %c0_i32_0 = arith.constant 0 : i32
    %c0_i32_1 = arith.constant 0 : i32
    return %c0_i32, %c0_i32_0 : i32, i32
  }
  func.func @transform_6(%arg0: i32) -> (i32, i32) {
    %c0_i32 = arith.constant 0 : i32
    %c0_i32_0 = arith.constant 0 : i32
    return %arg0, %c0_i32 : i32, i32
  }
  func.func @transform_7(%arg0: i32) -> (i32, i32) {
    %c0_i32 = arith.constant 0 : i32
    %c0_i32_0 = arith.constant 0 : i32
    return %arg0, %c0_i32 : i32, i32
  }
}

module attributes {stable_mosaic.version = 11 : i64} {
  func.func @_attn_block_kernel(%arg0: i32, %arg1: i32, %arg2: memref<1x8x32xbf16, #tpu.memory_space<vmem>>, %arg3: memref<1x16x32xbf16, #tpu.memory_space<vmem>>, %arg4: memref<1x16x32xbf16, #tpu.memory_space<vmem>>, %arg5: memref<1x1x16xf32, #tpu.memory_space<vmem>>, %arg6: memref<1x8x32xf32, #tpu.memory_space<vmem>>, %arg7: memref<32x32xbf16, #tpu.memory_space<vmem>>, %arg8: memref<1x32xf32, #tpu.memory_space<vmem>>, %arg9: memref<1x8x32xf32, #tpu.memory_space<vmem>>, %arg10: memref<8x32xbf16, #tpu.memory_space<vmem>>) attributes {dimension_semantics = [#tpu.dimension_semantics<parallel>, #tpu.dimension_semantics<parallel>], iteration_bounds = array<i64: 2, 1>, scalar_prefetch = 0 : i64, scratch_operands = 1 : i64, tpu.core_type = #tpu.core_type<tc>, window_params = [{transform_indices = @transform_0, window_bounds = array<i64: 1, 8, 32>}, {transform_indices = @transform_1, window_bounds = array<i64: 1, 16, 32>}, {transform_indices = @transform_2, window_bounds = array<i64: 1, 16, 32>}, {transform_indices = @transform_3, window_bounds = array<i64: 1, 1, 16>}, {transform_indices = @transform_4, window_bounds = array<i64: 1, 8, 32>}, {pipeline_mode = #tpu.pipeline_mode<synchronous>, transform_indices = @transform_5, window_bounds = array<i64: 32, 32>}, {pipeline_mode = #tpu.pipeline_mode<synchronous>, transform_indices = @transform_6, window_bounds = array<i64: 1, 32>}, {transform_indices = @transform_7, window_bounds = array<i64: 1, 8, 32>}]} {
    %c0 = arith.constant 0 : index
    %c0_0 = arith.constant 0 : index
    %c0_1 = arith.constant 0 : index
    %0 = vector.load %arg5[%c0, %c0_0, %c0_1] : memref<1x1x16xf32, #tpu.memory_space<vmem>>, vector<1x1x16xf32>
    %1 = vector.shape_cast %0 : vector<1x1x16xf32> to vector<1x16xf32>
    %2 = vector.shape_cast %1 : vector<1x16xf32> to vector<1x16xf32>
    %3 = vector.broadcast %2 : vector<1x16xf32> to vector<8x16xf32>
    %c0_2 = arith.constant 0 : index
    %c0_3 = arith.constant 0 : index
    %c0_4 = arith.constant 0 : index
    %4 = vector.load %arg2[%c0_2, %c0_3, %c0_4] : memref<1x8x32xbf16, #tpu.memory_space<vmem>>, vector<1x8x8xbf16>
    %5 = vector.shape_cast %4 : vector<1x8x8xbf16> to vector<8x8xbf16>
    %c0_5 = arith.constant 0 : index
    %c0_6 = arith.constant 0 : index
    %c0_7 = arith.constant 0 : index
    %6 = vector.load %arg3[%c0_5, %c0_6, %c0_7] : memref<1x16x32xbf16, #tpu.memory_space<vmem>>, vector<1x16x8xbf16>
    %7 = vector.shape_cast %6 : vector<1x16x8xbf16> to vector<16x8xbf16>
    %c0_8 = arith.constant 0 : index
    %c0_9 = arith.constant 0 : index
    %c0_10 = arith.constant 0 : index
    %8 = vector.load %arg4[%c0_8, %c0_9, %c0_10] : memref<1x16x32xbf16, #tpu.memory_space<vmem>>, vector<1x16x8xbf16>
    %9 = vector.shape_cast %8 : vector<1x16x8xbf16> to vector<16x8xbf16>
    %cst = arith.constant dense<0.000000e+00> : vector<8x16xf32>
    %10 = tpu.matmul %5, %7, %cst {dimension_numbers = #tpu.dot_dimension_numbers<[1], [1], [0], [0], [0, 0, 1, 0], [], []>} : vector<8x8xbf16>, vector<16x8xbf16>, vector<8x16xf32> -> vector<8x16xf32>
    %11 = arith.addf %10, %3 : vector<8x16xf32>
    %cst_11 = arith.constant dense<0xFF800000> : vector<8xf32>
    %12 = vector.multi_reduction <maximumf>, %11, %cst_11 [1] : vector<8x16xf32> to vector<8xf32>
    %13 = vector.shape_cast %12 : vector<8xf32> to vector<8x1xf32>
    %14 = vector.broadcast %13 : vector<8x1xf32> to vector<8x16xf32>
    %15 = arith.subf %11, %14 : vector<8x16xf32>
    %16 = math.exp %15 : vector<8x16xf32>
    %cst_12 = arith.constant dense<0.000000e+00> : vector<8xf32>
    %17 = vector.multi_reduction <add>, %16, %cst_12 [1] : vector<8x16xf32> to vector<8xf32>
    %18 = vector.shape_cast %17 : vector<8xf32> to vector<8x1xf32>
    %19 = tpu.reciprocal %18 {approx = true} : vector<8x1xf32> -> vector<8x1xf32>
    %20 = vector.broadcast %19 : vector<8x1xf32> to vector<8x16xf32>
    %21 = arith.mulf %16, %20 : vector<8x16xf32>
    %22 = arith.truncf %21 : vector<8x16xf32> to vector<8x16xbf16>
    %cst_13 = arith.constant dense<0.000000e+00> : vector<8x8xf32>
    %23 = tpu.matmul %22, %9, %cst_13 {dimension_numbers = #tpu.dot_dimension_numbers<[1], [0], [0], [1], [0, 0, 1, 1], [], []>} : vector<8x16xbf16>, vector<16x8xbf16>, vector<8x8xf32> -> vector<8x8xf32>
    %24 = arith.truncf %23 : vector<8x8xf32> to vector<8x8xbf16>
    %c0_14 = arith.constant 0 : index
    %c0_15 = arith.constant 0 : index
    %25 = vector.load %arg10[%c0_14, %c0_15] : memref<8x32xbf16, #tpu.memory_space<vmem>>, vector<8x8xbf16>
    tpu.vector_store %arg10[%c0_14, %c0_15], %24 {strides = array<i32>} : memref<8x32xbf16, #tpu.memory_space<vmem>>, vector<8x8xbf16>,
    %c0_16 = arith.constant 0 : index
    %c0_17 = arith.constant 0 : index
    %c8 = arith.constant 8 : index
    %26 = vector.load %arg2[%c0_16, %c0_17, %c8] : memref<1x8x32xbf16, #tpu.memory_space<vmem>>, vector<1x8x8xbf16>
    %27 = vector.shape_cast %26 : vector<1x8x8xbf16> to vector<8x8xbf16>
    %c0_18 = arith.constant 0 : index
    %c0_19 = arith.constant 0 : index
    %c8_20 = arith.constant 8 : index
    %28 = vector.load %arg3[%c0_18, %c0_19, %c8_20] : memref<1x16x32xbf16, #tpu.memory_space<vmem>>, vector<1x16x8xbf16>
    %29 = vector.shape_cast %28 : vector<1x16x8xbf16> to vector<16x8xbf16>
    %c0_21 = arith.constant 0 : index
    %c0_22 = arith.constant 0 : index
    %c8_23 = arith.constant 8 : index
    %30 = vector.load %arg4[%c0_21, %c0_22, %c8_23] : memref<1x16x32xbf16, #tpu.memory_space<vmem>>, vector<1x16x8xbf16>
    %31 = vector.shape_cast %30 : vector<1x16x8xbf16> to vector<16x8xbf16>
    %cst_24 = arith.constant dense<0.000000e+00> : vector<8x16xf32>
    %32 = tpu.matmul %27, %29, %cst_24 {dimension_numbers = #tpu.dot_dimension_numbers<[1], [1], [0], [0], [0, 0, 1, 0], [], []>} : vector<8x8xbf16>, vector<16x8xbf16>, vector<8x16xf32> -> vector<8x16xf32>
    %33 = arith.addf %32, %3 : vector<8x16xf32>
    %cst_25 = arith.constant dense<0xFF800000> : vector<8xf32>
    %34 = vector.multi_reduction <maximumf>, %33, %cst_25 [1] : vector<8x16xf32> to vector<8xf32>
    %35 = vector.shape_cast %34 : vector<8xf32> to vector<8x1xf32>
    %36 = vector.broadcast %35 : vector<8x1xf32> to vector<8x16xf32>
    %37 = arith.subf %33, %36 : vector<8x16xf32>
    %38 = math.exp %37 : vector<8x16xf32>
    %cst_26 = arith.constant dense<0.000000e+00> : vector<8xf32>
    %39 = vector.multi_reduction <add>, %38, %cst_26 [1] : vector<8x16xf32> to vector<8xf32>
    %40 = vector.shape_cast %39 : vector<8xf32> to vector<8x1xf32>
    %41 = tpu.reciprocal %40 {approx = true} : vector<8x1xf32> -> vector<8x1xf32>
    %42 = vector.broadcast %41 : vector<8x1xf32> to vector<8x16xf32>
    %43 = arith.mulf %38, %42 : vector<8x16xf32>
    %44 = arith.truncf %43 : vector<8x16xf32> to vector<8x16xbf16>
    %cst_27 = arith.constant dense<0.000000e+00> : vector<8x8xf32>
    %45 = tpu.matmul %44, %31, %cst_27 {dimension_numbers = #tpu.dot_dimension_numbers<[1], [0], [0], [1], [0, 0, 1, 1], [], []>} : vector<8x16xbf16>, vector<16x8xbf16>, vector<8x8xf32> -> vector<8x8xf32>
    %46 = arith.truncf %45 : vector<8x8xf32> to vector<8x8xbf16>
    %c0_28 = arith.constant 0 : index
    %c8_29 = arith.constant 8 : index
    %47 = vector.load %arg10[%c0_28, %c8_29] : memref<8x32xbf16, #tpu.memory_space<vmem>>, vector<8x8xbf16>
    tpu.vector_store %arg10[%c0_28, %c8_29], %46 {strides = array<i32>} : memref<8x32xbf16, #tpu.memory_space<vmem>>, vector<8x8xbf16>,
    %c0_30 = arith.constant 0 : index
    %c0_31 = arith.constant 0 : index
    %c16 = arith.constant 16 : index
    %48 = vector.load %arg2[%c0_30, %c0_31, %c16] : memref<1x8x32xbf16, #tpu.memory_space<vmem>>, vector<1x8x8xbf16>
    %49 = vector.shape_cast %48 : vector<1x8x8xbf16> to vector<8x8xbf16>
    %c0_32 = arith.constant 0 : index
    %c0_33 = arith.constant 0 : index
    %c16_34 = arith.constant 16 : index
    %50 = vector.load %arg3[%c0_32, %c0_33, %c16_34] : memref<1x16x32xbf16, #tpu.memory_space<vmem>>, vector<1x16x8xbf16>
    %51 = vector.shape_cast %50 : vector<1x16x8xbf16> to vector<16x8xbf16>
    %c0_35 = arith.constant 0 : index
    %c0_36 = arith.constant 0 : index
    %c16_37 = arith.constant 16 : index
    %52 = vector.load %arg4[%c0_35, %c0_36, %c16_37] : memref<1x16x32xbf16, #tpu.memory_space<vmem>>, vector<1x16x8xbf16>
    %53 = vector.shape_cast %52 : vector<1x16x8xbf16> to vector<16x8xbf16>
    %cst_38 = arith.constant dense<0.000000e+00> : vector<8x16xf32>
    %54 = tpu.matmul %49, %51, %cst_38 {dimension_numbers = #tpu.dot_dimension_numbers<[1], [1], [0], [0], [0, 0, 1, 0], [], []>} : vector<8x8xbf16>, vector<16x8xbf16>, vector<8x16xf32> -> vector<8x16xf32>
    %55 = arith.addf %54, %3 : vector<8x16xf32>
    %cst_39 = arith.constant dense<0xFF800000> : vector<8xf32>
    %56 = vector.multi_reduction <maximumf>, %55, %cst_39 [1] : vector<8x16xf32> to vector<8xf32>
    %57 = vector.shape_cast %56 : vector<8xf32> to vector<8x1xf32>
    %58 = vector.broadcast %57 : vector<8x1xf32> to vector<8x16xf32>
    %59 = arith.subf %55, %58 : vector<8x16xf32>
    %60 = math.exp %59 : vector<8x16xf32>
    %cst_40 = arith.constant dense<0.000000e+00> : vector<8xf32>
    %61 = vector.multi_reduction <add>, %60, %cst_40 [1] : vector<8x16xf32> to vector<8xf32>
    %62 = vector.shape_cast %61 : vector<8xf32> to vector<8x1xf32>
    %63 = tpu.reciprocal %62 {approx = true} : vector<8x1xf32> -> vector<8x1xf32>
    %64 = vector.broadcast %63 : vector<8x1xf32> to vector<8x16xf32>
    %65 = arith.mulf %60, %64 : vector<8x16xf32>
    %66 = arith.truncf %65 : vector<8x16xf32> to vector<8x16xbf16>
    %cst_41 = arith.constant dense<0.000000e+00> : vector<8x8xf32>
    %67 = tpu.matmul %66, %53, %cst_41 {dimension_numbers = #tpu.dot_dimension_numbers<[1], [0], [0], [1], [0, 0, 1, 1], [], []>} : vector<8x16xbf16>, vector<16x8xbf16>, vector<8x8xf32> -> vector<8x8xf32>
    %68 = arith.truncf %67 : vector<8x8xf32> to vector<8x8xbf16>
    %c0_42 = arith.constant 0 : index
    %c16_43 = arith.constant 16 : index
    %69 = vector.load %arg10[%c0_42, %c16_43] : memref<8x32xbf16, #tpu.memory_space<vmem>>, vector<8x8xbf16>
    tpu.vector_store %arg10[%c0_42, %c16_43], %68 {strides = array<i32>} : memref<8x32xbf16, #tpu.memory_space<vmem>>, vector<8x8xbf16>,
    %c0_44 = arith.constant 0 : index
    %c0_45 = arith.constant 0 : index
    %c24 = arith.constant 24 : index
    %70 = vector.load %arg2[%c0_44, %c0_45, %c24] : memref<1x8x32xbf16, #tpu.memory_space<vmem>>, vector<1x8x8xbf16>
    %71 = vector.shape_cast %70 : vector<1x8x8xbf16> to vector<8x8xbf16>
    %c0_46 = arith.constant 0 : index
    %c0_47 = arith.constant 0 : index
    %c24_48 = arith.constant 24 : index
    %72 = vector.load %arg3[%c0_46, %c0_47, %c24_48] : memref<1x16x32xbf16, #tpu.memory_space<vmem>>, vector<1x16x8xbf16>
    %73 = vector.shape_cast %72 : vector<1x16x8xbf16> to vector<16x8xbf16>
    %c0_49 = arith.constant 0 : index
    %c0_50 = arith.constant 0 : index
    %c24_51 = arith.constant 24 : index
    %74 = vector.load %arg4[%c0_49, %c0_50, %c24_51] : memref<1x16x32xbf16, #tpu.memory_space<vmem>>, vector<1x16x8xbf16>
    %75 = vector.shape_cast %74 : vector<1x16x8xbf16> to vector<16x8xbf16>
    %cst_52 = arith.constant dense<0.000000e+00> : vector<8x16xf32>
    %76 = tpu.matmul %71, %73, %cst_52 {dimension_numbers = #tpu.dot_dimension_numbers<[1], [1], [0], [0], [0, 0, 1, 0], [], []>} : vector<8x8xbf16>, vector<16x8xbf16>, vector<8x16xf32> -> vector<8x16xf32>
    %77 = arith.addf %76, %3 : vector<8x16xf32>
    %cst_53 = arith.constant dense<0xFF800000> : vector<8xf32>
    %78 = vector.multi_reduction <maximumf>, %77, %cst_53 [1] : vector<8x16xf32> to vector<8xf32>
    %79 = vector.shape_cast %78 : vector<8xf32> to vector<8x1xf32>
    %80 = vector.broadcast %79 : vector<8x1xf32> to vector<8x16xf32>
    %81 = arith.subf %77, %80 : vector<8x16xf32>
    %82 = math.exp %81 : vector<8x16xf32>
    %cst_54 = arith.constant dense<0.000000e+00> : vector<8xf32>
    %83 = vector.multi_reduction <add>, %82, %cst_54 [1] : vector<8x16xf32> to vector<8xf32>
    %84 = vector.shape_cast %83 : vector<8xf32> to vector<8x1xf32>
    %85 = tpu.reciprocal %84 {approx = true} : vector<8x1xf32> -> vector<8x1xf32>
    %86 = vector.broadcast %85 : vector<8x1xf32> to vector<8x16xf32>
    %87 = arith.mulf %82, %86 : vector<8x16xf32>
    %88 = arith.truncf %87 : vector<8x16xf32> to vector<8x16xbf16>
    %cst_55 = arith.constant dense<0.000000e+00> : vector<8x8xf32>
    %89 = tpu.matmul %88, %75, %cst_55 {dimension_numbers = #tpu.dot_dimension_numbers<[1], [0], [0], [1], [0, 0, 1, 1], [], []>} : vector<8x16xbf16>, vector<16x8xbf16>, vector<8x8xf32> -> vector<8x8xf32>
    %90 = arith.truncf %89 : vector<8x8xf32> to vector<8x8xbf16>
    %c0_56 = arith.constant 0 : index
    %c24_57 = arith.constant 24 : index
    %91 = vector.load %arg10[%c0_56, %c24_57] : memref<8x32xbf16, #tpu.memory_space<vmem>>, vector<8x8xbf16>
    tpu.vector_store %arg10[%c0_56, %c24_57], %90 {strides = array<i32>} : memref<8x32xbf16, #tpu.memory_space<vmem>>, vector<8x8xbf16>,
    %c0_58 = arith.constant 0 : index
    %c0_59 = arith.constant 0 : index
    %c0_60 = arith.constant 0 : index
    %92 = vector.load %arg6[%c0_58, %c0_59, %c0_60] : memref<1x8x32xf32, #tpu.memory_space<vmem>>, vector<1x8x32xf32>
    %93 = vector.shape_cast %92 : vector<1x8x32xf32> to vector<8x32xf32>
    %c0_61 = arith.constant 0 : index
    %c0_62 = arith.constant 0 : index
    %94 = vector.load %arg8[%c0_61, %c0_62] : memref<1x32xf32, #tpu.memory_space<vmem>>, vector<1x32xf32>
    %95 = vector.broadcast %94 : vector<1x32xf32> to vector<8x32xf32>
    %96 = arith.addf %93, %95 : vector<8x32xf32>
    %c0_63 = arith.constant 0 : index
    %c0_64 = arith.constant 0 : index
    %97 = vector.load %arg10[%c0_63, %c0_64] : memref<8x32xbf16, #tpu.memory_space<vmem>>, vector<8x32xbf16>
    %c0_65 = arith.constant 0 : index
    %c0_66 = arith.constant 0 : index
    %98 = vector.load %arg7[%c0_65, %c0_66] : memref<32x32xbf16, #tpu.memory_space<vmem>>, vector<32x32xbf16>
    %cst_67 = arith.constant dense<0.000000e+00> : vector<8x32xf32>
    %99 = tpu.matmul %97, %98, %cst_67 {dimension_numbers = #tpu.dot_dimension_numbers<[1], [0], [0], [1], [0, 0, 1, 1], [], []>} : vector<8x32xbf16>, vector<32x32xbf16>, vector<8x32xf32> -> vector<8x32xf32>
    %100 = arith.addf %96, %99 : vector<8x32xf32>
    %c0_68 = arith.constant 0 : index
    %c0_69 = arith.constant 0 : index
    %c0_70 = arith.constant 0 : index
    %101 = vector.load %arg9[%c0_68, %c0_69, %c0_70] : memref<1x8x32xf32, #tpu.memory_space<vmem>>, vector<1x8x32xf32>
    %102 = vector.shape_cast %101 : vector<1x8x32xf32> to vector<8x32xf32>
    %103 = vector.shape_cast %100 : vector<8x32xf32> to vector<1x8x32xf32>
    tpu.vector_store %arg9[%c0_68, %c0_69, %c0_70], %103 {strides = array<i32>} : memref<1x8x32xf32, #tpu.memory_space<vmem>>, vector<1x8x32xf32>,
    return
  }
  func.func @transform_0(%arg0: i32, %arg1: i32) -> (i32, i32, i32) {
    %c0_i32 = arith.constant 0 : i32
    %c0_i32_0 = arith.constant 0 : i32
    return %arg0, %arg1, %c0_i32 : i32, i32, i32
  }
  func.func @transform_1(%arg0: i32, %arg1: i32) -> (i32, i32, i32) {
    %c0_i32 = arith.constant 0 : i32
    %c0_i32_0 = arith.constant 0 : i32
    %c0_i32_1 = arith.constant 0 : i32
    return %arg0, %c0_i32, %c0_i32_0 : i32, i32, i32
  }
  func.func @transform_2(%arg0: i32, %arg1: i32) -> (i32, i32, i32) {
    %c0_i32 = arith.constant 0 : i32
    %c0_i32_0 = arith.constant 0 : i32
    %c0_i32_1 = arith.constant 0 : i32
    return %arg0, %c0_i32, %c0_i32_0 : i32, i32, i32
  }
  func.func @transform_3(%arg0: i32, %arg1: i32) -> (i32, i32, i32) {
    %c0_i32 = arith.constant 0 : i32
    %c0_i32_0 = arith.constant 0 : i32
    %c0_i32_1 = arith.constant 0 : i32
    return %arg0, %c0_i32, %c0_i32_0 : i32, i32, i32
  }
  func.func @transform_4(%arg0: i32, %arg1: i32) -> (i32, i32, i32) {
    %c0_i32 = arith.constant 0 : i32
    %c0_i32_0 = arith.constant 0 : i32
    return %arg0, %arg1, %c0_i32 : i32, i32, i32
  }
  func.func @transform_5(%arg0: i32, %arg1: i32) -> (i32, i32) {
    %c0_i32 = arith.constant 0 : i32
    %c0_i32_0 = arith.constant 0 : i32
    %c0_i32_1 = arith.constant 0 : i32
    return %c0_i32, %c0_i32_0 : i32, i32
  }
  func.func @transform_6(%arg0: i32, %arg1: i32) -> (i32, i32) {
    %c0_i32 = arith.constant 0 : i32
    %c0_i32_0 = arith.constant 0 : i32
    %c0_i32_1 = arith.constant 0 : i32
    return %c0_i32, %c0_i32_0 : i32, i32
  }
  func.func @transform_7(%arg0: i32, %arg1: i32) -> (i32, i32, i32) {
    %c0_i32 = arith.constant 0 : i32
    %c0_i32_0 = arith.constant 0 : i32
    return %arg0, %arg1, %c0_i32 : i32, i32, i32
  }
}

module attributes {stable_mosaic.version = 11 : i64} {
  func.func @_ffn_kernel(%arg0: i32, %arg1: memref<16x32xf32, #tpu.memory_space<vmem>>, %arg2: memref<1x32xf32, #tpu.memory_space<vmem>>, %arg3: memref<1x32xf32, #tpu.memory_space<vmem>>, %arg4: memref<32x64xbf16, #tpu.memory_space<vmem>>, %arg5: memref<1x64xf32, #tpu.memory_space<vmem>>, %arg6: memref<64x32xbf16, #tpu.memory_space<vmem>>, %arg7: memref<1x32xf32, #tpu.memory_space<vmem>>, %arg8: memref<16x32xf32, #tpu.memory_space<vmem>>) attributes {dimension_semantics = [#tpu.dimension_semantics<parallel>], iteration_bounds = array<i64: 1>, scalar_prefetch = 0 : i64, scratch_operands = 0 : i64, tpu.core_type = #tpu.core_type<tc>, window_params = [{transform_indices = @transform_0, window_bounds = array<i64: 16, 32>}, {pipeline_mode = #tpu.pipeline_mode<synchronous>, transform_indices = @transform_1, window_bounds = array<i64: 1, 32>}, {pipeline_mode = #tpu.pipeline_mode<synchronous>, transform_indices = @transform_2, window_bounds = array<i64: 1, 32>}, {pipeline_mode = #tpu.pipeline_mode<synchronous>, transform_indices = @transform_3, window_bounds = array<i64: 32, 64>}, {pipeline_mode = #tpu.pipeline_mode<synchronous>, transform_indices = @transform_4, window_bounds = array<i64: 1, 64>}, {pipeline_mode = #tpu.pipeline_mode<synchronous>, transform_indices = @transform_5, window_bounds = array<i64: 64, 32>}, {pipeline_mode = #tpu.pipeline_mode<synchronous>, transform_indices = @transform_6, window_bounds = array<i64: 1, 32>}, {transform_indices = @transform_7, window_bounds = array<i64: 16, 32>}]} {
    %c0 = arith.constant 0 : index
    %c0_0 = arith.constant 0 : index
    %0 = vector.load %arg1[%c0, %c0_0] : memref<16x32xf32, #tpu.memory_space<vmem>>, vector<16x32xf32>
    %c0_1 = arith.constant 0 : index
    %c0_2 = arith.constant 0 : index
    %1 = vector.load %arg2[%c0_1, %c0_2] : memref<1x32xf32, #tpu.memory_space<vmem>>, vector<1x32xf32>
    %c0_3 = arith.constant 0 : index
    %c0_4 = arith.constant 0 : index
    %2 = vector.load %arg3[%c0_3, %c0_4] : memref<1x32xf32, #tpu.memory_space<vmem>>, vector<1x32xf32>
    %cst = arith.constant dense<0.000000e+00> : vector<16xf32>
    %3 = vector.multi_reduction <add>, %0, %cst [1] : vector<16x32xf32> to vector<16xf32>
    %4 = vector.shape_cast %3 : vector<16xf32> to vector<16x1xf32>
    %cst_5 = arith.constant 3.200000e+01 : f32
    %5 = vector.broadcast %cst_5 : f32 to vector<16x1xf32>
    %6 = arith.divf %4, %5 : vector<16x1xf32>
    %7 = vector.broadcast %6 : vector<16x1xf32> to vector<16x32xf32>
    %8 = arith.subf %0, %7 : vector<16x32xf32>
    %9 = arith.mulf %8, %8 : vector<16x32xf32>
    %cst_6 = arith.constant dense<0.000000e+00> : vector<16xf32>
    %10 = vector.multi_reduction <add>, %9, %cst_6 [1] : vector<16x32xf32> to vector<16xf32>
    %11 = vector.shape_cast %10 : vector<16xf32> to vector<16x1xf32>
    %cst_7 = arith.constant 3.200000e+01 : f32
    %12 = vector.broadcast %cst_7 : f32 to vector<16x1xf32>
    %13 = arith.divf %11, %12 : vector<16x1xf32>
    %cst_8 = arith.constant 9.99999974E-6 : f32
    %14 = vector.broadcast %cst_8 : f32 to vector<16x1xf32>
    %15 = arith.addf %13, %14 : vector<16x1xf32>
    %16 = math.rsqrt %15 : vector<16x1xf32>
    %17 = vector.broadcast %16 : vector<16x1xf32> to vector<16x32xf32>
    %18 = arith.mulf %8, %17 : vector<16x32xf32>
    %19 = vector.broadcast %1 : vector<1x32xf32> to vector<16x32xf32>
    %20 = arith.mulf %18, %19 : vector<16x32xf32>
    %21 = vector.broadcast %2 : vector<1x32xf32> to vector<16x32xf32>
    %22 = arith.addf %20, %21 : vector<16x32xf32>
    %23 = arith.truncf %22 : vector<16x32xf32> to vector<16x32xbf16>
    %c0_9 = arith.constant 0 : index
    %c0_10 = arith.constant 0 : index
    %24 = vector.load %arg4[%c0_9, %c0_10] : memref<32x64xbf16, #tpu.memory_space<vmem>>, vector<32x64xbf16>
    %cst_11 = arith.constant dense<0.000000e+00> : vector<16x64xf32>
    %25 = tpu.matmul %23, %24, %cst_11 {dimension_numbers = #tpu.dot_dimension_numbers<[1], [0], [0], [1], [0, 0, 1, 1], [], []>} : vector<16x32xbf16>, vector<32x64xbf16>, vector<16x64xf32> -> vector<16x64xf32>
    %c0_12 = arith.constant 0 : index
    %c0_13 = arith.constant 0 : index
    %26 = vector.load %arg5[%c0_12, %c0_13] : memref<1x64xf32, #tpu.memory_space<vmem>>, vector<1x64xf32>
    %27 = vector.broadcast %26 : vector<1x64xf32> to vector<16x64xf32>
    %28 = arith.addf %25, %27 : vector<16x64xf32>
    %cst_14 = arith.constant 0.000000e+00 : f32
    %29 = vector.broadcast %cst_14 : f32 to vector<16x64xf32>
    %30 = arith.maximumf %28, %29 : vector<16x64xf32>
    %31 = arith.truncf %30 : vector<16x64xf32> to vector<16x64xbf16>
    %c0_15 = arith.constant 0 : index
    %c0_16 = arith.constant 0 : index
    %32 = vector.load %arg6[%c0_15, %c0_16] : memref<64x32xbf16, #tpu.memory_space<vmem>>, vector<64x32xbf16>
    %cst_17 = arith.constant dense<0.000000e+00> : vector<16x32xf32>
    %33 = tpu.matmul %31, %32, %cst_17 {dimension_numbers = #tpu.dot_dimension_numbers<[1], [0], [0], [1], [0, 0, 1, 1], [], []>} : vector<16x64xbf16>, vector<64x32xbf16>, vector<16x32xf32> -> vector<16x32xf32>
    %c0_18 = arith.constant 0 : index
    %c0_19 = arith.constant 0 : index
    %34 = vector.load %arg7[%c0_18, %c0_19] : memref<1x32xf32, #tpu.memory_space<vmem>>, vector<1x32xf32>
    %35 = vector.broadcast %34 : vector<1x32xf32> to vector<16x32xf32>
    %36 = arith.addf %33, %35 : vector<16x32xf32>
    %37 = arith.addf %0, %36 : vector<16x32xf32>
    %c0_20 = arith.constant 0 : index
    %c0_21 = arith.constant 0 : index
    %38 = vector.load %arg8[%c0_20, %c0_21] : memref<16x32xf32, #tpu.memory_space<vmem>>, vector<16x32xf32>
    tpu.vector_store %arg8[%c0_20, %c0_21], %37 {strides = array<i32>} : memref<16x32xf32, #tpu.memory_space<vmem>>, vector<16x32xf32>,
    return
  }
  func.func @transform_0(%arg0: i32) -> (i32, i32) {
    %c0_i32 = arith.constant 0 : i32
    %c0_i32_0 = arith.constant 0 : i32
    return %arg0, %c0_i32 : i32, i32
  }
  func.func @transform_1(%arg0: i32) -> (i32, i32) {
    %c0_i32 = arith.constant 0 : i32
    %c0_i32_0 = arith.constant 0 : i32
    %c0_i32_1 = arith.constant 0 : i32
    return %c0_i32, %c0_i32_0 : i32, i32
  }
  func.func @transform_2(%arg0: i32) -> (i32, i32) {
    %c0_i32 = arith.constant 0 : i32
    %c0_i32_0 = arith.constant 0 : i32
    %c0_i32_1 = arith.constant 0 : i32
    return %c0_i32, %c0_i32_0 : i32, i32
  }
  func.func @transform_3(%arg0: i32) -> (i32, i32) {
    %c0_i32 = arith.constant 0 : i32
    %c0_i32_0 = arith.constant 0 : i32
    %c0_i32_1 = arith.constant 0 : i32
    return %c0_i32, %c0_i32_0 : i32, i32
  }
  func.func @transform_4(%arg0: i32) -> (i32, i32) {
    %c0_i32 = arith.constant 0 : i32
    %c0_i32_0 = arith.constant 0 : i32
    %c0_i32_1 = arith.constant 0 : i32
    return %c0_i32, %c0_i32_0 : i32, i32
  }
  func.func @transform_5(%arg0: i32) -> (i32, i32) {
    %c0_i32 = arith.constant 0 : i32
    %c0_i32_0 = arith.constant 0 : i32
    %c0_i32_1 = arith.constant 0 : i32
    return %c0_i32, %c0_i32_0 : i32, i32
  }
  func.func @transform_6(%arg0: i32) -> (i32, i32) {
    %c0_i32 = arith.constant 0 : i32
    %c0_i32_0 = arith.constant 0 : i32
    %c0_i32_1 = arith.constant 0 : i32
    return %c0_i32, %c0_i32_0 : i32, i32
  }
  func.func @transform_7(%arg0: i32) -> (i32, i32) {
    %c0_i32 = arith.constant 0 : i32
    %c0_i32_0 = arith.constant 0 : i32
    return %arg0, %c0_i32 : i32, i32
  }
}

module attributes {stable_mosaic.version = 11 : i64} {
  func.func @_layernorm_kernel(%arg0: i32, %arg1: memref<16x32xf32, #tpu.memory_space<vmem>>, %arg2: memref<1x32xf32, #tpu.memory_space<vmem>>, %arg3: memref<1x32xf32, #tpu.memory_space<vmem>>, %arg4: memref<16x32xf32, #tpu.memory_space<vmem>>) attributes {dimension_semantics = [#tpu.dimension_semantics<parallel>], iteration_bounds = array<i64: 1>, scalar_prefetch = 0 : i64, scratch_operands = 0 : i64, tpu.core_type = #tpu.core_type<tc>, window_params = [{transform_indices = @transform_0, window_bounds = array<i64: 16, 32>}, {pipeline_mode = #tpu.pipeline_mode<synchronous>, transform_indices = @transform_1, window_bounds = array<i64: 1, 32>}, {pipeline_mode = #tpu.pipeline_mode<synchronous>, transform_indices = @transform_2, window_bounds = array<i64: 1, 32>}, {transform_indices = @transform_3, window_bounds = array<i64: 16, 32>}]} {
    %c0 = arith.constant 0 : index
    %c0_0 = arith.constant 0 : index
    %0 = vector.load %arg1[%c0, %c0_0] : memref<16x32xf32, #tpu.memory_space<vmem>>, vector<16x32xf32>
    %c0_1 = arith.constant 0 : index
    %c0_2 = arith.constant 0 : index
    %1 = vector.load %arg2[%c0_1, %c0_2] : memref<1x32xf32, #tpu.memory_space<vmem>>, vector<1x32xf32>
    %c0_3 = arith.constant 0 : index
    %c0_4 = arith.constant 0 : index
    %2 = vector.load %arg3[%c0_3, %c0_4] : memref<1x32xf32, #tpu.memory_space<vmem>>, vector<1x32xf32>
    %cst = arith.constant dense<0.000000e+00> : vector<16xf32>
    %3 = vector.multi_reduction <add>, %0, %cst [1] : vector<16x32xf32> to vector<16xf32>
    %4 = vector.shape_cast %3 : vector<16xf32> to vector<16x1xf32>
    %cst_5 = arith.constant 3.200000e+01 : f32
    %5 = vector.broadcast %cst_5 : f32 to vector<16x1xf32>
    %6 = arith.divf %4, %5 : vector<16x1xf32>
    %7 = vector.broadcast %6 : vector<16x1xf32> to vector<16x32xf32>
    %8 = arith.subf %0, %7 : vector<16x32xf32>
    %9 = arith.mulf %8, %8 : vector<16x32xf32>
    %cst_6 = arith.constant dense<0.000000e+00> : vector<16xf32>
    %10 = vector.multi_reduction <add>, %9, %cst_6 [1] : vector<16x32xf32> to vector<16xf32>
    %11 = vector.shape_cast %10 : vector<16xf32> to vector<16x1xf32>
    %cst_7 = arith.constant 3.200000e+01 : f32
    %12 = vector.broadcast %cst_7 : f32 to vector<16x1xf32>
    %13 = arith.divf %11, %12 : vector<16x1xf32>
    %cst_8 = arith.constant 9.99999974E-6 : f32
    %14 = vector.broadcast %cst_8 : f32 to vector<16x1xf32>
    %15 = arith.addf %13, %14 : vector<16x1xf32>
    %16 = math.rsqrt %15 : vector<16x1xf32>
    %17 = vector.broadcast %16 : vector<16x1xf32> to vector<16x32xf32>
    %18 = arith.mulf %8, %17 : vector<16x32xf32>
    %19 = vector.broadcast %1 : vector<1x32xf32> to vector<16x32xf32>
    %20 = arith.mulf %18, %19 : vector<16x32xf32>
    %21 = vector.broadcast %2 : vector<1x32xf32> to vector<16x32xf32>
    %22 = arith.addf %20, %21 : vector<16x32xf32>
    %c0_9 = arith.constant 0 : index
    %c0_10 = arith.constant 0 : index
    %23 = vector.load %arg4[%c0_9, %c0_10] : memref<16x32xf32, #tpu.memory_space<vmem>>, vector<16x32xf32>
    tpu.vector_store %arg4[%c0_9, %c0_10], %22 {strides = array<i32>} : memref<16x32xf32, #tpu.memory_space<vmem>>, vector<16x32xf32>,
    return
  }
  func.func @transform_0(%arg0: i32) -> (i32, i32) {
    %c0_i32 = arith.constant 0 : i32
    %c0_i32_0 = arith.constant 0 : i32
    return %arg0, %c0_i32 : i32, i32
  }
  func.func @transform_1(%arg0: i32) -> (i32, i32) {
    %c0_i32 = arith.constant 0 : i32
    %c0_i32_0 = arith.constant 0 : i32
    %c0_i32_1 = arith.constant 0 : i32
    return %c0_i32, %c0_i32_0 : i32, i32
  }
  func.func @transform_2(%arg0: i32) -> (i32, i32) {
    %c0_i32 = arith.constant 0 : i32
    %c0_i32_0 = arith.constant 0 : i32
    %c0_i32_1 = arith.constant 0 : i32
    return %c0_i32, %c0_i32_0 : i32, i32
  }
  func.func @transform_3(%arg0: i32) -> (i32, i32) {
    %c0_i32 = arith.constant 0 : i32
    %c0_i32_0 = arith.constant 0 : i32
    return %arg0, %c0_i32 : i32, i32
  }
}

</mosaic_0001>

<llo_original>
// kernel: cross_attention_forward.17
$region0: #{cross_attention_forward.17}
  #allocation0 [shape = 'u32[]', space=smem, size = 0x4, offset = 0x4, fixed_abs, tag = 'smem constant byte address 0x4 - core index']
  #allocation1 [shape = 'u32[144,128]{1,0:T(1,128)}', space=vmem, size = 0x12000, scoped, tag = 'internal scratch']
  %s0 = inlined_call_operand.vmem [shape: f32[16,32], index: 0, kind: input, shape index: {}]
  %s1 = inlined_call_operand.vmem [shape: f32[16,32], index: 1, kind: input, shape index: {}]
  %s2 = inlined_call_operand.vmem [shape: f32[1,32], index: 2, kind: input, shape index: {}]
  %s3 = inlined_call_operand.vmem [shape: f32[1,32], index: 3, kind: input, shape index: {}]
  %s4 = inlined_call_operand.vmem [shape: bf16[32,32], index: 4, kind: input, shape index: {}]
  %s5 = inlined_call_operand.vmem [shape: f32[1,32], index: 5, kind: input, shape index: {}]
  %s6 = inlined_call_operand.vmem [shape: bf16[16,32], index: 6, kind: output, shape index: {}]
  %s7 = sld [smem:[#allocation0]]
  $region34: #{cross_attention_forward.17} parent=0
    _
  %s9 = ssub.s32 1, %s7
  %s10 = scalar_select 0, %s9, %s7
  // Predicated region
  $region2: #{cross_attention_forward.17} parent=0 // pred_check
    _
  $region3: #{cross_attention_forward.17} parent=0 // pred_check_branch
    %12 = sbr.rel (0) target = $region5
  $region4: #{cross_attention_forward.17} parent=0 // pred_region
    _
  $region5: #{cross_attention_forward.17} parent=0 // pred_fallthru
    _
  // Predicated region
  $region6: #{cross_attention_forward.17} parent=0 // pred_check
    _
  $region7: #{cross_attention_forward.17} parent=0 // pred_check_branch
    %14 = sbr.rel (0) target = $region9
  $region8: #{cross_attention_forward.17} parent=0 // pred_region
    _
  $region9: #{cross_attention_forward.17} parent=0 // pred_fallthru
    _
  // Predicated region
  $region10: #{cross_attention_forward.17} parent=0 // pred_check
    _
  $region11: #{cross_attention_forward.17} parent=0 // pred_check_branch
    %16 = sbr.rel (0) target = $region13
  $region12: #{cross_attention_forward.17} parent=0 // pred_region
    _
  $region13: #{cross_attention_forward.17} parent=0 // pred_fallthru
    _
  // Predicated region
  $region14: #{cross_attention_forward.17} parent=0 // pred_check
    _
  $region15: #{cross_attention_forward.17} parent=0 // pred_check_branch
    %18 = sbr.rel (0) target = $region17
  $region16: #{cross_attention_forward.17} parent=0 // pred_region
    _
  $region17: #{cross_attention_forward.17} parent=0 // pred_fallthru
    _
  // Predicated region
  $region18: #{cross_attention_forward.17} parent=0 // pred_check
    _
  $region19: #{cross_attention_forward.17} parent=0 // pred_check_branch
    %20 = sbr.rel (0) target = $region21
  $region20: #{cross_attention_forward.17} parent=0 // pred_region
    _
  $region21: #{cross_attention_forward.17} parent=0 // pred_fallthru
    _
  // Predicated region
  $region22: #{cross_attention_forward.17} parent=0 // pred_check
    _
  $region23: #{cross_attention_forward.17} parent=0 // pred_check_branch
    %22 = sbr.rel (0) target = $region25
  $region24: #{cross_attention_forward.17} parent=0 // pred_region
    _
  $region25: #{cross_attention_forward.17} parent=0 // pred_fallthru
    _
  %v24 = vld [vmem:[%s0] sm:$0xff]
  %v25 = vld [vmem:[%s0 + $0x8] sm:$0xff]
  %v26 = vld [vmem:[%s2] sm:$0x1]
  %v27 = vld [vmem:[%s3] sm:$0x1]
  %vm28 = vcmask 261120
  %v29 = vsel %vm28, %v24, 0.0
  %30 = vadd.xlane.f32.xlu0 %v29
  %v31 = vpop.xlane.xlu0 %30
  %v32 = vsel %vm28, %v25, 0.0
  %33 = vadd.xlane.f32.xlu0 %v32
  %v34 = vpop.xlane.xlu0 %33
  %v35 = vrcp.pop 32.0
  %v36 = vmul.f32 %v31, %v35
  %v37 = vmul.f32 %v34, %v35
  %v38 = vsub.f32 %v24, %v36
  %v39 = vsub.f32 %v25, %v37
  %v40 = vmul.f32 %v38, %v38
  %v41 = vmul.f32 %v39, %v39
  %v42 = vsel %vm28, %v40, 0.0
  %43 = vadd.xlane.f32.xlu0 %v42
  %v44 = vpop.xlane.xlu0 %43
  %v45 = vsel %vm28, %v41, 0.0
  %46 = vadd.xlane.f32.xlu0 %v45
  %v47 = vpop.xlane.xlu0 %46
  %v48 = vmul.f32 %v44, %v35
  %v49 = vmul.f32 %v47, %v35
  %v50 = vadd.f32 %v48, 1e-05
  %v51 = vadd.f32 %v49, 1e-05
  %v52 = vrsqrt.pop %v50
  %v53 = vrsqrt.pop %v51
  %v54 = vmul.f32 %v38, %v52
  %v55 = vmul.f32 %v39, %v53
  %v57 = vlaneseq
  %v58 = vshrl.u32 %v57, 7
  %v59 = vsub.s32 0, %v58
  %v60 = vrot.slane %v26, %v59
  %v62 = vmul.f32 %v54, %v60
  %v63 = vmul.f32 %v55, %v60
  %v65 = vlaneseq
  %v66 = vshrl.u32 %v65, 7
  %v67 = vsub.s32 0, %v66
  %v68 = vrot.slane %v27, %v67
  %v70 = vadd.f32 %v62, %v68
  %v71 = vadd.f32 %v63, %v68
  %v72 = vld [vmem:[%s1] sm:$0xff]
  %v73 = vld [vmem:[%s1 + $0x8] sm:$0xff]
  %v74 = vadd.f32 %v70, %v72
  %v75 = vadd.f32 %v71, %v73
  %v76 = vpack.c.bf16 %v75, %v74
  %v77 = vld [vmem:[%s4] sm:$0xf]
  %v78 = vld [vmem:[%s4 + $0x4] sm:$0xf]
  %v79 = vld [vmem:[%s4 + $0x8] sm:$0xf]
  %v80 = vld [vmem:[%s4 + $0xc] sm:$0xf]
  %v81 = vld [vmem:[%s5] sm:$0x1]
  %v83 = vlaneseq
  %v84 = vshrl.u32 %v83, 7
  %v85 = vsub.s32 0, %v84
  %v86 = vrot.slane %v81, %v85
  %v92 = vunpack.c.l.b16 %v77
  %v93 = vunpack.c.l.b16 %v78
  %v94 = vunpack.c.l.b16 %v79
  %v95 = vunpack.c.l.b16 %v80
  %v96 = vpack.c.b16 %v93, %v92
  %v97 = vpack.c.b16 %v95, %v94
  %v101 = vsel %vm28, %v76, 0
  %103 = vmatprep.subr.bf16.mxu0 0
  %104 = vmatpush1.bf16.msra.mxu0 %v96
  %105 = vmatprep.subr.bf16.mxu0 0
  %106 = vmatpush1.bf16.msra.mxu0 %v97
  %107 = vmatprep.subr.bf16.mxu0 0
  %108 = vmatpush1.bf16.msra.mxu0 0
  %109 = vmatprep.subr.bf16.mxu0 0
  %110 = vmatpush1.bf16.msra.mxu0 0
  %111 = vmatprep.subr.bf16.mxu0 0
  %112 = vmatpush1.bf16.msra.mxu0 0
  %113 = vmatprep.subr.bf16.mxu0 0
  %114 = vmatpush1.bf16.msra.mxu0 0
  %115 = vmatprep.subr.bf16.mxu0 0
  %116 = vmatpush1.bf16.msra.mxu0 0
  %117 = vmatprep.subr.bf16.mxu0 0
  %118 = vmatpush1.bf16.msra.mxu0 0
  %119 = vmatprep.subr.bf16.mxu0 0
  %120 = vmatpush1.bf16.msra.mxu0 0
  %121 = vmatprep.subr.bf16.mxu0 0
  %122 = vmatpush1.bf16.msra.mxu0 0
  %123 = vmatprep.subr.bf16.mxu0 0
  %124 = vmatpush1.bf16.msra.mxu0 0
  %125 = vmatprep.subr.bf16.mxu0 0
  %126 = vmatpush1.bf16.msra.mxu0 0
  %127 = vmatprep.subr.bf16.mxu0 0
  %128 = vmatpush1.bf16.msra.mxu0 0
  %129 = vmatprep.subr.bf16.mxu0 0
  %130 = vmatpush1.bf16.msra.mxu0 0
  %131 = vmatprep.subr.bf16.mxu0 0
  %132 = vmatpush1.bf16.msra.mxu0 0
  %133 = vmatprep.subr.bf16.mxu0 0
  %134 = vmatpush1.bf16.msra.mxu0 0
  %135 = vmatprep.mubr.bf16.mxu0 0
  %136 = vmatmul.mubr.bf16.gmra.mrb[0].mxu0 %v101
  %v137 = vpop.f32.mrb[0].mxu0
  %v138 = vadd.f32 %v86, %v137
  %v139 = vpop.f32.mrb[0].mxu0
  %v140 = vpop.f32.mrb[0].mxu0
  %v141 = vadd.f32 %v86, %v140
  %v142 = vpop.f32.mrb[0].mxu0
  %143 = vdwg.mxu0
  %v144 = vpack.c.bf16 %v141, %v138
  %v146 = vunpack.c.l.b16 %v144
  %v147 = vunpack.c.h.b16 %v144
  %v148 = vpack.c.b16 %v146, %v146
  %v149 = vpack.c.b16 %v147, %v147
  %vm152 = vcmask 257024
  %153 = vst.msk [vmem:[%s6] sm:$0xf] %vm152, %v148
  %154 = vst.msk [vmem:[%s6 + $0x4] sm:$0xf] %vm152, %v149
  // Predicated region
  $region26: #{cross_attention_forward.17} parent=0 // pred_check
    _
  $region27: #{cross_attention_forward.17} parent=0 // pred_check_branch
    %156 = sbr.rel (0) target = $region29
  $region28: #{cross_attention_forward.17} parent=0 // pred_region
    _
  $region29: #{cross_attention_forward.17} parent=0 // pred_fallthru
    _
  // Predicated region
  $region30: #{cross_attention_forward.17} parent=0 // pred_check
    _
  $region31: #{cross_attention_forward.17} parent=0 // pred_check_branch
    %158 = sbr.rel (0) target = $region33
  $region32: #{cross_attention_forward.17} parent=0 // pred_region
    _
  $region33: #{cross_attention_forward.17} parent=0 // pred_fallthru
    _

// kernel: cross_attention_forward.14
$region0: #{cross_attention_forward.14}
  #allocation0 [shape = 'u32[]', space=smem, size = 0x4, offset = 0x4, fixed_abs, tag = 'smem constant byte address 0x4 - core index']
  #allocation1 [shape = 'u32[144,128]{1,0:T(1,128)}', space=vmem, size = 0x12000, scoped, tag = 'internal scratch']
  %s0 = inlined_call_operand.vmem [shape: f32[32,32], index: 0, kind: input, shape index: {}]
  %s1 = inlined_call_operand.vmem [shape: f32[32,32], index: 1, kind: input, shape index: {}]
  %s2 = inlined_call_operand.vmem [shape: f32[1,32], index: 2, kind: input, shape index: {}]
  %s3 = inlined_call_operand.vmem [shape: f32[1,32], index: 3, kind: input, shape index: {}]
  %s4 = inlined_call_operand.hbm [shape: f32[32,32], index: 4, kind: output, shape index: {0}]
  %s5 = inlined_call_operand.vmem [shape: bf16[32,32], index: 5, kind: output, shape index: {1}]
  %s6 = inlined_call_operand.vmem [shape: bf16[32,32], index: 6, kind: output, shape index: {2}]
  %7 = xla_tuple %s4, %s5, %s6
  %s8 = sld [smem:[#allocation0]]
  $region42: #{cross_attention_forward.14} parent=0
    _
  %s10 = ssub.s32 1, %s8
  %s11 = scalar_select 0, %s10, %s8
  $region1: #{cross_attention_forward.14} parent=0
    #allocation2 [shape = 'u8[16384]{0}', space=vmem, size = 0x4000, scoped, tag = 'output window, operand 0, single buffered']
    #allocation3 [shape = 's32[1]{0}', space=sflag, size = 0x4, scoped, tag = 'scoped memory for cross_attention_forward.14']
    %12 = vsyncpa [#allocation3], 0
    // Predicated region
    $region2: #{cross_attention_forward.14} parent=1 // pred_check
      _
    $region3: #{cross_attention_forward.14} parent=1 // pred_check_branch
      %14 = sbr.rel (0) target = $region5
    $region4: #{cross_attention_forward.14} parent=1 // pred_region
      _
    $region5: #{cross_attention_forward.14} parent=1 // pred_fallthru
      _
    // Predicated region
    $region6: #{cross_attention_forward.14} parent=1 // pred_check
      _
    $region7: #{cross_attention_forward.14} parent=1 // pred_check_branch
      %16 = sbr.rel (0) target = $region9
    $region8: #{cross_attention_forward.14} parent=1 // pred_region
      _
    $region9: #{cross_attention_forward.14} parent=1 // pred_fallthru
      _
    // Predicated region
    $region10: #{cross_attention_forward.14} parent=1 // pred_check
      _
    $region11: #{cross_attention_forward.14} parent=1 // pred_check_branch
      %18 = sbr.rel (0) target = $region13
    $region12: #{cross_attention_forward.14} parent=1 // pred_region
      _
    $region13: #{cross_attention_forward.14} parent=1 // pred_fallthru
      _
    // Predicated region
    $region14: #{cross_attention_forward.14} parent=1 // pred_check
      _
    $region15: #{cross_attention_forward.14} parent=1 // pred_check_branch
      %20 = sbr.rel (0) target = $region17
    $region16: #{cross_attention_forward.14} parent=1 // pred_region
      _
    $region17: #{cross_attention_forward.14} parent=1 // pred_fallthru
      _
    %v21 = vld [vmem:[%s0] sm:$0xff]
    %v22 = vld [vmem:[%s0 + $0x8] sm:$0xff]
    %v23 = vld [vmem:[%s0 + $0x10] sm:$0xff]
    %v24 = vld [vmem:[%s0 + $0x18] sm:$0xff]
    %v25 = vld [vmem:[%s2] sm:$0x1]
    %v26 = vld [vmem:[%s3] sm:$0x1]
    %vm27 = vcmask 261120
    %v28 = vsel %vm27, %v21, 0.0
    %29 = vadd.xlane.f32.xlu0 %v28
    %v30 = vpop.xlane.xlu0 %29
    %v31 = vsel %vm27, %v22, 0.0
    %32 = vadd.xlane.f32.xlu0 %v31
    %v33 = vpop.xlane.xlu0 %32
    %v34 = vsel %vm27, %v23, 0.0
    %35 = vadd.xlane.f32.xlu0 %v34
    %v36 = vpop.xlane.xlu0 %35
    %v37 = vsel %vm27, %v24, 0.0
    %38 = vadd.xlane.f32.xlu0 %v37
    %v39 = vpop.xlane.xlu0 %38
    %v40 = vrcp.pop 32.0
    %v41 = vmul.f32 %v30, %v40
    %v42 = vmul.f32 %v33, %v40
    %v43 = vmul.f32 %v36, %v40
    %v44 = vmul.f32 %v39, %v40
    %v45 = vsub.f32 %v21, %v41
    %v46 = vsub.f32 %v22, %v42
    %v47 = vsub.f32 %v23, %v43
    %v48 = vsub.f32 %v24, %v44
    %v49 = vmul.f32 %v45, %v45
    %v50 = vmul.f32 %v46, %v46
    %v51 = vmul.f32 %v47, %v47
    %v52 = vmul.f32 %v48, %v48
    %v53 = vsel %vm27, %v49, 0.0
    %54 = vadd.xlane.f32.xlu0 %v53
    %v55 = vpop.xlane.xlu0 %54
    %v56 = vsel %vm27, %v50, 0.0
    %57 = vadd.xlane.f32.xlu0 %v56
    %v58 = vpop.xlane.xlu0 %57
    %v59 = vsel %vm27, %v51, 0.0
    %60 = vadd.xlane.f32.xlu0 %v59
    %v61 = vpop.xlane.xlu0 %60
    %v62 = vsel %vm27, %v52, 0.0
    %63 = vadd.xlane.f32.xlu0 %v62
    %v64 = vpop.xlane.xlu0 %63
    %v65 = vmul.f32 %v55, %v40
    %v66 = vmul.f32 %v58, %v40
    %v67 = vmul.f32 %v61, %v40
    %v68 = vmul.f32 %v64, %v40
    %v69 = vadd.f32 %v65, 1e-05
    %v70 = vadd.f32 %v66, 1e-05
    %v71 = vadd.f32 %v67, 1e-05
    %v72 = vadd.f32 %v68, 1e-05
    %v73 = vrsqrt.pop %v69
    %v74 = vrsqrt.pop %v70
    %v75 = vrsqrt.pop %v71
    %v76 = vrsqrt.pop %v72
    %v77 = vmul.f32 %v45, %v73
    %v78 = vmul.f32 %v46, %v74
    %v79 = vmul.f32 %v47, %v75
    %v80 = vmul.f32 %v48, %v76
    %v82 = vlaneseq
    %v83 = vshrl.u32 %v82, 7
    %v84 = vsub.s32 0, %v83
    %v85 = vrot.slane %v25, %v84
    %v87 = vmul.f32 %v77, %v85
    %v88 = vmul.f32 %v78, %v85
    %v89 = vmul.f32 %v79, %v85
    %v90 = vmul.f32 %v80, %v85
    %v92 = vlaneseq
    %v93 = vshrl.u32 %v92, 7
    %v94 = vsub.s32 0, %v93
    %v95 = vrot.slane %v26, %v94
    %v97 = vadd.f32 %v87, %v95
    %v98 = vadd.f32 %v88, %v95
    %v99 = vadd.f32 %v89, %v95
    %v100 = vadd.f32 %v90, %v95
    %101 = vst.msk [vmem:[#allocation2] sm:$0xff] %vm27, %v97
    %102 = vst.msk [vmem:[#allocation2 + $0x8] sm:$0xff] %vm27, %v98
    %103 = vst.msk [vmem:[#allocation2 + $0x10] sm:$0xff] %vm27, %v99
    %104 = vst.msk [vmem:[#allocation2 + $0x18] sm:$0xff] %vm27, %v100
    %v105 = vld [vmem:[%s1] sm:$0xff]
    %v106 = vld [vmem:[%s1 + $0x8] sm:$0xff]
    %v107 = vld [vmem:[%s1 + $0x10] sm:$0xff]
    %v108 = vld [vmem:[%s1 + $0x18] sm:$0xff]
    %v109 = vadd.f32 %v97, %v105
    %v110 = vadd.f32 %v98, %v106
    %v111 = vadd.f32 %v99, %v107
    %v112 = vadd.f32 %v100, %v108
    %v113 = vpack.c.bf16 %v110, %v109
    %v114 = vpack.c.bf16 %v112, %v111
    %v117 = vunpack.c.l.b16 %v113
    %v118 = vunpack.c.h.b16 %v113
    %v119 = vunpack.c.l.b16 %v114
    %v120 = vunpack.c.h.b16 %v114
    %v121 = vpack.c.b16 %v117, %v117
    %v122 = vpack.c.b16 %v118, %v118
    %v123 = vpack.c.b16 %v119, %v119
    %v124 = vpack.c.b16 %v120, %v120
    %vm129 = vcmask 257024
    %130 = vst.msk [vmem:[%s5] sm:$0xf] %vm129, %v121
    %131 = vst.msk [vmem:[%s5 + $0x4] sm:$0xf] %vm129, %v122
    %132 = vst.msk [vmem:[%s5 + $0x8] sm:$0xf] %vm129, %v123
    %133 = vst.msk [vmem:[%s5 + $0xc] sm:$0xf] %vm129, %v124
    %v134 = vpack.c.bf16 %v98, %v97
    %v135 = vpack.c.bf16 %v100, %v99
    %v138 = vunpack.c.l.b16 %v134
    %v139 = vunpack.c.h.b16 %v134
    %v140 = vunpack.c.l.b16 %v135
    %v141 = vunpack.c.h.b16 %v135
    %v142 = vpack.c.b16 %v138, %v138
    %v143 = vpack.c.b16 %v139, %v139
    %v144 = vpack.c.b16 %v140, %v140
    %v145 = vpack.c.b16 %v141, %v141
    %150 = vst.msk [vmem:[%s6] sm:$0xf] %vm129, %v142
    %151 = vst.msk [vmem:[%s6 + $0x4] sm:$0xf] %vm129, %v143
    %152 = vst.msk [vmem:[%s6 + $0x8] sm:$0xf] %vm129, %v144
    %153 = vst.msk [vmem:[%s6 + $0xc] sm:$0xf] %vm129, %v145
    // Predicated region
    $region18: #{cross_attention_forward.14} parent=1 // pred_check
      _
    $region19: #{cross_attention_forward.14} parent=1 // pred_check_branch
      %155 = sbr.rel (0) target = $region21
    $region20: #{cross_attention_forward.14} parent=1 // pred_region
      %s157 = ssub.s32 512, 512
      %158 = vsyncadd [#allocation3], %s157
      %s159 = sshll.u32 [#allocation2], 4
      %s160 = int_to_ptr.vmem [resolvable:$true] %s159
      %165 = dma.vmem_to_hbm [thread:$0]  %s160, 512, %s4, [#allocation3], 128, 128, 8
    $region21: #{cross_attention_forward.14} parent=1 // pred_fallthru
      _
    // Predicated region
    $region22: #{cross_attention_forward.14} parent=1 // pred_check
      _
    $region23: #{cross_attention_forward.14} parent=1 // pred_check_branch
      %167 = sbr.rel (0) target = $region25
    $region24: #{cross_attention_forward.14} parent=1 // pred_region
      _
    $region25: #{cross_attention_forward.14} parent=1 // pred_fallthru
      _
    // Predicated region
    $region26: #{cross_attention_forward.14} parent=1 // pred_check
      _
    $region27: #{cross_attention_forward.14} parent=1 // pred_check_branch
      %169 = sbr.rel (0) target = $region29
    $region28: #{cross_attention_forward.14} parent=1 // pred_region
      _
    $region29: #{cross_attention_forward.14} parent=1 // pred_fallthru
      _
    // Predicated region
    $region30: #{cross_attention_forward.14} parent=1 // pred_check
      _
    $region31: #{cross_attention_forward.14} parent=1 // pred_check_branch
      %171 = sbr.rel (0) target = $region33
    $region32: #{cross_attention_forward.14} parent=1 // pred_region
      %172 = dma.done [#allocation3], 512
    $region33: #{cross_attention_forward.14} parent=1 // pred_fallthru
      _
    // Predicated region
    $region34: #{cross_attention_forward.14} parent=1 // pred_check
      _
    $region35: #{cross_attention_forward.14} parent=1 // pred_check_branch
      %174 = sbr.rel (0) target = $region37
    $region36: #{cross_attention_forward.14} parent=1 // pred_region
      _
    $region37: #{cross_attention_forward.14} parent=1 // pred_fallthru
      _
    // Predicated region
    $region38: #{cross_attention_forward.14} parent=1 // pred_check
      _
    $region39: #{cross_attention_forward.14} parent=1 // pred_check_branch
      %176 = sbr.rel (0) target = $region41
    $region40: #{cross_attention_forward.14} parent=1 // pred_region
      _
    $region41: #{cross_attention_forward.14} parent=1 // pred_fallthru
      _
    %177 = vsyncpa [#allocation3], 1

// kernel: cross_attention_forward.15
$region0: #{cross_attention_forward.15}
  #allocation0 [shape = 'u32[]', space=smem, size = 0x4, offset = 0x4, fixed_abs, tag = 'smem constant byte address 0x4 - core index']
  #allocation1 [shape = 'u32[144,128]{1,0:T(1,128)}', space=vmem, size = 0x12000, scoped, tag = 'internal scratch']
  %s0 = inlined_call_operand.vmem [shape: f32[16,32], index: 0, kind: input, shape index: {}]
  %s1 = inlined_call_operand.vmem [shape: f32[16,32], index: 1, kind: input, shape index: {}]
  %s2 = inlined_call_operand.vmem [shape: f32[1,32], index: 2, kind: input, shape index: {}]
  %s3 = inlined_call_operand.vmem [shape: f32[1,32], index: 3, kind: input, shape index: {}]
  %s4 = inlined_call_operand.vmem [shape: bf16[32,32], index: 4, kind: input, shape index: {}]
  %s5 = inlined_call_operand.vmem [shape: f32[1,32], index: 5, kind: input, shape index: {}]
  %s6 = inlined_call_operand.vmem [shape: bf16[32,32], index: 6, kind: input, shape index: {}]
  %s7 = inlined_call_operand.vmem [shape: f32[1,32], index: 7, kind: input, shape index: {}]
  %s8 = inlined_call_operand.vmem [shape: bf16[32,32], index: 8, kind: input, shape index: {}]
  %s9 = inlined_call_operand.vmem [shape: f32[1,32], index: 9, kind: input, shape index: {}]
  %s10 = inlined_call_operand.vmem [shape: bf16[16,32], index: 10, kind: output, shape index: {0}]
  %s11 = inlined_call_operand.vmem [shape: bf16[16,32], index: 11, kind: output, shape index: {1}]
  %s12 = inlined_call_operand.vmem [shape: bf16[16,32], index: 12, kind: output, shape index: {2}]
  %13 = xla_tuple %s10, %s11, %s12
  %s14 = sld [smem:[#allocation0]]
  $region66: #{cross_attention_forward.15} parent=0
    _
  %s16 = ssub.s32 1, %s14
  %s17 = scalar_select 0, %s16, %s14
  // Predicated region
  $region2: #{cross_attention_forward.15} parent=0 // pred_check
    _
  $region3: #{cross_attention_forward.15} parent=0 // pred_check_branch
    %19 = sbr.rel (0) target = $region5
  $region4: #{cross_attention_forward.15} parent=0 // pred_region
    _
  $region5: #{cross_attention_forward.15} parent=0 // pred_fallthru
    _
  // Predicated region
  $region6: #{cross_attention_forward.15} parent=0 // pred_check
    _
  $region7: #{cross_attention_forward.15} parent=0 // pred_check_branch
    %21 = sbr.rel (0) target = $region9
  $region8: #{cross_attention_forward.15} parent=0 // pred_region
    _
  $region9: #{cross_attention_forward.15} parent=0 // pred_fallthru
    _
  // Predicated region
  $region10: #{cross_attention_forward.15} parent=0 // pred_check
    _
  $region11: #{cross_attention_forward.15} parent=0 // pred_check_branch
    %23 = sbr.rel (0) target = $region13
  $region12: #{cross_attention_forward.15} parent=0 // pred_region
    _
  $region13: #{cross_attention_forward.15} parent=0 // pred_fallthru
    _
  // Predicated region
  $region14: #{cross_attention_forward.15} parent=0 // pred_check
    _
  $region15: #{cross_attention_forward.15} parent=0 // pred_check_branch
    %25 = sbr.rel (0) target = $region17
  $region16: #{cross_attention_forward.15} parent=0 // pred_region
    _
  $region17: #{cross_attention_forward.15} parent=0 // pred_fallthru
    _
  // Predicated region
  $region18: #{cross_attention_forward.15} parent=0 // pred_check
    _
  $region19: #{cross_attention_forward.15} parent=0 // pred_check_branch
    %27 = sbr.rel (0) target = $region21
  $region20: #{cross_attention_forward.15} parent=0 // pred_region
    _
  $region21: #{cross_attention_forward.15} parent=0 // pred_fallthru
    _
  // Predicated region
  $region22: #{cross_attention_forward.15} parent=0 // pred_check
    _
  $region23: #{cross_attention_forward.15} parent=0 // pred_check_branch
    %29 = sbr.rel (0) target = $region25
  $region24: #{cross_attention_forward.15} parent=0 // pred_region
    _
  $region25: #{cross_attention_forward.15} parent=0 // pred_fallthru
    _
  // Predicated region
  $region26: #{cross_attention_forward.15} parent=0 // pred_check
    _
  $region27: #{cross_attention_forward.15} parent=0 // pred_check_branch
    %31 = sbr.rel (0) target = $region29
  $region28: #{cross_attention_forward.15} parent=0 // pred_region
    _
  $region29: #{cross_attention_forward.15} parent=0 // pred_fallthru
    _
  // Predicated region
  $region30: #{cross_attention_forward.15} parent=0 // pred_check
    _
  $region31: #{cross_attention_forward.15} parent=0 // pred_check_branch
    %33 = sbr.rel (0) target = $region33
  $region32: #{cross_attention_forward.15} parent=0 // pred_region
    _
  $region33: #{cross_attention_forward.15} parent=0 // pred_fallthru
    _
  // Predicated region
  $region34: #{cross_attention_forward.15} parent=0 // pred_check
    _
  $region35: #{cross_attention_forward.15} parent=0 // pred_check_branch
    %35 = sbr.rel (0) target = $region37
  $region36: #{cross_attention_forward.15} parent=0 // pred_region
    _
  $region37: #{cross_attention_forward.15} parent=0 // pred_fallthru
    _
  // Predicated region
  $region38: #{cross_attention_forward.15} parent=0 // pred_check
    _
  $region39: #{cross_attention_forward.15} parent=0 // pred_check_branch
    %37 = sbr.rel (0) target = $region41
  $region40: #{cross_attention_forward.15} parent=0 // pred_region
    _
  $region41: #{cross_attention_forward.15} parent=0 // pred_fallthru
    _
  %v39 = vld [vmem:[%s0] sm:$0xff]
  %v40 = vld [vmem:[%s0 + $0x8] sm:$0xff]
  %v41 = vld [vmem:[%s2] sm:$0x1]
  %v42 = vld [vmem:[%s3] sm:$0x1]
  %vm43 = vcmask 261120
  %v44 = vsel %vm43, %v39, 0.0
  %45 = vadd.xlane.f32.xlu0 %v44
  %v46 = vpop.xlane.xlu0 %45
  %v47 = vsel %vm43, %v40, 0.0
  %48 = vadd.xlane.f32.xlu0 %v47
  %v49 = vpop.xlane.xlu0 %48
  %v50 = vrcp.pop 32.0
  %v51 = vmul.f32 %v46, %v50
  %v52 = vmul.f32 %v49, %v50
  %v53 = vsub.f32 %v39, %v51
  %v54 = vsub.f32 %v40, %v52
  %v55 = vmul.f32 %v53, %v53
  %v56 = vmul.f32 %v54, %v54
  %v57 = vsel %vm43, %v55, 0.0
  %58 = vadd.xlane.f32.xlu0 %v57
  %v59 = vpop.xlane.xlu0 %58
  %v60 = vsel %vm43, %v56, 0.0
  %61 = vadd.xlane.f32.xlu0 %v60
  %v62 = vpop.xlane.xlu0 %61
  %v63 = vmul.f32 %v59, %v50
  %v64 = vmul.f32 %v62, %v50
  %v65 = vadd.f32 %v63, 1e-05
  %v66 = vadd.f32 %v64, 1e-05
  %v67 = vrsqrt.pop %v65
  %v68 = vrsqrt.pop %v66
  %v69 = vmul.f32 %v53, %v67
  %v70 = vmul.f32 %v54, %v68
  %v72 = vlaneseq
  %v73 = vshrl.u32 %v72, 7
  %v74 = vsub.s32 0, %v73
  %v75 = vrot.slane %v41, %v74
  %v77 = vmul.f32 %v69, %v75
  %v78 = vmul.f32 %v70, %v75
  %v80 = vlaneseq
  %v81 = vshrl.u32 %v80, 7
  %v82 = vsub.s32 0, %v81
  %v83 = vrot.slane %v42, %v82
  %v85 = vadd.f32 %v77, %v83
  %v86 = vadd.f32 %v78, %v83
  %v87 = vld [vmem:[%s1] sm:$0xff]
  %v88 = vld [vmem:[%s1 + $0x8] sm:$0xff]
  %v89 = vadd.f32 %v85, %v87
  %v90 = vadd.f32 %v86, %v88
  %v91 = vpack.c.bf16 %v90, %v89
  %v92 = vpack.c.bf16 %v86, %v85
  %v93 = vld [vmem:[%s4] sm:$0xf]
  %v94 = vld [vmem:[%s4 + $0x4] sm:$0xf]
  %v95 = vld [vmem:[%s4 + $0x8] sm:$0xf]
  %v96 = vld [vmem:[%s4 + $0xc] sm:$0xf]
  %v97 = vld [vmem:[%s5] sm:$0x1]
  %v99 = vlaneseq
  %v100 = vshrl.u32 %v99, 7
  %v101 = vsub.s32 0, %v100
  %v102 = vrot.slane %v97, %v101
  %v108 = vunpack.c.l.b16 %v93
  %v109 = vunpack.c.l.b16 %v94
  %v110 = vunpack.c.l.b16 %v95
  %v111 = vunpack.c.l.b16 %v96
  %v112 = vpack.c.b16 %v109, %v108
  %v113 = vpack.c.b16 %v111, %v110
  %v117 = vsel %vm43, %v91, 0
  %119 = vmatprep.subr.bf16.mxu0 0
  %120 = vmatpush1.bf16.msra.mxu0 %v112
  %121 = vmatprep.subr.bf16.mxu0 0
  %122 = vmatpush1.bf16.msra.mxu0 %v113
  %123 = vmatprep.subr.bf16.mxu0 0
  %124 = vmatpush1.bf16.msra.mxu0 0
  %125 = vmatprep.subr.bf16.mxu0 0
  %126 = vmatpush1.bf16.msra.mxu0 0
  %127 = vmatprep.subr.bf16.mxu0 0
  %128 = vmatpush1.bf16.msra.mxu0 0
  %129 = vmatprep.subr.bf16.mxu0 0
  %130 = vmatpush1.bf16.msra.mxu0 0
  %131 = vmatprep.subr.bf16.mxu0 0
  %132 = vmatpush1.bf16.msra.mxu0 0
  %133 = vmatprep.subr.bf16.mxu0 0
  %134 = vmatpush1.bf16.msra.mxu0 0
  %135 = vmatprep.subr.bf16.mxu0 0
  %136 = vmatpush1.bf16.msra.mxu0 0
  %137 = vmatprep.subr.bf16.mxu0 0
  %138 = vmatpush1.bf16.msra.mxu0 0
  %139 = vmatprep.subr.bf16.mxu0 0
  %140 = vmatpush1.bf16.msra.mxu0 0
  %141 = vmatprep.subr.bf16.mxu0 0
  %142 = vmatpush1.bf16.msra.mxu0 0
  %143 = vmatprep.subr.bf16.mxu0 0
  %144 = vmatpush1.bf16.msra.mxu0 0
  %145 = vmatprep.subr.bf16.mxu0 0
  %146 = vmatpush1.bf16.msra.mxu0 0
  %147 = vmatprep.subr.bf16.mxu0 0
  %148 = vmatpush1.bf16.msra.mxu0 0
  %149 = vmatprep.subr.bf16.mxu0 0
  %150 = vmatpush1.bf16.msra.mxu0 0
  %151 = vmatprep.mubr.bf16.mxu0 0
  %152 = vmatmul.mubr.bf16.gmra.mrb[0].mxu0 %v117
  %v153 = vpop.f32.mrb[0].mxu0
  %v154 = vadd.f32 %v102, %v153
  %v155 = vpop.f32.mrb[0].mxu0
  %v156 = vpop.f32.mrb[0].mxu0
  %v157 = vadd.f32 %v102, %v156
  %v158 = vpop.f32.mrb[0].mxu0
  %159 = vdwg.mxu0
  %v160 = vpack.c.bf16 %v157, %v154
  %v162 = vunpack.c.l.b16 %v160
  %v163 = vunpack.c.h.b16 %v160
  %v164 = vpack.c.b16 %v162, %v162
  %v165 = vpack.c.b16 %v163, %v163
  %vm168 = vcmask 257024
  %169 = vst.msk [vmem:[%s10] sm:$0xf] %vm168, %v164
  %170 = vst.msk [vmem:[%s10 + $0x4] sm:$0xf] %vm168, %v165
  %v171 = vld [vmem:[%s6] sm:$0xf]
  %v172 = vld [vmem:[%s6 + $0x4] sm:$0xf]
  %v173 = vld [vmem:[%s6 + $0x8] sm:$0xf]
  %v174 = vld [vmem:[%s6 + $0xc] sm:$0xf]
  %v175 = vld [vmem:[%s7] sm:$0x1]
  %v177 = vlaneseq
  %v178 = vshrl.u32 %v177, 7
  %v179 = vsub.s32 0, %v178
  %v180 = vrot.slane %v175, %v179
  %v186 = vunpack.c.l.b16 %v171
  %v187 = vunpack.c.l.b16 %v172
  %v188 = vunpack.c.l.b16 %v173
  %v189 = vunpack.c.l.b16 %v174
  %v190 = vpack.c.b16 %v187, %v186
  %v191 = vpack.c.b16 %v189, %v188
  %194 = vmatprep.subr.bf16.mxu0 0
  %195 = vmatpush1.bf16.msra.mxu0 %v190
  %196 = vmatprep.subr.bf16.mxu0 0
  %197 = vmatpush1.bf16.msra.mxu0 %v191
  %198 = vmatprep.subr.bf16.mxu0 0
  %199 = vmatpush1.bf16.msra.mxu0 0
  %200 = vmatprep.subr.bf16.mxu0 0
  %201 = vmatpush1.bf16.msra.mxu0 0
  %202 = vmatprep.subr.bf16.mxu0 0
  %203 = vmatpush1.bf16.msra.mxu0 0
  %204 = vmatprep.subr.bf16.mxu0 0
  %205 = vmatpush1.bf16.msra.mxu0 0
  %206 = vmatprep.subr.bf16.mxu0 0
  %207 = vmatpush1.bf16.msra.mxu0 0
  %208 = vmatprep.subr.bf16.mxu0 0
  %209 = vmatpush1.bf16.msra.mxu0 0
  %210 = vmatprep.subr.bf16.mxu0 0
  %211 = vmatpush1.bf16.msra.mxu0 0
  %212 = vmatprep.subr.bf16.mxu0 0
  %213 = vmatpush1.bf16.msra.mxu0 0
  %214 = vmatprep.subr.bf16.mxu0 0
  %215 = vmatpush1.bf16.msra.mxu0 0
  %216 = vmatprep.subr.bf16.mxu0 0
  %217 = vmatpush1.bf16.msra.mxu0 0
  %218 = vmatprep.subr.bf16.mxu0 0
  %219 = vmatpush1.bf16.msra.mxu0 0
  %220 = vmatprep.subr.bf16.mxu0 0
  %221 = vmatpush1.bf16.msra.mxu0 0
  %222 = vmatprep.subr.bf16.mxu0 0
  %223 = vmatpush1.bf16.msra.mxu0 0
  %224 = vmatprep.subr.bf16.mxu0 0
  %225 = vmatpush1.bf16.msra.mxu0 0
  %226 = vmatprep.mubr.bf16.mxu0 0
  %227 = vmatmul.mubr.bf16.gmra.mrb[0].mxu0 %v117
  %v228 = vpop.f32.mrb[0].mxu0
  %v229 = vadd.f32 %v180, %v228
  %v230 = vpop.f32.mrb[0].mxu0
  %v231 = vpop.f32.mrb[0].mxu0
  %v232 = vadd.f32 %v180, %v231
  %v233 = vpop.f32.mrb[0].mxu0
  %234 = vdwg.mxu0
  %v235 = vpack.c.bf16 %v232, %v229
  %v237 = vunpack.c.l.b16 %v235
  %v238 = vunpack.c.h.b16 %v235
  %v239 = vpack.c.b16 %v237, %v237
  %v240 = vpack.c.b16 %v238, %v238
  %243 = vst.msk [vmem:[%s11] sm:$0xf] %vm168, %v239
  %244 = vst.msk [vmem:[%s11 + $0x4] sm:$0xf] %vm168, %v240
  %v245 = vld [vmem:[%s8] sm:$0xf]
  %v246 = vld [vmem:[%s8 + $0x4] sm:$0xf]
  %v247 = vld [vmem:[%s8 + $0x8] sm:$0xf]
  %v248 = vld [vmem:[%s8 + $0xc] sm:$0xf]
  %v249 = vld [vmem:[%s9] sm:$0x1]
  %v251 = vlaneseq
  %v252 = vshrl.u32 %v251, 7
  %v253 = vsub.s32 0, %v252
  %v254 = vrot.slane %v249, %v253
  %v260 = vunpack.c.l.b16 %v245
  %v261 = vunpack.c.l.b16 %v246
  %v262 = vunpack.c.l.b16 %v247
  %v263 = vunpack.c.l.b16 %v248
  %v264 = vpack.c.b16 %v261, %v260
  %v265 = vpack.c.b16 %v263, %v262
  %v269 = vsel %vm43, %v92, 0
  %271 = vmatprep.subr.bf16.mxu0 0
  %272 = vmatpush1.bf16.msra.mxu0 %v264
  %273 = vmatprep.subr.bf16.mxu0 0
  %274 = vmatpush1.bf16.msra.mxu0 %v265
  %275 = vmatprep.subr.bf16.mxu0 0
  %276 = vmatpush1.bf16.msra.mxu0 0
  %277 = vmatprep.subr.bf16.mxu0 0
  %278 = vmatpush1.bf16.msra.mxu0 0
  %279 = vmatprep.subr.bf16.mxu0 0
  %280 = vmatpush1.bf16.msra.mxu0 0
  %281 = vmatprep.subr.bf16.mxu0 0
  %282 = vmatpush1.bf16.msra.mxu0 0
  %283 = vmatprep.subr.bf16.mxu0 0
  %284 = vmatpush1.bf16.msra.mxu0 0
  %285 = vmatprep.subr.bf16.mxu0 0
  %286 = vmatpush1.bf16.msra.mxu0 0
  %287 = vmatprep.subr.bf16.mxu0 0
  %288 = vmatpush1.bf16.msra.mxu0 0
  %289 = vmatprep.subr.bf16.mxu0 0
  %290 = vmatpush1.bf16.msra.mxu0 0
  %291 = vmatprep.subr.bf16.mxu0 0
  %292 = vmatpush1.bf16.msra.mxu0 0
  %293 = vmatprep.subr.bf16.mxu0 0
  %294 = vmatpush1.bf16.msra.mxu0 0
  %295 = vmatprep.subr.bf16.mxu0 0
  %296 = vmatpush1.bf16.msra.mxu0 0
  %297 = vmatprep.subr.bf16.mxu0 0
  %298 = vmatpush1.bf16.msra.mxu0 0
  %299 = vmatprep.subr.bf16.mxu0 0
  %300 = vmatpush1.bf16.msra.mxu0 0
  %301 = vmatprep.subr.bf16.mxu0 0
  %302 = vmatpush1.bf16.msra.mxu0 0
  %303 = vmatprep.mubr.bf16.mxu0 0
  %304 = vmatmul.mubr.bf16.gmra.mrb[0].mxu0 %v269
  %v305 = vpop.f32.mrb[0].mxu0
  %v306 = vadd.f32 %v254, %v305
  %v307 = vpop.f32.mrb[0].mxu0
  %v308 = vpop.f32.mrb[0].mxu0
  %v309 = vadd.f32 %v254, %v308
  %v310 = vpop.f32.mrb[0].mxu0
  %311 = vdwg.mxu0
  %v312 = vpack.c.bf16 %v309, %v306
  %v314 = vunpack.c.l.b16 %v312
  %v315 = vunpack.c.h.b16 %v312
  %v316 = vpack.c.b16 %v314, %v314
  %v317 = vpack.c.b16 %v315, %v315
  %320 = vst.msk [vmem:[%s12] sm:$0xf] %vm168, %v316
  %321 = vst.msk [vmem:[%s12 + $0x4] sm:$0xf] %vm168, %v317
  // Predicated region
  $region42: #{cross_attention_forward.15} parent=0 // pred_check
    _
  $region43: #{cross_attention_forward.15} parent=0 // pred_check_branch
    %323 = sbr.rel (0) target = $region45
  $region44: #{cross_attention_forward.15} parent=0 // pred_region
    _
  $region45: #{cross_attention_forward.15} parent=0 // pred_fallthru
    _
  // Predicated region
  $region46: #{cross_attention_forward.15} parent=0 // pred_check
    _
  $region47: #{cross_attention_forward.15} parent=0 // pred_check_branch
    %325 = sbr.rel (0) target = $region49
  $region48: #{cross_attention_forward.15} parent=0 // pred_region
    _
  $region49: #{cross_attention_forward.15} parent=0 // pred_fallthru
    _
  // Predicated region
  $region50: #{cross_attention_forward.15} parent=0 // pred_check
    _
  $region51: #{cross_attention_forward.15} parent=0 // pred_check_branch
    %327 = sbr.rel (0) target = $region53
  $region52: #{cross_attention_forward.15} parent=0 // pred_region
    _
  $region53: #{cross_attention_forward.15} parent=0 // pred_fallthru
    _
  // Predicated region
  $region54: #{cross_attention_forward.15} parent=0 // pred_check
    _
  $region55: #{cross_attention_forward.15} parent=0 // pred_check_branch
    %329 = sbr.rel (0) target = $region57
  $region56: #{cross_attention_forward.15} parent=0 // pred_region
    _
  $region57: #{cross_attention_forward.15} parent=0 // pred_fallthru
    _
  // Predicated region
  $region58: #{cross_attention_forward.15} parent=0 // pred_check
    _
  $region59: #{cross_attention_forward.15} parent=0 // pred_check_branch
    %331 = sbr.rel (0) target = $region61
  $region60: #{cross_attention_forward.15} parent=0 // pred_region
    _
  $region61: #{cross_attention_forward.15} parent=0 // pred_fallthru
    _
  // Predicated region
  $region62: #{cross_attention_forward.15} parent=0 // pred_check
    _
  $region63: #{cross_attention_forward.15} parent=0 // pred_check_branch
    %333 = sbr.rel (0) target = $region65
  $region64: #{cross_attention_forward.15} parent=0 // pred_region
    _
  $region65: #{cross_attention_forward.15} parent=0 // pred_fallthru
    _

// kernel: cross_attention_forward.16
$region0: #{cross_attention_forward.16}
  #allocation0 [shape = 'u32[]', space=smem, size = 0x4, offset = 0x4, fixed_abs, tag = 'smem constant byte address 0x4 - core index']
  #allocation1 [shape = 'u32[144,128]{1,0:T(1,128)}', space=vmem, size = 0x12000, scoped, tag = 'internal scratch']
  #allocation2 [shape = 'bf16[8,32]{1,0:T(8,128)(2,1)}', space=vmem, size = 0x800, scoped, tag = 'scratch operand']
  %s0 = inlined_call_operand.vmem [shape: bf16[2,8,32], index: 0, kind: input, shape index: {}]
  %s1 = inlined_call_operand.vmem [shape: bf16[2,8,32], index: 1, kind: input, shape index: {}]
  %s2 = inlined_call_operand.vmem [shape: bf16[2,8,32], index: 2, kind: input, shape index: {}]
  %s3 = inlined_call_operand.vmem [shape: f32[2,8,32], index: 3, kind: input, shape index: {}]
  %s4 = inlined_call_operand.vmem [shape: bf16[32,32], index: 4, kind: input, shape index: {}]
  %s5 = inlined_call_operand.vmem [shape: f32[1,32], index: 5, kind: input, shape index: {}]
  %s6 = inlined_call_operand.vmem [shape: f32[2,8,32], index: 6, kind: output, shape index: {}]
  %s7 = sld [smem:[#allocation0]]
  $region57: #{cross_attention_forward.16} parent=0
    _
  %s9 = ssub.s32 1, %s7
  %s10 = scalar_select 0, %s9, %s7
  loop: start=0, step=1, limit=4
  $region2: #{cross_attention_forward.16} parent=0 // loop_pre_header
    _
  $region3: #{cross_attention_forward.16} parent=0 // loop_header
    %s12 = sphi 0, %s16
    %p13 = scmp.ge.s32.totalorder %s12, 4
    %s19 = sphi 0, %s31
    %s20 = sphi 0, %s27
    %s21 = sphi 0, %s19
    %s22 = sphi 0, %s20
    %s23 = sphi 0, %s21
    %s24 = sphi 0, %s22
    %s36 = sphi 0, %s38
    %s39 = sphi 0, %s36
    %s40 = sphi 0, %s39
    %s56 = sphi 0, %s40
    %s62 = sphi 0, %s64
    %s65 = sphi 0, %s62
    %s66 = sphi 0, %s65
    %s82 = sphi 0, %s66
    %s88 = sphi 0, %s90
    %s91 = sphi 0, %s88
    %s92 = sphi 0, %s91
    %s108 = sphi 0, %s92
    %s116 = sphi 0, %s118
    %s119 = sphi 0, %s116
    %s120 = sphi 0, %s119
    %s136 = sphi 0, %s120
    %s140 = sphi 0, %s140
    %s142 = sphi 0, %s140
    %s143 = sphi 0, %s142
    %s157 = sphi 0, %s143
    %s161 = sphi 0, %s161
    %s163 = sphi 0, %s161
    %s164 = sphi 0, %s163
    %s178 = sphi 0, %s164
    %s186 = sphi 0, %s188
    %s189 = sphi 0, %s186
    %s190 = sphi 0, %s189
    %s206 = sphi 0, %s190
  $region4: #{cross_attention_forward.16} parent=0 // loop_header_branch
    %15 = sbr.rel (%p13) target = $region8
  $region5: #{cross_attention_forward.16} parent=0 // loop_body
    %s17 = ssub.s32 %s12, 1
    %s18 = ssub.s32 %s12, 2
    %s25 = sadd.s32 1, %s20
    %p26 = scmp.ge.s32.totalorder %s25, 1
    %s27 = scalar_select %p26, 0, %s25
    %s28 = sadd.s32 1, %s19
    %s29 = scalar_select %p26, %s28, %s19
    %p30 = scmp.ge.s32.totalorder %s29, 2
    %s31 = scalar_select %p30, 0, %s29
    %s32 = ssub.s32 %s19, %s31
    %s33 = ssub.s32 %s20, %s27
    %s34 = sor.u32 %s32, %s33
    %p35 = scmp.eq.s32.totalorder %s34, 0
    %s37 = sadd.s32 %s36, 1
    %s38 = scalar_select %p35, %s36, %s37
    %p41 = pneg %p35
    %p42 = scmp.eq.s32.totalorder %s12, 1
    %p43 = por %p41, %p42
    %p44 = scmp.ne.s32.totalorder %s36, %s39
    %p45 = scmp.eq.s32.totalorder %s12, 0
    %p46 = por %p44, %p45
    %p47 = scmp.ne.s32.totalorder %s36, %s39
    %p48 = scmp.eq.s32.totalorder %s17, 1
    %p49 = por %p47, %p48
    %p50 = scmp.ne.s32.totalorder %s39, %s40
    %p51 = scmp.eq.s32.totalorder %s17, 0
    %p52 = por %p50, %p51
    %p53 = scmp.ne.s32.totalorder %s39, %s40
    %p54 = scmp.eq.s32.totalorder %s18, 1
    %p55 = por %p53, %p54
    %p57 = scmp.ne.s32.totalorder %s40, %s56
    %p58 = scmp.eq.s32.totalorder %s18, 0
    %p59 = por %p57, %p58
    %s60 = ssub.s32 %s19, %s31
    %p61 = scmp.eq.s32.totalorder %s60, 0
    %s63 = sadd.s32 %s62, 1
    %s64 = scalar_select %p61, %s62, %s63
    %p67 = pneg %p61
    %p68 = scmp.eq.s32.totalorder %s12, 1
    %p69 = por %p67, %p68
    %p70 = scmp.ne.s32.totalorder %s62, %s65
    %p71 = scmp.eq.s32.totalorder %s12, 0
    %p72 = por %p70, %p71
    %p73 = scmp.ne.s32.totalorder %s62, %s65
    %p74 = scmp.eq.s32.totalorder %s17, 1
    %p75 = por %p73, %p74
    %p76 = scmp.ne.s32.totalorder %s65, %s66
    %p77 = scmp.eq.s32.totalorder %s17, 0
    %p78 = por %p76, %p77
    %p79 = scmp.ne.s32.totalorder %s65, %s66
    %p80 = scmp.eq.s32.totalorder %s18, 1
    %p81 = por %p79, %p80
    %p83 = scmp.ne.s32.totalorder %s66, %s82
    %p84 = scmp.eq.s32.totalorder %s18, 0
    %p85 = por %p83, %p84
    %s86 = ssub.s32 %s19, %s31
    %p87 = scmp.eq.s32.totalorder %s86, 0
    %s89 = sadd.s32 %s88, 1
    %s90 = scalar_select %p87, %s88, %s89
    %p93 = pneg %p87
    %p94 = scmp.eq.s32.totalorder %s12, 1
    %p95 = por %p93, %p94
    %p96 = scmp.ne.s32.totalorder %s88, %s91
    %p97 = scmp.eq.s32.totalorder %s12, 0
    %p98 = por %p96, %p97
    %p99 = scmp.ne.s32.totalorder %s88, %s91
    %p100 = scmp.eq.s32.totalorder %s17, 1
    %p101 = por %p99, %p100
    %p102 = scmp.ne.s32.totalorder %s91, %s92
    %p103 = scmp.eq.s32.totalorder %s17, 0
    %p104 = por %p102, %p103
    %p105 = scmp.ne.s32.totalorder %s91, %s92
    %p106 = scmp.eq.s32.totalorder %s18, 1
    %p107 = por %p105, %p106
    %p109 = scmp.ne.s32.totalorder %s92, %s108
    %p110 = scmp.eq.s32.totalorder %s18, 0
    %p111 = por %p109, %p110
    %s112 = ssub.s32 %s19, %s31
    %s113 = ssub.s32 %s20, %s27
    %s114 = sor.u32 %s112, %s113
    %p115 = scmp.eq.s32.totalorder %s114, 0
    %s117 = sadd.s32 %s116, 1
    %s118 = scalar_select %p115, %s116, %s117
    %p121 = pneg %p115
    %p122 = scmp.eq.s32.totalorder %s12, 1
    %p123 = por %p121, %p122
    %p124 = scmp.ne.s32.totalorder %s116, %s119
    %p125 = scmp.eq.s32.totalorder %s12, 0
    %p126 = por %p124, %p125
    %p127 = scmp.ne.s32.totalorder %s116, %s119
    %p128 = scmp.eq.s32.totalorder %s17, 1
    %p129 = por %p127, %p128
    %p130 = scmp.ne.s32.totalorder %s119, %s120
    %p131 = scmp.eq.s32.totalorder %s17, 0
    %p132 = por %p130, %p131
    %p133 = scmp.ne.s32.totalorder %s119, %s120
    %p134 = scmp.eq.s32.totalorder %s18, 1
    %p135 = por %p133, %p134
    %p137 = scmp.ne.s32.totalorder %s120, %s136
    %p138 = scmp.eq.s32.totalorder %s18, 0
    %p139 = por %p137, %p138
    %s141 = sadd.s32 %s140, 1
    %p144 = scmp.eq.s32.totalorder %s12, 1
    %p145 = scmp.ne.s32.totalorder %s140, %s142
    %p146 = scmp.eq.s32.totalorder %s12, 0
    %p147 = por %p145, %p146
    %p148 = scmp.ne.s32.totalorder %s140, %s142
    %p149 = scmp.eq.s32.totalorder %s17, 1
    %p150 = por %p148, %p149
    %p151 = scmp.ne.s32.totalorder %s142, %s143
    %p152 = scmp.eq.s32.totalorder %s17, 0
    %p153 = por %p151, %p152
    %p154 = scmp.ne.s32.totalorder %s142, %s143
    %p155 = scmp.eq.s32.totalorder %s18, 1
    %p156 = por %p154, %p155
    %p158 = scmp.ne.s32.totalorder %s143, %s157
    %p159 = scmp.eq.s32.totalorder %s18, 0
    %p160 = por %p158, %p159
    %s162 = sadd.s32 %s161, 1
    %p165 = scmp.eq.s32.totalorder %s12, 1
    %p166 = scmp.ne.s32.totalorder %s161, %s163
    %p167 = scmp.eq.s32.totalorder %s12, 0
    %p168 = por %p166, %p167
    %p169 = scmp.ne.s32.totalorder %s161, %s163
    %p170 = scmp.eq.s32.totalorder %s17, 1
    %p171 = por %p169, %p170
    %p172 = scmp.ne.s32.totalorder %s163, %s164
    %p173 = scmp.eq.s32.totalorder %s17, 0
    %p174 = por %p172, %p173
    %p175 = scmp.ne.s32.totalorder %s163, %s164
    %p176 = scmp.eq.s32.totalorder %s18, 1
    %p177 = por %p175, %p176
    %p179 = scmp.ne.s32.totalorder %s164, %s178
    %p180 = scmp.eq.s32.totalorder %s18, 0
    %p181 = por %p179, %p180
    %s182 = ssub.s32 %s19, %s31
    %s183 = ssub.s32 %s20, %s27
    %s184 = sor.u32 %s182, %s183
    %p185 = scmp.eq.s32.totalorder %s184, 0
    %s187 = sadd.s32 %s186, 1
    %s188 = scalar_select %p185, %s186, %s187
    %p191 = pneg %p185
    %p192 = scmp.eq.s32.totalorder %s12, 1
    %p193 = por %p191, %p192
    %p194 = scmp.ne.s32.totalorder %s186, %s189
    %p195 = scmp.eq.s32.totalorder %s12, 0
    %p196 = por %p194, %p195
    %p197 = scmp.ne.s32.totalorder %s186, %s189
    %p198 = scmp.eq.s32.totalorder %s17, 1
    %p199 = por %p197, %p198
    %p200 = scmp.ne.s32.totalorder %s189, %s190
    %p201 = scmp.eq.s32.totalorder %s17, 0
    %p202 = por %p200, %p201
    %p203 = scmp.ne.s32.totalorder %s189, %s190
    %p204 = scmp.eq.s32.totalorder %s18, 1
    %p205 = por %p203, %p204
    %p207 = scmp.ne.s32.totalorder %s190, %s206
    %p208 = scmp.eq.s32.totalorder %s18, 0
    %p209 = por %p207, %p208
    %p210 = scmp.le.s32.totalorder 1, %s12
    %p211 = scmp.lt.s32.totalorder %s12, 3
    %p212 = pnand %p210, %p211
    %p213 = pneg %p212
    // Predicated region
    $region9: #{cross_attention_forward.16} parent=5 // pred_check
      _
    $region10: #{cross_attention_forward.16} parent=5 // pred_check_branch
      %215 = sbr.rel (%p212) target = $region12
    $region11: #{cross_attention_forward.16} parent=5 // pred_region
      %s216 = ssub.s32 %s12, 1
      // Predicated region
      $region13: #{cross_attention_forward.16} parent=11 // pred_check
        %p217 = pneg %p153
      $region14: #{cross_attention_forward.16} parent=11 // pred_check_branch
        %219 = sbr.rel (%p217) target = $region16
      $region15: #{cross_attention_forward.16} parent=11 // pred_region
        _
      $region16: #{cross_attention_forward.16} parent=11 // pred_fallthru
        _
      // Predicated region
      $region17: #{cross_attention_forward.16} parent=11 // pred_check
        %p220 = pneg %p174
      $region18: #{cross_attention_forward.16} parent=11 // pred_check_branch
        %222 = sbr.rel (%p220) target = $region20
      $region19: #{cross_attention_forward.16} parent=11 // pred_region
        _
      $region20: #{cross_attention_forward.16} parent=11 // pred_fallthru
        _
    $region12: #{cross_attention_forward.16} parent=5 // pred_fallthru
      _
    %p223 = scmp.lt.s32.totalorder %s12, 2
    // Predicated region
    $region21: #{cross_attention_forward.16} parent=5 // pred_check
      %p224 = pneg %p223
    $region22: #{cross_attention_forward.16} parent=5 // pred_check_branch
      %226 = sbr.rel (%p224) target = $region24
    $region23: #{cross_attention_forward.16} parent=5 // pred_region
      // Predicated region
      $region25: #{cross_attention_forward.16} parent=23 // pred_check
        %p227 = pneg %p46
      $region26: #{cross_attention_forward.16} parent=23 // pred_check_branch
        %229 = sbr.rel (%p227) target = $region28
      $region27: #{cross_attention_forward.16} parent=23 // pred_region
        %p230 = scmp.lt.s32.totalorder %s19, 1
        %s231 = scalar_select %p230, %s19, 1
        %p232 = scmp.lt.s32.totalorder %s20, 0
        %s233 = scalar_select %p232, %s20, 0
        %s234 = sadd.s32 %s233, %s231
        %s235 = smul.addr %s234, 4
        %s236 = scalar_lea.vmem %s0, %s235
      $region28: #{cross_attention_forward.16} parent=23 // pred_fallthru
        _
      // Predicated region
      $region29: #{cross_attention_forward.16} parent=23 // pred_check
        %p237 = pneg %p72
      $region30: #{cross_attention_forward.16} parent=23 // pred_check_branch
        %239 = sbr.rel (%p237) target = $region32
      $region31: #{cross_attention_forward.16} parent=23 // pred_region
        %p240 = scmp.lt.s32.totalorder %s19, 1
        %s241 = scalar_select %p240, %s19, 1
        %s242 = smul.addr %s241, 4
        %s243 = scalar_lea.vmem %s1, %s242
      $region32: #{cross_attention_forward.16} parent=23 // pred_fallthru
        _
      // Predicated region
      $region33: #{cross_attention_forward.16} parent=23 // pred_check
        %p244 = pneg %p98
      $region34: #{cross_attention_forward.16} parent=23 // pred_check_branch
        %246 = sbr.rel (%p244) target = $region36
      $region35: #{cross_attention_forward.16} parent=23 // pred_region
        %p247 = scmp.lt.s32.totalorder %s19, 1
        %s248 = scalar_select %p247, %s19, 1
        %s249 = smul.addr %s248, 4
        %s250 = scalar_lea.vmem %s2, %s249
      $region36: #{cross_attention_forward.16} parent=23 // pred_fallthru
        _
      // Predicated region
      $region37: #{cross_attention_forward.16} parent=23 // pred_check
        %p251 = pneg %p126
      $region38: #{cross_attention_forward.16} parent=23 // pred_check_branch
        %253 = sbr.rel (%p251) target = $region40
      $region39: #{cross_attention_forward.16} parent=23 // pred_region
        %p254 = scmp.lt.s32.totalorder %s19, 1
        %s255 = scalar_select %p254, %s19, 1
        %p256 = scmp.lt.s32.totalorder %s20, 0
        %s257 = scalar_select %p256, %s20, 0
        %s258 = sadd.s32 %s257, %s255
        %s259 = smul.addr %s258, 8
        %s260 = scalar_lea.vmem %s3, %s259
      $region40: #{cross_attention_forward.16} parent=23 // pred_fallthru
        _
    $region24: #{cross_attention_forward.16} parent=5 // pred_fallthru
      _
    %p261 = scmp.le.s32.totalorder 1, %s12
    %p262 = scmp.lt.s32.totalorder %s12, 3
    %p263 = pnand %p261, %p262
    %p264 = pneg %p263
    // Predicated region
    $region41: #{cross_attention_forward.16} parent=5 // pred_check
      _
    $region42: #{cross_attention_forward.16} parent=5 // pred_check_branch
      %266 = sbr.rel (%p263) target = $region44
    $region43: #{cross_attention_forward.16} parent=5 // pred_region
      %s267 = ssub.s32 %s12, 1
      %p268 = scmp.lt.s32.totalorder %s21, 1
      %s269 = scalar_select %p268, %s21, 1
      %p270 = scmp.lt.s32.totalorder %s22, 0
      %s271 = scalar_select %p270, %s22, 0
      %s272 = sadd.s32 %s271, %s269
      %s273 = smul.addr %s272, 4
      %s274 = scalar_lea.vmem %s0, %s273
      %p275 = pneg %p52
      %p276 = pneg %p49
      %p277 = scmp.lt.s32.totalorder %s21, 1
      %s278 = scalar_select %p277, %s21, 1
      %s279 = smul.addr %s278, 4
      %s280 = scalar_lea.vmem %s1, %s279
      %p281 = pneg %p78
      %p282 = pneg %p75
      %p283 = scmp.lt.s32.totalorder %s21, 1
      %s284 = scalar_select %p283, %s21, 1
      %s285 = smul.addr %s284, 4
      %s286 = scalar_lea.vmem %s2, %s285
      %p287 = pneg %p104
      %p288 = pneg %p101
      %p289 = scmp.lt.s32.totalorder %s21, 1
      %s290 = scalar_select %p289, %s21, 1
      %p291 = scmp.lt.s32.totalorder %s22, 0
      %s292 = scalar_select %p291, %s22, 0
      %s293 = sadd.s32 %s292, %s290
      %s294 = smul.addr %s293, 8
      %s295 = scalar_lea.vmem %s3, %s294
      %p296 = pneg %p132
      %p297 = pneg %p129
      %p298 = pneg %p153
      %p299 = pneg %p150
      %p300 = pneg %p174
      %p301 = pneg %p171
      %p302 = pneg %p202
      %p303 = pneg %p199
      %p304 = scmp.lt.s32.totalorder %s21, 1
      %s305 = scalar_select %p304, %s21, 1
      %p306 = scmp.lt.s32.totalorder %s22, 0
      %s307 = scalar_select %p306, %s22, 0
      %s308 = sadd.s32 %s307, %s305
      %s309 = smul.addr %s308, 8
      %s310 = scalar_lea.vmem %s6, %s309
      %p311 = scmp.lt.s32.totalorder %s21, 1
      %s312 = scalar_select %p311, %s21, 1
      %p313 = scmp.lt.s32.totalorder %s22, 0
      %s314 = scalar_select %p313, %s22, 0
      %s315 = sadd.s32 %s314, %s312
      %s316 = smul.addr %s315, 4
      %s317 = scalar_lea.vmem %s0, %s316
      %p318 = scmp.lt.s32.totalorder %s21, 1
      %s319 = scalar_select %p318, %s21, 1
      %s320 = smul.addr %s319, 4
      %s321 = scalar_lea.vmem %s1, %s320
      %p322 = scmp.lt.s32.totalorder %s21, 1
      %s323 = scalar_select %p322, %s21, 1
      %s324 = smul.addr %s323, 4
      %s325 = scalar_lea.vmem %s2, %s324
      %p326 = scmp.lt.s32.totalorder %s21, 1
      %s327 = scalar_select %p326, %s21, 1
      %p328 = scmp.lt.s32.totalorder %s22, 0
      %s329 = scalar_select %p328, %s22, 0
      %s330 = sadd.s32 %s329, %s327
      %s331 = smul.addr %s330, 8
      %s332 = scalar_lea.vmem %s3, %s331
      %p333 = scmp.lt.s32.totalorder %s21, 1
      %s334 = scalar_select %p333, %s21, 1
      %p335 = scmp.lt.s32.totalorder %s22, 0
      %s336 = scalar_select %p335, %s22, 0
      %s337 = sadd.s32 %s336, %s334
      %s338 = smul.addr %s337, 8
      %s339 = scalar_lea.vmem %s6, %s338
      %v341 = vld [vmem:[%s317] sm:$0xf]
      %v342 = vld [vmem:[%s321] sm:$0xf]
      %v343 = vld [vmem:[%s325] sm:$0xf]
      %vm344 = vcmask 64512
      %v346 = vsel %vm344, %v341, 0
      %v349 = vsel %vm344, %v342, 0
      %351 = vmatprep.subr.bf16.mxu0 0
      %352 = vmatpush1.bf16.xpose.msra.mxu0 %v349
      %353 = vmatprep.subr.bf16.mxu0 0
      %354 = vmatpush1.bf16.xpose.msra.mxu0 0
      %355 = vmatprep.subr.bf16.mxu0 0
      %356 = vmatpush1.bf16.xpose.msra.mxu0 0
      %357 = vmatprep.subr.bf16.mxu0 0
      %358 = vmatpush1.bf16.xpose.msra.mxu0 0
      %359 = vmatprep.subr.bf16.mxu0 0
      %360 = vmatpush1.bf16.xpose.msra.mxu0 0
      %361 = vmatprep.subr.bf16.mxu0 0
      %362 = vmatpush1.bf16.xpose.msra.mxu0 0
      %363 = vmatprep.subr.bf16.mxu0 0
      %364 = vmatpush1.bf16.xpose.msra.mxu0 0
      %365 = vmatprep.subr.bf16.mxu0 0
      %366 = vmatpush1.bf16.xpose.msra.mxu0 0
      %367 = vmatprep.subr.bf16.mxu0 0
      %368 = vmatpush1.bf16.xpose.msra.mxu0 0
      %369 = vmatprep.subr.bf16.mxu0 0
      %370 = vmatpush1.bf16.xpose.msra.mxu0 0
      %371 = vmatprep.subr.bf16.mxu0 0
      %372 = vmatpush1.bf16.xpose.msra.mxu0 0
      %373 = vmatprep.subr.bf16.mxu0 0
      %374 = vmatpush1.bf16.xpose.msra.mxu0 0
      %375 = vmatprep.subr.bf16.mxu0 0
      %376 = vmatpush1.bf16.xpose.msra.mxu0 0
      %377 = vmatprep.subr.bf16.mxu0 0
      %378 = vmatpush1.bf16.xpose.msra.mxu0 0
      %379 = vmatprep.subr.bf16.mxu0 0
      %380 = vmatpush1.bf16.xpose.msra.mxu0 0
      %381 = vmatprep.subr.bf16.mxu0 0
      %382 = vmatpush1.bf16.xpose.msra.mxu0 0
      %383 = vmatprep.mubr.bf16.mxu0 0
      %384 = vmatmul.mubr.bf16.gmra.mrb[0].mxu0 %v346
      %v385 = vpop.f32.mrb[0].mxu0
      %v386 = vadd.f32 0.0, %v385
      %v387 = vpop.f32.mrb[0].mxu0
      %v388 = vpop.f32.mrb[0].mxu0
      %v389 = vpop.f32.mrb[0].mxu0
      %390 = vdwg.mxu0
      %v391 = vsel %vm344, %v386, -inf
      %392 = vmax.xlane.f32.xlu0 %v391
      %v393 = vpop.xlane.xlu0 %392
      %v394 = vsub.f32 %v386, %v393
      %v395 = vmul.f32 %v394, 1.442695
      %v396 = vpow.pop %v395
      %v397 = vsel %vm344, %v396, 0.0
      %398 = vadd.xlane.f32.xlu0 %v397
      %v399 = vpop.xlane.xlu0 %398
      %v400 = vrcp.pop %v399
      %v401 = vmul.f32 %v396, %v400
      %v402 = vpack.c.bf16 %v401, %v401
      %v404 = vsel %vm344, %v402, 0
      %vm406 = vcmask 1043456
      %v408 = vsel %vm406, %v343, 0
      %410 = vmatprep.subr.bf16.mxu0 0
      %411 = vmatpush1.bf16.msra.mxu0 %v408
      %412 = vmatprep.subr.bf16.mxu0 0
      %413 = vmatpush1.bf16.msra.mxu0 0
      %414 = vmatprep.subr.bf16.mxu0 0
      %415 = vmatpush1.bf16.msra.mxu0 0
      %416 = vmatprep.subr.bf16.mxu0 0
      %417 = vmatpush1.bf16.msra.mxu0 0
      %418 = vmatprep.subr.bf16.mxu0 0
      %419 = vmatpush1.bf16.msra.mxu0 0
      %420 = vmatprep.subr.bf16.mxu0 0
      %421 = vmatpush1.bf16.msra.mxu0 0
      %422 = vmatprep.subr.bf16.mxu0 0
      %423 = vmatpush1.bf16.msra.mxu0 0
      %424 = vmatprep.subr.bf16.mxu0 0
      %425 = vmatpush1.bf16.msra.mxu0 0
      %426 = vmatprep.subr.bf16.mxu0 0
      %427 = vmatpush1.bf16.msra.mxu0 0
      %428 = vmatprep.subr.bf16.mxu0 0
      %429 = vmatpush1.bf16.msra.mxu0 0
      %430 = vmatprep.subr.bf16.mxu0 0
      %431 = vmatpush1.bf16.msra.mxu0 0
      %432 = vmatprep.subr.bf16.mxu0 0
      %433 = vmatpush1.bf16.msra.mxu0 0
      %434 = vmatprep.subr.bf16.mxu0 0
      %435 = vmatpush1.bf16.msra.mxu0 0
      %436 = vmatprep.subr.bf16.mxu0 0
      %437 = vmatpush1.bf16.msra.mxu0 0
      %438 = vmatprep.subr.bf16.mxu0 0
      %439 = vmatpush1.bf16.msra.mxu0 0
      %440 = vmatprep.subr.bf16.mxu0 0
      %441 = vmatpush1.bf16.msra.mxu0 0
      %442 = vmatprep.mubr.bf16.mxu0 0
      %443 = vmatmul.mubr.bf16.gmra.mrb[0].mxu0 %v404
      %v444 = vpop.f32.mrb[0].mxu0
      %v445 = vadd.f32 0.0, %v444
      %v446 = vpop.f32.mrb[0].mxu0
      %v447 = vpop.f32.mrb[0].mxu0
      %v448 = vpop.f32.mrb[0].mxu0
      %449 = vdwg.mxu0
      %v450 = vpack.c.bf16 %v445, %v445
      %vm451 = vcmask 60416
      %452 = vst.msk [vmem:[#allocation2] sm:$0xf] %vm451, %v450
      %v453 = vld [vmem:[%s317] sm:$0xf]
      %v454 = vld [vmem:[%s321] sm:$0xf]
      %v455 = vld [vmem:[%s325] sm:$0xf]
      %v457 = vunpack.c.l.b16 %v453
      %v458 = vpack.c.b16 %v457, %v457
      %459 = vrot.lane.b32.xlu0 %v458, 120
      %v460 = vpop.permute.xlu0 %459
      %v462 = vunpack.c.l.b16 %v454
      %v463 = vpack.c.b16 %v462, %v462
      %464 = vrot.lane.b32.xlu0 %v463, 120
      %v465 = vpop.permute.xlu0 %464
      %v467 = vsel %vm344, %v460, 0
      %v470 = vsel %vm344, %v465, 0
      %472 = vmatprep.subr.bf16.mxu0 0
      %473 = vmatpush1.bf16.xpose.msra.mxu0 %v470
      %474 = vmatprep.subr.bf16.mxu0 0
      %475 = vmatpush1.bf16.xpose.msra.mxu0 0
      %476 = vmatprep.subr.bf16.mxu0 0
      %477 = vmatpush1.bf16.xpose.msra.mxu0 0
      %478 = vmatprep.subr.bf16.mxu0 0
      %479 = vmatpush1.bf16.xpose.msra.mxu0 0
      %480 = vmatprep.subr.bf16.mxu0 0
      %481 = vmatpush1.bf16.xpose.msra.mxu0 0
      %482 = vmatprep.subr.bf16.mxu0 0
      %483 = vmatpush1.bf16.xpose.msra.mxu0 0
      %484 = vmatprep.subr.bf16.mxu0 0
      %485 = vmatpush1.bf16.xpose.msra.mxu0 0
      %486 = vmatprep.subr.bf16.mxu0 0
      %487 = vmatpush1.bf16.xpose.msra.mxu0 0
      %488 = vmatprep.subr.bf16.mxu0 0
      %489 = vmatpush1.bf16.xpose.msra.mxu0 0
      %490 = vmatprep.subr.bf16.mxu0 0
      %491 = vmatpush1.bf16.xpose.msra.mxu0 0
      %492 = vmatprep.subr.bf16.mxu0 0
      %493 = vmatpush1.bf16.xpose.msra.mxu0 0
      %494 = vmatprep.subr.bf16.mxu0 0
      %495 = vmatpush1.bf16.xpose.msra.mxu0 0
      %496 = vmatprep.subr.bf16.mxu0 0
      %497 = vmatpush1.bf16.xpose.msra.mxu0 0
      %498 = vmatprep.subr.bf16.mxu0 0
      %499 = vmatpush1.bf16.xpose.msra.mxu0 0
      %500 = vmatprep.subr.bf16.mxu0 0
      %501 = vmatpush1.bf16.xpose.msra.mxu0 0
      %502 = vmatprep.subr.bf16.mxu0 0
      %503 = vmatpush1.bf16.xpose.msra.mxu0 0
      %504 = vmatprep.mubr.bf16.mxu0 0
      %505 = vmatmul.mubr.bf16.gmra.mrb[0].mxu0 %v467
      %v506 = vpop.f32.mrb[0].mxu0
      %v507 = vadd.f32 0.0, %v506
      %v508 = vpop.f32.mrb[0].mxu0
      %v509 = vpop.f32.mrb[0].mxu0
      %v510 = vpop.f32.mrb[0].mxu0
      %511 = vdwg.mxu0
      %v512 = vsel %vm344, %v507, -inf
      %513 = vmax.xlane.f32.xlu0 %v512
      %v514 = vpop.xlane.xlu0 %513
      %v515 = vsub.f32 %v507, %v514
      %v516 = vmul.f32 %v515, 1.442695
      %v517 = vpow.pop %v516
      %v518 = vsel %vm344, %v517, 0.0
      %519 = vadd.xlane.f32.xlu0 %v518
      %v520 = vpop.xlane.xlu0 %519
      %v521 = vrcp.pop %v520
      %v522 = vmul.f32 %v517, %v521
      %v523 = vpack.c.bf16 %v522, %v522
      %v525 = vunpack.c.l.b16 %v455
      %v526 = vpack.c.b16 %v525, %v525
      %527 = vrot.lane.b32.xlu0 %v526, 120
      %v528 = vpop.permute.xlu0 %527
      %v530 = vsel %vm344, %v523, 0
      %v533 = vsel %vm406, %v528, 0
      %535 = vmatprep.subr.bf16.mxu0 0
      %536 = vmatpush1.bf16.msra.mxu0 %v533
      %537 = vmatprep.subr.bf16.mxu0 0
      %538 = vmatpush1.bf16.msra.mxu0 0
      %539 = vmatprep.subr.bf16.mxu0 0
      %540 = vmatpush1.bf16.msra.mxu0 0
      %541 = vmatprep.subr.bf16.mxu0 0
      %542 = vmatpush1.bf16.msra.mxu0 0
      %543 = vmatprep.subr.bf16.mxu0 0
      %544 = vmatpush1.bf16.msra.mxu0 0
      %545 = vmatprep.subr.bf16.mxu0 0
      %546 = vmatpush1.bf16.msra.mxu0 0
      %547 = vmatprep.subr.bf16.mxu0 0
      %548 = vmatpush1.bf16.msra.mxu0 0
      %549 = vmatprep.subr.bf16.mxu0 0
      %550 = vmatpush1.bf16.msra.mxu0 0
      %551 = vmatprep.subr.bf16.mxu0 0
      %552 = vmatpush1.bf16.msra.mxu0 0
      %553 = vmatprep.subr.bf16.mxu0 0
      %554 = vmatpush1.bf16.msra.mxu0 0
      %555 = vmatprep.subr.bf16.mxu0 0
      %556 = vmatpush1.bf16.msra.mxu0 0
      %557 = vmatprep.subr.bf16.mxu0 0
      %558 = vmatpush1.bf16.msra.mxu0 0
      %559 = vmatprep.subr.bf16.mxu0 0
      %560 = vmatpush1.bf16.msra.mxu0 0
      %561 = vmatprep.subr.bf16.mxu0 0
      %562 = vmatpush1.bf16.msra.mxu0 0
      %563 = vmatprep.subr.bf16.mxu0 0
      %564 = vmatpush1.bf16.msra.mxu0 0
      %565 = vmatprep.subr.bf16.mxu0 0
      %566 = vmatpush1.bf16.msra.mxu0 0
      %567 = vmatprep.mubr.bf16.mxu0 0
      %568 = vmatmul.mubr.bf16.gmra.mrb[0].mxu0 %v530
      %v569 = vpop.f32.mrb[0].mxu0
      %v570 = vadd.f32 0.0, %v569
      %v571 = vpop.f32.mrb[0].mxu0
      %v572 = vpop.f32.mrb[0].mxu0
      %v573 = vpop.f32.mrb[0].mxu0
      %574 = vdwg.mxu0
      %v575 = vpack.c.bf16 %v570, %v570
      %v577 = vunpack.c.l.b16 %v575
      %v578 = vpack.c.b16 %v577, %v577
      %579 = vrot.lane.b32.xlu0 %v578, 8
      %v580 = vpop.permute.xlu0 %579
      %vm582 = vcmask 126016
      %583 = vst.msk [vmem:[#allocation2] sm:$0xf] %vm582, %v580
      %v584 = vld [vmem:[%s317] sm:$0xf]
      %v585 = vld [vmem:[%s321] sm:$0xf]
      %v586 = vld [vmem:[%s325] sm:$0xf]
      %v588 = vunpack.c.l.b16 %v584
      %v589 = vpack.c.b16 %v588, %v588
      %590 = vrot.lane.b32.xlu0 %v589, 112
      %v591 = vpop.permute.xlu0 %590
      %v593 = vunpack.c.l.b16 %v585
      %v594 = vpack.c.b16 %v593, %v593
      %595 = vrot.lane.b32.xlu0 %v594, 112
      %v596 = vpop.permute.xlu0 %595
      %v598 = vsel %vm344, %v591, 0
      %v601 = vsel %vm344, %v596, 0
      %603 = vmatprep.subr.bf16.mxu0 0
      %604 = vmatpush1.bf16.xpose.msra.mxu0 %v601
      %605 = vmatprep.subr.bf16.mxu0 0
      %606 = vmatpush1.bf16.xpose.msra.mxu0 0
      %607 = vmatprep.subr.bf16.mxu0 0
      %608 = vmatpush1.bf16.xpose.msra.mxu0 0
      %609 = vmatprep.subr.bf16.mxu0 0
      %610 = vmatpush1.bf16.xpose.msra.mxu0 0
      %611 = vmatprep.subr.bf16.mxu0 0
      %612 = vmatpush1.bf16.xpose.msra.mxu0 0
      %613 = vmatprep.subr.bf16.mxu0 0
      %614 = vmatpush1.bf16.xpose.msra.mxu0 0
      %615 = vmatprep.subr.bf16.mxu0 0
      %616 = vmatpush1.bf16.xpose.msra.mxu0 0
      %617 = vmatprep.subr.bf16.mxu0 0
      %618 = vmatpush1.bf16.xpose.msra.mxu0 0
      %619 = vmatprep.subr.bf16.mxu0 0
      %620 = vmatpush1.bf16.xpose.msra.mxu0 0
      %621 = vmatprep.subr.bf16.mxu0 0
      %622 = vmatpush1.bf16.xpose.msra.mxu0 0
      %623 = vmatprep.subr.bf16.mxu0 0
      %624 = vmatpush1.bf16.xpose.msra.mxu0 0
      %625 = vmatprep.subr.bf16.mxu0 0
      %626 = vmatpush1.bf16.xpose.msra.mxu0 0
      %627 = vmatprep.subr.bf16.mxu0 0
      %628 = vmatpush1.bf16.xpose.msra.mxu0 0
      %629 = vmatprep.subr.bf16.mxu0 0
      %630 = vmatpush1.bf16.xpose.msra.mxu0 0
      %631 = vmatprep.subr.bf16.mxu0 0
      %632 = vmatpush1.bf16.xpose.msra.mxu0 0
      %633 = vmatprep.subr.bf16.mxu0 0
      %634 = vmatpush1.bf16.xpose.msra.mxu0 0
      %635 = vmatprep.mubr.bf16.mxu0 0
      %636 = vmatmul.mubr.bf16.gmra.mrb[0].mxu0 %v598
      %v637 = vpop.f32.mrb[0].mxu0
      %v638 = vadd.f32 0.0, %v637
      %v639 = vpop.f32.mrb[0].mxu0
      %v640 = vpop.f32.mrb[0].mxu0
      %v641 = vpop.f32.mrb[0].mxu0
      %642 = vdwg.mxu0
      %v643 = vsel %vm344, %v638, -inf
      %644 = vmax.xlane.f32.xlu0 %v643
      %v645 = vpop.xlane.xlu0 %644
      %v646 = vsub.f32 %v638, %v645
      %v647 = vmul.f32 %v646, 1.442695
      %v648 = vpow.pop %v647
      %v649 = vsel %vm344, %v648, 0.0
      %650 = vadd.xlane.f32.xlu0 %v649
      %v651 = vpop.xlane.xlu0 %650
      %v652 = vrcp.pop %v651
      %v653 = vmul.f32 %v648, %v652
      %v654 = vpack.c.bf16 %v653, %v653
      %v656 = vunpack.c.l.b16 %v586
      %v657 = vpack.c.b16 %v656, %v656
      %658 = vrot.lane.b32.xlu0 %v657, 112
      %v659 = vpop.permute.xlu0 %658
      %v661 = vsel %vm344, %v654, 0
      %v664 = vsel %vm406, %v659, 0
      %666 = vmatprep.subr.bf16.mxu0 0
      %667 = vmatpush1.bf16.msra.mxu0 %v664
      %668 = vmatprep.subr.bf16.mxu0 0
      %669 = vmatpush1.bf16.msra.mxu0 0
      %670 = vmatprep.subr.bf16.mxu0 0
      %671 = vmatpush1.bf16.msra.mxu0 0
      %672 = vmatprep.subr.bf16.mxu0 0
      %673 = vmatpush1.bf16.msra.mxu0 0
      %674 = vmatprep.subr.bf16.mxu0 0
      %675 = vmatpush1.bf16.msra.mxu0 0
      %676 = vmatprep.subr.bf16.mxu0 0
      %677 = vmatpush1.bf16.msra.mxu0 0
      %678 = vmatprep.subr.bf16.mxu0 0
      %679 = vmatpush1.bf16.msra.mxu0 0
      %680 = vmatprep.subr.bf16.mxu0 0
      %681 = vmatpush1.bf16.msra.mxu0 0
      %682 = vmatprep.subr.bf16.mxu0 0
      %683 = vmatpush1.bf16.msra.mxu0 0
      %684 = vmatprep.subr.bf16.mxu0 0
      %685 = vmatpush1.bf16.msra.mxu0 0
      %686 = vmatprep.subr.bf16.mxu0 0
      %687 = vmatpush1.bf16.msra.mxu0 0
      %688 = vmatprep.subr.bf16.mxu0 0
      %689 = vmatpush1.bf16.msra.mxu0 0
      %690 = vmatprep.subr.bf16.mxu0 0
      %691 = vmatpush1.bf16.msra.mxu0 0
      %692 = vmatprep.subr.bf16.mxu0 0
      %693 = vmatpush1.bf16.msra.mxu0 0
      %694 = vmatprep.subr.bf16.mxu0 0
      %695 = vmatpush1.bf16.msra.mxu0 0
      %696 = vmatprep.subr.bf16.mxu0 0
      %697 = vmatpush1.bf16.msra.mxu0 0
      %698 = vmatprep.mubr.bf16.mxu0 0
      %699 = vmatmul.mubr.bf16.gmra.mrb[0].mxu0 %v661
      %v700 = vpop.f32.mrb[0].mxu0
      %v701 = vadd.f32 0.0, %v700
      %v702 = vpop.f32.mrb[0].mxu0
      %v703 = vpop.f32.mrb[0].mxu0
      %v704 = vpop.f32.mrb[0].mxu0
      %705 = vdwg.mxu0
      %v706 = vpack.c.bf16 %v701, %v701
      %v708 = vunpack.c.l.b16 %v706
      %v709 = vpack.c.b16 %v708, %v708
      %710 = vrot.lane.b32.xlu0 %v709, 16
      %v711 = vpop.permute.xlu0 %710
      %vm713 = vcmask 191616
      %714 = vst.msk [vmem:[#allocation2] sm:$0xf] %vm713, %v711
      %v715 = vld [vmem:[%s317] sm:$0xf]
      %v716 = vld [vmem:[%s321] sm:$0xf]
      %v717 = vld [vmem:[%s325] sm:$0xf]
      %v719 = vunpack.c.l.b16 %v715
      %v720 = vpack.c.b16 %v719, %v719
      %721 = vrot.lane.b32.xlu0 %v720, 104
      %v722 = vpop.permute.xlu0 %721
      %v724 = vunpack.c.l.b16 %v716
      %v725 = vpack.c.b16 %v724, %v724
      %726 = vrot.lane.b32.xlu0 %v725, 104
      %v727 = vpop.permute.xlu0 %726
      %v729 = vsel %vm344, %v722, 0
      %v732 = vsel %vm344, %v727, 0
      %734 = vmatprep.subr.bf16.mxu0 0
      %735 = vmatpush1.bf16.xpose.msra.mxu0 %v732
      %736 = vmatprep.subr.bf16.mxu0 0
      %737 = vmatpush1.bf16.xpose.msra.mxu0 0
      %738 = vmatprep.subr.bf16.mxu0 0
      %739 = vmatpush1.bf16.xpose.msra.mxu0 0
      %740 = vmatprep.subr.bf16.mxu0 0
      %741 = vmatpush1.bf16.xpose.msra.mxu0 0
      %742 = vmatprep.subr.bf16.mxu0 0
      %743 = vmatpush1.bf16.xpose.msra.mxu0 0
      %744 = vmatprep.subr.bf16.mxu0 0
      %745 = vmatpush1.bf16.xpose.msra.mxu0 0
      %746 = vmatprep.subr.bf16.mxu0 0
      %747 = vmatpush1.bf16.xpose.msra.mxu0 0
      %748 = vmatprep.subr.bf16.mxu0 0
      %749 = vmatpush1.bf16.xpose.msra.mxu0 0
      %750 = vmatprep.subr.bf16.mxu0 0
      %751 = vmatpush1.bf16.xpose.msra.mxu0 0
      %752 = vmatprep.subr.bf16.mxu0 0
      %753 = vmatpush1.bf16.xpose.msra.mxu0 0
      %754 = vmatprep.subr.bf16.mxu0 0
      %755 = vmatpush1.bf16.xpose.msra.mxu0 0
      %756 = vmatprep.subr.bf16.mxu0 0
      %757 = vmatpush1.bf16.xpose.msra.mxu0 0
      %758 = vmatprep.subr.bf16.mxu0 0
      %759 = vmatpush1.bf16.xpose.msra.mxu0 0
      %760 = vmatprep.subr.bf16.mxu0 0
      %761 = vmatpush1.bf16.xpose.msra.mxu0 0
      %762 = vmatprep.subr.bf16.mxu0 0
      %763 = vmatpush1.bf16.xpose.msra.mxu0 0
      %764 = vmatprep.subr.bf16.mxu0 0
      %765 = vmatpush1.bf16.xpose.msra.mxu0 0
      %766 = vmatprep.mubr.bf16.mxu0 0
      %767 = vmatmul.mubr.bf16.gmra.mrb[0].mxu0 %v729
      %v768 = vpop.f32.mrb[0].mxu0
      %v769 = vadd.f32 0.0, %v768
      %v770 = vpop.f32.mrb[0].mxu0
      %v771 = vpop.f32.mrb[0].mxu0
      %v772 = vpop.f32.mrb[0].mxu0
      %773 = vdwg.mxu0
      %v774 = vsel %vm344, %v769, -inf
      %775 = vmax.xlane.f32.xlu0 %v774
      %v776 = vpop.xlane.xlu0 %775
      %v777 = vsub.f32 %v769, %v776
      %v778 = vmul.f32 %v777, 1.442695
      %v779 = vpow.pop %v778
      %v780 = vsel %vm344, %v779, 0.0
      %781 = vadd.xlane.f32.xlu0 %v780
      %v782 = vpop.xlane.xlu0 %781
      %v783 = vrcp.pop %v782
      %v784 = vmul.f32 %v779, %v783
      %v785 = vpack.c.bf16 %v784, %v784
      %v787 = vunpack.c.l.b16 %v717
      %v788 = vpack.c.b16 %v787, %v787
      %789 = vrot.lane.b32.xlu0 %v788, 104
      %v790 = vpop.permute.xlu0 %789
      %v792 = vsel %vm344, %v785, 0
      %v795 = vsel %vm406, %v790, 0
      %797 = vmatprep.subr.bf16.mxu0 0
      %798 = vmatpush1.bf16.msra.mxu0 %v795
      %799 = vmatprep.subr.bf16.mxu0 0
      %800 = vmatpush1.bf16.msra.mxu0 0
      %801 = vmatprep.subr.bf16.mxu0 0
      %802 = vmatpush1.bf16.msra.mxu0 0
      %803 = vmatprep.subr.bf16.mxu0 0
      %804 = vmatpush1.bf16.msra.mxu0 0
      %805 = vmatprep.subr.bf16.mxu0 0
      %806 = vmatpush1.bf16.msra.mxu0 0
      %807 = vmatprep.subr.bf16.mxu0 0
      %808 = vmatpush1.bf16.msra.mxu0 0
      %809 = vmatprep.subr.bf16.mxu0 0
      %810 = vmatpush1.bf16.msra.mxu0 0
      %811 = vmatprep.subr.bf16.mxu0 0
      %812 = vmatpush1.bf16.msra.mxu0 0
      %813 = vmatprep.subr.bf16.mxu0 0
      %814 = vmatpush1.bf16.msra.mxu0 0
      %815 = vmatprep.subr.bf16.mxu0 0
      %816 = vmatpush1.bf16.msra.mxu0 0
      %817 = vmatprep.subr.bf16.mxu0 0
      %818 = vmatpush1.bf16.msra.mxu0 0
      %819 = vmatprep.subr.bf16.mxu0 0
      %820 = vmatpush1.bf16.msra.mxu0 0
      %821 = vmatprep.subr.bf16.mxu0 0
      %822 = vmatpush1.bf16.msra.mxu0 0
      %823 = vmatprep.subr.bf16.mxu0 0
      %824 = vmatpush1.bf16.msra.mxu0 0
      %825 = vmatprep.subr.bf16.mxu0 0
      %826 = vmatpush1.bf16.msra.mxu0 0
      %827 = vmatprep.subr.bf16.mxu0 0
      %828 = vmatpush1.bf16.msra.mxu0 0
      %829 = vmatprep.mubr.bf16.mxu0 0
      %830 = vmatmul.mubr.bf16.gmra.mrb[0].mxu0 %v792
      %v831 = vpop.f32.mrb[0].mxu0
      %v832 = vadd.f32 0.0, %v831
      %v833 = vpop.f32.mrb[0].mxu0
      %v834 = vpop.f32.mrb[0].mxu0
      %v835 = vpop.f32.mrb[0].mxu0
      %836 = vdwg.mxu0
      %v837 = vpack.c.bf16 %v832, %v832
      %v839 = vunpack.c.l.b16 %v837
      %v840 = vpack.c.b16 %v839, %v839
      %841 = vrot.lane.b32.xlu0 %v840, 24
      %v842 = vpop.permute.xlu0 %841
      %vm844 = vcmask 257216
      %845 = vst.msk [vmem:[#allocation2] sm:$0xf] %vm844, %v842
      %v846 = vld [vmem:[%s332] sm:$0xff]
      %v847 = vld [vmem:[%s5] sm:$0x1]
      %v849 = vlaneseq
      %v850 = vshrl.u32 %v849, 7
      %v851 = vsub.s32 0, %v850
      %v852 = vrot.slane %v847, %v851
      %v854 = vadd.f32 %v846, %v852
      %v855 = vld [vmem:[#allocation2] sm:$0xf]
      %v856 = vld [vmem:[%s4] sm:$0xf]
      %v857 = vld [vmem:[%s4 + $0x4] sm:$0xf]
      %v858 = vld [vmem:[%s4 + $0x8] sm:$0xf]
      %v859 = vld [vmem:[%s4 + $0xc] sm:$0xf]
      %v864 = vunpack.c.l.b16 %v856
      %v865 = vunpack.c.l.b16 %v857
      %v866 = vunpack.c.l.b16 %v858
      %v867 = vunpack.c.l.b16 %v859
      %v868 = vpack.c.b16 %v865, %v864
      %v869 = vpack.c.b16 %v867, %v866
      %vm872 = vcmask 261120
      %v874 = vsel %vm872, %v855, 0
      %876 = vmatprep.subr.bf16.mxu0 0
      %877 = vmatpush1.bf16.msra.mxu0 %v868
      %878 = vmatprep.subr.bf16.mxu0 0
      %879 = vmatpush1.bf16.msra.mxu0 %v869
      %880 = vmatprep.subr.bf16.mxu0 0
      %881 = vmatpush1.bf16.msra.mxu0 0
      %882 = vmatprep.subr.bf16.mxu0 0
      %883 = vmatpush1.bf16.msra.mxu0 0
      %884 = vmatprep.subr.bf16.mxu0 0
      %885 = vmatpush1.bf16.msra.mxu0 0
      %886 = vmatprep.subr.bf16.mxu0 0
      %887 = vmatpush1.bf16.msra.mxu0 0
      %888 = vmatprep.subr.bf16.mxu0 0
      %889 = vmatpush1.bf16.msra.mxu0 0
      %890 = vmatprep.subr.bf16.mxu0 0
      %891 = vmatpush1.bf16.msra.mxu0 0
      %892 = vmatprep.subr.bf16.mxu0 0
      %893 = vmatpush1.bf16.msra.mxu0 0
      %894 = vmatprep.subr.bf16.mxu0 0
      %895 = vmatpush1.bf16.msra.mxu0 0
      %896 = vmatprep.subr.bf16.mxu0 0
      %897 = vmatpush1.bf16.msra.mxu0 0
      %898 = vmatprep.subr.bf16.mxu0 0
      %899 = vmatpush1.bf16.msra.mxu0 0
      %900 = vmatprep.subr.bf16.mxu0 0
      %901 = vmatpush1.bf16.msra.mxu0 0
      %902 = vmatprep.subr.bf16.mxu0 0
      %903 = vmatpush1.bf16.msra.mxu0 0
      %904 = vmatprep.subr.bf16.mxu0 0
      %905 = vmatpush1.bf16.msra.mxu0 0
      %906 = vmatprep.subr.bf16.mxu0 0
      %907 = vmatpush1.bf16.msra.mxu0 0
      %908 = vmatprep.mubr.bf16.mxu0 0
      %909 = vmatmul.mubr.bf16.gmra.mrb[0].mxu0 %v874
      %v910 = vpop.f32.mrb[0].mxu0
      %v911 = vadd.f32 0.0, %v910
      %v912 = vpop.f32.mrb[0].mxu0
      %v913 = vpop.f32.mrb[0].mxu0
      %v914 = vpop.f32.mrb[0].mxu0
      %915 = vdwg.mxu0
      %v916 = vadd.f32 %v854, %v911
      %917 = vst.msk [vmem:[%s339] sm:$0xff] %vm872, %v916
      %p918 = scmp.lt.s32.totalorder %s21, 1
      %s919 = scalar_select %p918, %s21, 1
      %p920 = scmp.lt.s32.totalorder %s22, 0
      %s921 = scalar_select %p920, %s22, 0
      %s922 = sadd.s32 %s921, %s919
      %s923 = smul.addr %s922, 8
      %s924 = scalar_lea.vmem %s6, %s923
      // Predicated region
      $region45: #{cross_attention_forward.16} parent=43 // pred_check
        %p925 = pneg %p199
      $region46: #{cross_attention_forward.16} parent=43 // pred_check_branch
        %927 = sbr.rel (%p925) target = $region48
      $region47: #{cross_attention_forward.16} parent=43 // pred_region
        _
      $region48: #{cross_attention_forward.16} parent=43 // pred_fallthru
        _
    $region44: #{cross_attention_forward.16} parent=5 // pred_fallthru
      _
    %p928 = scmp.le.s32.totalorder 2, %s12
    // Predicated region
    $region49: #{cross_attention_forward.16} parent=5 // pred_check
      %p929 = pneg %p928
    $region50: #{cross_attention_forward.16} parent=5 // pred_check_branch
      %931 = sbr.rel (%p929) target = $region52
    $region51: #{cross_attention_forward.16} parent=5 // pred_region
      %s932 = ssub.s32 %s12, 2
      // Predicated region
      $region53: #{cross_attention_forward.16} parent=51 // pred_check
        %p933 = pneg %p205
      $region54: #{cross_attention_forward.16} parent=51 // pred_check_branch
        %935 = sbr.rel (%p933) target = $region56
      $region55: #{cross_attention_forward.16} parent=51 // pred_region
        %p936 = scmp.lt.s32.totalorder %s23, 1
        %s937 = scalar_select %p936, %s23, 1
        %p938 = scmp.lt.s32.totalorder %s24, 0
        %s939 = scalar_select %p938, %s24, 0
        %s940 = sadd.s32 %s939, %s937
        %s941 = smul.addr %s940, 8
        %s942 = scalar_lea.vmem %s6, %s941
      $region56: #{cross_attention_forward.16} parent=51 // pred_fallthru
        _
    $region52: #{cross_attention_forward.16} parent=5 // pred_fallthru
      _
  $region6: #{cross_attention_forward.16} parent=0 // loop_footer
    %s16 = sadd.s32 1, %s12
  $region7: #{cross_attention_forward.16} parent=0 // loop_footer_branch
    %11 = sbr.rel target = $region3
  $region8: #{cross_attention_forward.16} parent=0 // loop_exit
    _

// kernel: cross_attention_forward.18
$region0: #{cross_attention_forward.18}
  #allocation0 [shape = 'u32[]', space=smem, size = 0x4, offset = 0x4, fixed_abs, tag = 'smem constant byte address 0x4 - core index']
  #allocation1 [shape = 'u32[144,128]{1,0:T(1,128)}', space=vmem, size = 0x12000, scoped, tag = 'internal scratch']
  %s0 = inlined_call_operand.vmem [shape: bf16[32,32], index: 0, kind: input, shape index: {}]
  %s1 = inlined_call_operand.vmem [shape: bf16[32,32], index: 1, kind: input, shape index: {}]
  %s2 = inlined_call_operand.vmem [shape: bf16[32,32], index: 2, kind: input, shape index: {}]
  %s3 = inlined_call_operand.vmem [shape: f32[1,32], index: 3, kind: input, shape index: {}]
  %s4 = inlined_call_operand.vmem [shape: bf16[32,32], index: 4, kind: input, shape index: {}]
  %s5 = inlined_call_operand.vmem [shape: f32[1,32], index: 5, kind: input, shape index: {}]
  %s6 = inlined_call_operand.vmem [shape: bf16[32,32], index: 6, kind: output, shape index: {0}]
  %s7 = inlined_call_operand.vmem [shape: bf16[32,32], index: 7, kind: output, shape index: {1}]
  %8 = xla_tuple %s6, %s7
  %s9 = sld [smem:[#allocation0]]
  $region42: #{cross_attention_forward.18} parent=0
    _
  %s11 = ssub.s32 1, %s9
  %s12 = scalar_select 0, %s11, %s9
  // Predicated region
  $region2: #{cross_attention_forward.18} parent=0 // pred_check
    _
  $region3: #{cross_attention_forward.18} parent=0 // pred_check_branch
    %14 = sbr.rel (0) target = $region5
  $region4: #{cross_attention_forward.18} parent=0 // pred_region
    _
  $region5: #{cross_attention_forward.18} parent=0 // pred_fallthru
    _
  // Predicated region
  $region6: #{cross_attention_forward.18} parent=0 // pred_check
    _
  $region7: #{cross_attention_forward.18} parent=0 // pred_check_branch
    %16 = sbr.rel (0) target = $region9
  $region8: #{cross_attention_forward.18} parent=0 // pred_region
    _
  $region9: #{cross_attention_forward.18} parent=0 // pred_fallthru
    _
  // Predicated region
  $region10: #{cross_attention_forward.18} parent=0 // pred_check
    _
  $region11: #{cross_attention_forward.18} parent=0 // pred_check_branch
    %18 = sbr.rel (0) target = $region13
  $region12: #{cross_attention_forward.18} parent=0 // pred_region
    _
  $region13: #{cross_attention_forward.18} parent=0 // pred_fallthru
    _
  // Predicated region
  $region14: #{cross_attention_forward.18} parent=0 // pred_check
    _
  $region15: #{cross_attention_forward.18} parent=0 // pred_check_branch
    %20 = sbr.rel (0) target = $region17
  $region16: #{cross_attention_forward.18} parent=0 // pred_region
    _
  $region17: #{cross_attention_forward.18} parent=0 // pred_fallthru
    _
  // Predicated region
  $region18: #{cross_attention_forward.18} parent=0 // pred_check
    _
  $region19: #{cross_attention_forward.18} parent=0 // pred_check_branch
    %22 = sbr.rel (0) target = $region21
  $region20: #{cross_attention_forward.18} parent=0 // pred_region
    _
  $region21: #{cross_attention_forward.18} parent=0 // pred_fallthru
    _
  // Predicated region
  $region22: #{cross_attention_forward.18} parent=0 // pred_check
    _
  $region23: #{cross_attention_forward.18} parent=0 // pred_check_branch
    %24 = sbr.rel (0) target = $region25
  $region24: #{cross_attention_forward.18} parent=0 // pred_region
    _
  $region25: #{cross_attention_forward.18} parent=0 // pred_fallthru
    _
  %v26 = vld [vmem:[%s0] sm:$0xf]
  %v27 = vld [vmem:[%s0 + $0x4] sm:$0xf]
  %v28 = vld [vmem:[%s0 + $0x8] sm:$0xf]
  %v29 = vld [vmem:[%s0 + $0xc] sm:$0xf]
  %v30 = vld [vmem:[%s2] sm:$0xf]
  %v31 = vld [vmem:[%s2 + $0x4] sm:$0xf]
  %v32 = vld [vmem:[%s2 + $0x8] sm:$0xf]
  %v33 = vld [vmem:[%s2 + $0xc] sm:$0xf]
  %v34 = vld [vmem:[%s3] sm:$0x1]
  %v36 = vlaneseq
  %v37 = vshrl.u32 %v36, 7
  %v38 = vsub.s32 0, %v37
  %v39 = vrot.slane %v34, %v38
  %v45 = vunpack.c.l.b16 %v26
  %v46 = vunpack.c.l.b16 %v27
  %v47 = vunpack.c.l.b16 %v28
  %v48 = vunpack.c.l.b16 %v29
  %v49 = vpack.c.b16 %v46, %v45
  %v50 = vpack.c.b16 %v48, %v47
  %v55 = vunpack.c.l.b16 %v30
  %v56 = vunpack.c.l.b16 %v31
  %v57 = vunpack.c.l.b16 %v32
  %v58 = vunpack.c.l.b16 %v33
  %v59 = vpack.c.b16 %v56, %v55
  %v60 = vpack.c.b16 %v58, %v57
  %vm63 = vcmask 261120
  %v65 = vsel %vm63, %v49, 0
  %v68 = vsel %vm63, %v50, 0
  %70 = vmatprep.subr.bf16.mxu0 0
  %71 = vmatpush1.bf16.msra.mxu0 %v59
  %72 = vmatprep.subr.bf16.mxu0 0
  %73 = vmatpush1.bf16.msra.mxu0 %v60
  %74 = vmatprep.subr.bf16.mxu0 0
  %75 = vmatpush1.bf16.msra.mxu0 0
  %76 = vmatprep.subr.bf16.mxu0 0
  %77 = vmatpush1.bf16.msra.mxu0 0
  %78 = vmatprep.subr.bf16.mxu0 0
  %79 = vmatpush1.bf16.msra.mxu0 0
  %80 = vmatprep.subr.bf16.mxu0 0
  %81 = vmatpush1.bf16.msra.mxu0 0
  %82 = vmatprep.subr.bf16.mxu0 0
  %83 = vmatpush1.bf16.msra.mxu0 0
  %84 = vmatprep.subr.bf16.mxu0 0
  %85 = vmatpush1.bf16.msra.mxu0 0
  %86 = vmatprep.subr.bf16.mxu0 0
  %87 = vmatpush1.bf16.msra.mxu0 0
  %88 = vmatprep.subr.bf16.mxu0 0
  %89 = vmatpush1.bf16.msra.mxu0 0
  %90 = vmatprep.subr.bf16.mxu0 0
  %91 = vmatpush1.bf16.msra.mxu0 0
  %92 = vmatprep.subr.bf16.mxu0 0
  %93 = vmatpush1.bf16.msra.mxu0 0
  %94 = vmatprep.subr.bf16.mxu0 0
  %95 = vmatpush1.bf16.msra.mxu0 0
  %96 = vmatprep.subr.bf16.mxu0 0
  %97 = vmatpush1.bf16.msra.mxu0 0
  %98 = vmatprep.subr.bf16.mxu0 0
  %99 = vmatpush1.bf16.msra.mxu0 0
  %100 = vmatprep.subr.bf16.mxu0 0
  %101 = vmatpush1.bf16.msra.mxu0 0
  %102 = vmatprep.mubr.bf16.mxu0 0
  %103 = vmatmul.mubr.bf16.gmra.mrb[0].mxu0 %v65
  %v104 = vpop.f32.mrb[0].mxu0
  %v105 = vadd.f32 %v39, %v104
  %v106 = vpop.f32.mrb[0].mxu0
  %v107 = vpop.f32.mrb[0].mxu0
  %v108 = vadd.f32 %v39, %v107
  %v109 = vpop.f32.mrb[0].mxu0
  %110 = vmatprep.mubr.bf16.mxu0 0
  %111 = vmatmul.mubr.bf16.gmra.mrb[0].mxu0 %v68
  %v112 = vpop.f32.mrb[0].mxu0
  %v113 = vadd.f32 %v39, %v112
  %v114 = vpop.f32.mrb[0].mxu0
  %v115 = vpop.f32.mrb[0].mxu0
  %v116 = vadd.f32 %v39, %v115
  %v117 = vpop.f32.mrb[0].mxu0
  %118 = vdwg.mxu0
  %v119 = vpack.c.bf16 %v108, %v105
  %v120 = vpack.c.bf16 %v116, %v113
  %v123 = vunpack.c.l.b16 %v119
  %v124 = vunpack.c.h.b16 %v119
  %v125 = vunpack.c.l.b16 %v120
  %v126 = vunpack.c.h.b16 %v120
  %v127 = vpack.c.b16 %v123, %v123
  %v128 = vpack.c.b16 %v124, %v124
  %v129 = vpack.c.b16 %v125, %v125
  %v130 = vpack.c.b16 %v126, %v126
  %vm135 = vcmask 257024
  %136 = vst.msk [vmem:[%s6] sm:$0xf] %vm135, %v127
  %137 = vst.msk [vmem:[%s6 + $0x4] sm:$0xf] %vm135, %v128
  %138 = vst.msk [vmem:[%s6 + $0x8] sm:$0xf] %vm135, %v129
  %139 = vst.msk [vmem:[%s6 + $0xc] sm:$0xf] %vm135, %v130
  %v140 = vld [vmem:[%s1] sm:$0xf]
  %v141 = vld [vmem:[%s1 + $0x4] sm:$0xf]
  %v142 = vld [vmem:[%s1 + $0x8] sm:$0xf]
  %v143 = vld [vmem:[%s1 + $0xc] sm:$0xf]
  %v144 = vld [vmem:[%s4] sm:$0xf]
  %v145 = vld [vmem:[%s4 + $0x4] sm:$0xf]
  %v146 = vld [vmem:[%s4 + $0x8] sm:$0xf]
  %v147 = vld [vmem:[%s4 + $0xc] sm:$0xf]
  %v148 = vld [vmem:[%s5] sm:$0x1]
  %v150 = vlaneseq
  %v151 = vshrl.u32 %v150, 7
  %v152 = vsub.s32 0, %v151
  %v153 = vrot.slane %v148, %v152
  %v159 = vunpack.c.l.b16 %v140
  %v160 = vunpack.c.l.b16 %v141
  %v161 = vunpack.c.l.b16 %v142
  %v162 = vunpack.c.l.b16 %v143
  %v163 = vpack.c.b16 %v160, %v159
  %v164 = vpack.c.b16 %v162, %v161
  %v169 = vunpack.c.l.b16 %v144
  %v170 = vunpack.c.l.b16 %v145
  %v171 = vunpack.c.l.b16 %v146
  %v172 = vunpack.c.l.b16 %v147
  %v173 = vpack.c.b16 %v170, %v169
  %v174 = vpack.c.b16 %v172, %v171
  %v178 = vsel %vm63, %v163, 0
  %v181 = vsel %vm63, %v164, 0
  %183 = vmatprep.subr.bf16.mxu0 0
  %184 = vmatpush1.bf16.msra.mxu0 %v173
  %185 = vmatprep.subr.bf16.mxu0 0
  %186 = vmatpush1.bf16.msra.mxu0 %v174
  %187 = vmatprep.subr.bf16.mxu0 0
  %188 = vmatpush1.bf16.msra.mxu0 0
  %189 = vmatprep.subr.bf16.mxu0 0
  %190 = vmatpush1.bf16.msra.mxu0 0
  %191 = vmatprep.subr.bf16.mxu0 0
  %192 = vmatpush1.bf16.msra.mxu0 0
  %193 = vmatprep.subr.bf16.mxu0 0
  %194 = vmatpush1.bf16.msra.mxu0 0
  %195 = vmatprep.subr.bf16.mxu0 0
  %196 = vmatpush1.bf16.msra.mxu0 0
  %197 = vmatprep.subr.bf16.mxu0 0
  %198 = vmatpush1.bf16.msra.mxu0 0
  %199 = vmatprep.subr.bf16.mxu0 0
  %200 = vmatpush1.bf16.msra.mxu0 0
  %201 = vmatprep.subr.bf16.mxu0 0
  %202 = vmatpush1.bf16.msra.mxu0 0
  %203 = vmatprep.subr.bf16.mxu0 0
  %204 = vmatpush1.bf16.msra.mxu0 0
  %205 = vmatprep.subr.bf16.mxu0 0
  %206 = vmatpush1.bf16.msra.mxu0 0
  %207 = vmatprep.subr.bf16.mxu0 0
  %208 = vmatpush1.bf16.msra.mxu0 0
  %209 = vmatprep.subr.bf16.mxu0 0
  %210 = vmatpush1.bf16.msra.mxu0 0
  %211 = vmatprep.subr.bf16.mxu0 0
  %212 = vmatpush1.bf16.msra.mxu0 0
  %213 = vmatprep.subr.bf16.mxu0 0
  %214 = vmatpush1.bf16.msra.mxu0 0
  %215 = vmatprep.mubr.bf16.mxu0 0
  %216 = vmatmul.mubr.bf16.gmra.mrb[0].mxu0 %v178
  %v217 = vpop.f32.mrb[0].mxu0
  %v218 = vadd.f32 %v153, %v217
  %v219 = vpop.f32.mrb[0].mxu0
  %v220 = vpop.f32.mrb[0].mxu0
  %v221 = vadd.f32 %v153, %v220
  %v222 = vpop.f32.mrb[0].mxu0
  %223 = vmatprep.mubr.bf16.mxu0 0
  %224 = vmatmul.mubr.bf16.gmra.mrb[0].mxu0 %v181
  %v225 = vpop.f32.mrb[0].mxu0
  %v226 = vadd.f32 %v153, %v225
  %v227 = vpop.f32.mrb[0].mxu0
  %v228 = vpop.f32.mrb[0].mxu0
  %v229 = vadd.f32 %v153, %v228
  %v230 = vpop.f32.mrb[0].mxu0
  %231 = vdwg.mxu0
  %v232 = vpack.c.bf16 %v221, %v218
  %v233 = vpack.c.bf16 %v229, %v226
  %v236 = vunpack.c.l.b16 %v232
  %v237 = vunpack.c.h.b16 %v232
  %v238 = vunpack.c.l.b16 %v233
  %v239 = vunpack.c.h.b16 %v233
  %v240 = vpack.c.b16 %v236, %v236
  %v241 = vpack.c.b16 %v237, %v237
  %v242 = vpack.c.b16 %v238, %v238
  %v243 = vpack.c.b16 %v239, %v239
  %248 = vst.msk [vmem:[%s7] sm:$0xf] %vm135, %v240
  %249 = vst.msk [vmem:[%s7 + $0x4] sm:$0xf] %vm135, %v241
  %250 = vst.msk [vmem:[%s7 + $0x8] sm:$0xf] %vm135, %v242
  %251 = vst.msk [vmem:[%s7 + $0xc] sm:$0xf] %vm135, %v243
  // Predicated region
  $region26: #{cross_attention_forward.18} parent=0 // pred_check
    _
  $region27: #{cross_attention_forward.18} parent=0 // pred_check_branch
    %253 = sbr.rel (0) target = $region29
  $region28: #{cross_attention_forward.18} parent=0 // pred_region
    _
  $region29: #{cross_attention_forward.18} parent=0 // pred_fallthru
    _
  // Predicated region
  $region30: #{cross_attention_forward.18} parent=0 // pred_check
    _
  $region31: #{cross_attention_forward.18} parent=0 // pred_check_branch
    %255 = sbr.rel (0) target = $region33
  $region32: #{cross_attention_forward.18} parent=0 // pred_region
    _
  $region33: #{cross_attention_forward.18} parent=0 // pred_fallthru
    _
  // Predicated region
  $region34: #{cross_attention_forward.18} parent=0 // pred_check
    _
  $region35: #{cross_attention_forward.18} parent=0 // pred_check_branch
    %257 = sbr.rel (0) target = $region37
  $region36: #{cross_attention_forward.18} parent=0 // pred_region
    _
  $region37: #{cross_attention_forward.18} parent=0 // pred_fallthru
    _
  // Predicated region
  $region38: #{cross_attention_forward.18} parent=0 // pred_check
    _
  $region39: #{cross_attention_forward.18} parent=0 // pred_check_branch
    %259 = sbr.rel (0) target = $region41
  $region40: #{cross_attention_forward.18} parent=0 // pred_region
    _
  $region41: #{cross_attention_forward.18} parent=0 // pred_fallthru
    _

// kernel: cross_attention_forward.27
$region0: #{cross_attention_forward.27}
  #allocation0 [shape = 'u32[]', space=smem, size = 0x4, offset = 0x4, fixed_abs, tag = 'smem constant byte address 0x4 - core index']
  #allocation1 [shape = 'u32[144,128]{1,0:T(1,128)}', space=vmem, size = 0x12000, scoped, tag = 'internal scratch']
  %s0 = inlined_call_operand.vmem [shape: f32[16,32], index: 0, kind: input, shape index: {}]
  %s1 = inlined_call_operand.vmem [shape: f32[1,32], index: 1, kind: input, shape index: {}]
  %s2 = inlined_call_operand.vmem [shape: f32[1,32], index: 2, kind: input, shape index: {}]
  %s3 = inlined_call_operand.hbm [shape: f32[16,32], index: 3, kind: output, shape index: {}]
  %s4 = sld [smem:[#allocation0]]
  $region22: #{cross_attention_forward.27} parent=0
    _
  %s6 = ssub.s32 1, %s4
  %s7 = scalar_select 0, %s6, %s4
  $region1: #{cross_attention_forward.27} parent=0
    #allocation2 [shape = 'u8[8192]{0}', space=vmem, size = 0x2000, scoped, tag = 'output window, operand 0, single buffered']
    #allocation3 [shape = 's32[1]{0}', space=sflag, size = 0x4, scoped, tag = 'scoped memory for cross_attention_forward.27']
    %8 = vsyncpa [#allocation3], 0
    // Predicated region
    $region2: #{cross_attention_forward.27} parent=1 // pred_check
      _
    $region3: #{cross_attention_forward.27} parent=1 // pred_check_branch
      %10 = sbr.rel (0) target = $region5
    $region4: #{cross_attention_forward.27} parent=1 // pred_region
      _
    $region5: #{cross_attention_forward.27} parent=1 // pred_fallthru
      _
    // Predicated region
    $region6: #{cross_attention_forward.27} parent=1 // pred_check
      _
    $region7: #{cross_attention_forward.27} parent=1 // pred_check_branch
      %12 = sbr.rel (0) target = $region9
    $region8: #{cross_attention_forward.27} parent=1 // pred_region
      _
    $region9: #{cross_attention_forward.27} parent=1 // pred_fallthru
      _
    // Predicated region
    $region10: #{cross_attention_forward.27} parent=1 // pred_check
      _
    $region11: #{cross_attention_forward.27} parent=1 // pred_check_branch
      %14 = sbr.rel (0) target = $region13
    $region12: #{cross_attention_forward.27} parent=1 // pred_region
      _
    $region13: #{cross_attention_forward.27} parent=1 // pred_fallthru
      _
    %v15 = vld [vmem:[%s0] sm:$0xff]
    %v16 = vld [vmem:[%s0 + $0x8] sm:$0xff]
    %v17 = vld [vmem:[%s1] sm:$0x1]
    %v18 = vld [vmem:[%s2] sm:$0x1]
    %vm19 = vcmask 261120
    %v20 = vsel %vm19, %v15, 0.0
    %21 = vadd.xlane.f32.xlu0 %v20
    %v22 = vpop.xlane.xlu0 %21
    %v23 = vsel %vm19, %v16, 0.0
    %24 = vadd.xlane.f32.xlu0 %v23
    %v25 = vpop.xlane.xlu0 %24
    %v26 = vrcp.pop 32.0
    %v27 = vmul.f32 %v22, %v26
    %v28 = vmul.f32 %v25, %v26
    %v29 = vsub.f32 %v15, %v27
    %v30 = vsub.f32 %v16, %v28
    %v31 = vmul.f32 %v29, %v29
    %v32 = vmul.f32 %v30, %v30
    %v33 = vsel %vm19, %v31, 0.0
    %34 = vadd.xlane.f32.xlu0 %v33
    %v35 = vpop.xlane.xlu0 %34
    %v36 = vsel %vm19, %v32, 0.0
    %37 = vadd.xlane.f32.xlu0 %v36
    %v38 = vpop.xlane.xlu0 %37
    %v39 = vmul.f32 %v35, %v26
    %v40 = vmul.f32 %v38, %v26
    %v41 = vadd.f32 %v39, 1e-05
    %v42 = vadd.f32 %v40, 1e-05
    %v43 = vrsqrt.pop %v41
    %v44 = vrsqrt.pop %v42
    %v45 = vmul.f32 %v29, %v43
    %v46 = vmul.f32 %v30, %v44
    %v48 = vlaneseq
    %v49 = vshrl.u32 %v48, 7
    %v50 = vsub.s32 0, %v49
    %v51 = vrot.slane %v17, %v50
    %v53 = vmul.f32 %v45, %v51
    %v54 = vmul.f32 %v46, %v51
    %v56 = vlaneseq
    %v57 = vshrl.u32 %v56, 7
    %v58 = vsub.s32 0, %v57
    %v59 = vrot.slane %v18, %v58
    %v61 = vadd.f32 %v53, %v59
    %v62 = vadd.f32 %v54, %v59
    %63 = vst.msk [vmem:[#allocation2] sm:$0xff] %vm19, %v61
    %64 = vst.msk [vmem:[#allocation2 + $0x8] sm:$0xff] %vm19, %v62
    // Predicated region
    $region14: #{cross_attention_forward.27} parent=1 // pred_check
      _
    $region15: #{cross_attention_forward.27} parent=1 // pred_check_branch
      %66 = sbr.rel (0) target = $region17
    $region16: #{cross_attention_forward.27} parent=1 // pred_region
      %s68 = ssub.s32 256, 256
      %69 = vsyncadd [#allocation3], %s68
      %s70 = sshll.u32 [#allocation2], 4
      %s71 = int_to_ptr.vmem [resolvable:$true] %s70
      %76 = dma.vmem_to_hbm [thread:$0]  %s71, 256, %s3, [#allocation3], 128, 128, 8
    $region17: #{cross_attention_forward.27} parent=1 // pred_fallthru
      _
    // Predicated region
    $region18: #{cross_attention_forward.27} parent=1 // pred_check
      _
    $region19: #{cross_attention_forward.27} parent=1 // pred_check_branch
      %78 = sbr.rel (0) target = $region21
    $region20: #{cross_attention_forward.27} parent=1 // pred_region
      %79 = dma.done [#allocation3], 256
    $region21: #{cross_attention_forward.27} parent=1 // pred_fallthru
      _
    %80 = vsyncpa [#allocation3], 1

// kernel: cross_attention_forward.20
$region0: #{cross_attention_forward.20}
  #allocation0 [shape = 'u32[]', space=smem, size = 0x4, offset = 0x4, fixed_abs, tag = 'smem constant byte address 0x4 - core index']
  #allocation1 [shape = 'u32[144,128]{1,0:T(1,128)}', space=vmem, size = 0x12000, scoped, tag = 'internal scratch']
  %s0 = inlined_call_operand.vmem [shape: f32[16,32], index: 0, kind: input, shape index: {}]
  %s1 = inlined_call_operand.vmem [shape: f32[1,32], index: 1, kind: input, shape index: {}]
  %s2 = inlined_call_operand.vmem [shape: f32[1,32], index: 2, kind: input, shape index: {}]
  %s3 = inlined_call_operand.vmem [shape: bf16[32,64], index: 3, kind: input, shape index: {}]
  %s4 = inlined_call_operand.vmem [shape: f32[1,64], index: 4, kind: input, shape index: {}]
  %s5 = inlined_call_operand.vmem [shape: bf16[64,32], index: 5, kind: input, shape index: {}]
  %s6 = inlined_call_operand.vmem [shape: f32[1,32], index: 6, kind: input, shape index: {}]
  %s7 = inlined_call_operand.vmem [shape: f32[16,32], index: 7, kind: output, shape index: {}]
  %s8 = sld [smem:[#allocation0]]
  $region38: #{cross_attention_forward.20} parent=0
    _
  %s10 = ssub.s32 1, %s8
  %s11 = scalar_select 0, %s10, %s8
  // Predicated region
  $region2: #{cross_attention_forward.20} parent=0 // pred_check
    _
  $region3: #{cross_attention_forward.20} parent=0 // pred_check_branch
    %13 = sbr.rel (0) target = $region5
  $region4: #{cross_attention_forward.20} parent=0 // pred_region
    _
  $region5: #{cross_attention_forward.20} parent=0 // pred_fallthru
    _
  // Predicated region
  $region6: #{cross_attention_forward.20} parent=0 // pred_check
    _
  $region7: #{cross_attention_forward.20} parent=0 // pred_check_branch
    %15 = sbr.rel (0) target = $region9
  $region8: #{cross_attention_forward.20} parent=0 // pred_region
    _
  $region9: #{cross_attention_forward.20} parent=0 // pred_fallthru
    _
  // Predicated region
  $region10: #{cross_attention_forward.20} parent=0 // pred_check
    _
  $region11: #{cross_attention_forward.20} parent=0 // pred_check_branch
    %17 = sbr.rel (0) target = $region13
  $region12: #{cross_attention_forward.20} parent=0 // pred_region
    _
  $region13: #{cross_attention_forward.20} parent=0 // pred_fallthru
    _
  // Predicated region
  $region14: #{cross_attention_forward.20} parent=0 // pred_check
    _
  $region15: #{cross_attention_forward.20} parent=0 // pred_check_branch
    %19 = sbr.rel (0) target = $region17
  $region16: #{cross_attention_forward.20} parent=0 // pred_region
    _
  $region17: #{cross_attention_forward.20} parent=0 // pred_fallthru
    _
  // Predicated region
  $region18: #{cross_attention_forward.20} parent=0 // pred_check
    _
  $region19: #{cross_attention_forward.20} parent=0 // pred_check_branch
    %21 = sbr.rel (0) target = $region21
  $region20: #{cross_attention_forward.20} parent=0 // pred_region
    _
  $region21: #{cross_attention_forward.20} parent=0 // pred_fallthru
    _
  // Predicated region
  $region22: #{cross_attention_forward.20} parent=0 // pred_check
    _
  $region23: #{cross_attention_forward.20} parent=0 // pred_check_branch
    %23 = sbr.rel (0) target = $region25
  $region24: #{cross_attention_forward.20} parent=0 // pred_region
    _
  $region25: #{cross_attention_forward.20} parent=0 // pred_fallthru
    _
  // Predicated region
  $region26: #{cross_attention_forward.20} parent=0 // pred_check
    _
  $region27: #{cross_attention_forward.20} parent=0 // pred_check_branch
    %25 = sbr.rel (0) target = $region29
  $region28: #{cross_attention_forward.20} parent=0 // pred_region
    _
  $region29: #{cross_attention_forward.20} parent=0 // pred_fallthru
    _
  %v27 = vld [vmem:[%s0] sm:$0xff]
  %v28 = vld [vmem:[%s0 + $0x8] sm:$0xff]
  %v29 = vld [vmem:[%s1] sm:$0x1]
  %v30 = vld [vmem:[%s2] sm:$0x1]
  %vm31 = vcmask 261120
  %v32 = vsel %vm31, %v27, 0.0
  %33 = vadd.xlane.f32.xlu0 %v32
  %v34 = vpop.xlane.xlu0 %33
  %v35 = vsel %vm31, %v28, 0.0
  %36 = vadd.xlane.f32.xlu0 %v35
  %v37 = vpop.xlane.xlu0 %36
  %v38 = vrcp.pop 32.0
  %v39 = vmul.f32 %v34, %v38
  %v40 = vmul.f32 %v37, %v38
  %v41 = vsub.f32 %v27, %v39
  %v42 = vsub.f32 %v28, %v40
  %v43 = vmul.f32 %v41, %v41
  %v44 = vmul.f32 %v42, %v42
  %v45 = vsel %vm31, %v43, 0.0
  %46 = vadd.xlane.f32.xlu0 %v45
  %v47 = vpop.xlane.xlu0 %46
  %v48 = vsel %vm31, %v44, 0.0
  %49 = vadd.xlane.f32.xlu0 %v48
  %v50 = vpop.xlane.xlu0 %49
  %v51 = vmul.f32 %v47, %v38
  %v52 = vmul.f32 %v50, %v38
  %v53 = vadd.f32 %v51, 1e-05
  %v54 = vadd.f32 %v52, 1e-05
  %v55 = vrsqrt.pop %v53
  %v56 = vrsqrt.pop %v54
  %v57 = vmul.f32 %v41, %v55
  %v58 = vmul.f32 %v42, %v56
  %v60 = vlaneseq
  %v61 = vshrl.u32 %v60, 7
  %v62 = vsub.s32 0, %v61
  %v63 = vrot.slane %v29, %v62
  %v65 = vmul.f32 %v57, %v63
  %v66 = vmul.f32 %v58, %v63
  %v68 = vlaneseq
  %v69 = vshrl.u32 %v68, 7
  %v70 = vsub.s32 0, %v69
  %v71 = vrot.slane %v30, %v70
  %v73 = vadd.f32 %v65, %v71
  %v74 = vadd.f32 %v66, %v71
  %v75 = vpack.c.bf16 %v74, %v73
  %v76 = vld [vmem:[%s3] sm:$0xf]
  %v77 = vld [vmem:[%s3 + $0x4] sm:$0xf]
  %v78 = vld [vmem:[%s3 + $0x8] sm:$0xf]
  %v79 = vld [vmem:[%s3 + $0xc] sm:$0xf]
  %v80 = vld [vmem:[%s4] sm:$0x1]
  %v82 = vlaneseq
  %v83 = vshrl.u32 %v82, 7
  %v84 = vsub.s32 0, %v83
  %v85 = vrot.slane %v80, %v84
  %v91 = vunpack.c.l.b16 %v76
  %v92 = vunpack.c.l.b16 %v77
  %v93 = vunpack.c.l.b16 %v78
  %v94 = vunpack.c.l.b16 %v79
  %v95 = vpack.c.b16 %v92, %v91
  %v96 = vpack.c.b16 %v94, %v93
  %v100 = vsel %vm31, %v75, 0
  %102 = vmatprep.subr.bf16.mxu0 0
  %103 = vmatpush1.bf16.msra.mxu0 %v95
  %104 = vmatprep.subr.bf16.mxu0 0
  %105 = vmatpush1.bf16.msra.mxu0 %v96
  %106 = vmatprep.subr.bf16.mxu0 0
  %107 = vmatpush1.bf16.msra.mxu0 0
  %108 = vmatprep.subr.bf16.mxu0 0
  %109 = vmatpush1.bf16.msra.mxu0 0
  %110 = vmatprep.subr.bf16.mxu0 0
  %111 = vmatpush1.bf16.msra.mxu0 0
  %112 = vmatprep.subr.bf16.mxu0 0
  %113 = vmatpush1.bf16.msra.mxu0 0
  %114 = vmatprep.subr.bf16.mxu0 0
  %115 = vmatpush1.bf16.msra.mxu0 0
  %116 = vmatprep.subr.bf16.mxu0 0
  %117 = vmatpush1.bf16.msra.mxu0 0
  %118 = vmatprep.subr.bf16.mxu0 0
  %119 = vmatpush1.bf16.msra.mxu0 0
  %120 = vmatprep.subr.bf16.mxu0 0
  %121 = vmatpush1.bf16.msra.mxu0 0
  %122 = vmatprep.subr.bf16.mxu0 0
  %123 = vmatpush1.bf16.msra.mxu0 0
  %124 = vmatprep.subr.bf16.mxu0 0
  %125 = vmatpush1.bf16.msra.mxu0 0
  %126 = vmatprep.subr.bf16.mxu0 0
  %127 = vmatpush1.bf16.msra.mxu0 0
  %128 = vmatprep.subr.bf16.mxu0 0
  %129 = vmatpush1.bf16.msra.mxu0 0
  %130 = vmatprep.subr.bf16.mxu0 0
  %131 = vmatpush1.bf16.msra.mxu0 0
  %132 = vmatprep.subr.bf16.mxu0 0
  %133 = vmatpush1.bf16.msra.mxu0 0
  %134 = vmatprep.mubr.bf16.mxu0 0
  %135 = vmatmul.mubr.bf16.gmra.mrb[0].mxu0 %v100
  %v136 = vpop.f32.mrb[0].mxu0
  %v137 = vadd.f32 %v85, %v136
  %v138 = vpop.f32.mrb[0].mxu0
  %v139 = vpop.f32.mrb[0].mxu0
  %v140 = vadd.f32 %v85, %v139
  %v141 = vpop.f32.mrb[0].mxu0
  %142 = vdwg.mxu0
  %v143 = vmax.f32 %v137, 0.0
  %v144 = vmax.f32 %v140, 0.0
  %v145 = vpack.c.bf16 %v144, %v143
  %v146 = vld [vmem:[%s5] sm:$0xf]
  %v147 = vld [vmem:[%s5 + $0x4] sm:$0xf]
  %v148 = vld [vmem:[%s5 + $0x8] sm:$0xf]
  %v149 = vld [vmem:[%s5 + $0xc] sm:$0xf]
  %v150 = vld [vmem:[%s5 + $0x10] sm:$0xf]
  %v151 = vld [vmem:[%s5 + $0x14] sm:$0xf]
  %v152 = vld [vmem:[%s5 + $0x18] sm:$0xf]
  %v153 = vld [vmem:[%s5 + $0x1c] sm:$0xf]
  %v154 = vld [vmem:[%s6] sm:$0x1]
  %v156 = vlaneseq
  %v157 = vshrl.u32 %v156, 7
  %v158 = vsub.s32 0, %v157
  %v159 = vrot.slane %v154, %v158
  %v169 = vunpack.c.l.b16 %v146
  %v170 = vunpack.c.l.b16 %v147
  %v171 = vunpack.c.l.b16 %v148
  %v172 = vunpack.c.l.b16 %v149
  %v173 = vunpack.c.l.b16 %v150
  %v174 = vunpack.c.l.b16 %v151
  %v175 = vunpack.c.l.b16 %v152
  %v176 = vunpack.c.l.b16 %v153
  %v177 = vpack.c.b16 %v170, %v169
  %v178 = vpack.c.b16 %v172, %v171
  %v179 = vpack.c.b16 %v174, %v173
  %v180 = vpack.c.b16 %v176, %v175
  %vm185 = vcmask 523264
  %v187 = vsel %vm185, %v145, 0
  %189 = vmatprep.subr.bf16.mxu0 0
  %190 = vmatpush1.bf16.msra.mxu0 %v177
  %191 = vmatprep.subr.bf16.mxu0 0
  %192 = vmatpush1.bf16.msra.mxu0 %v178
  %193 = vmatprep.subr.bf16.mxu0 0
  %194 = vmatpush1.bf16.msra.mxu0 %v179
  %195 = vmatprep.subr.bf16.mxu0 0
  %196 = vmatpush1.bf16.msra.mxu0 %v180
  %197 = vmatprep.subr.bf16.mxu0 0
  %198 = vmatpush1.bf16.msra.mxu0 0
  %199 = vmatprep.subr.bf16.mxu0 0
  %200 = vmatpush1.bf16.msra.mxu0 0
  %201 = vmatprep.subr.bf16.mxu0 0
  %202 = vmatpush1.bf16.msra.mxu0 0
  %203 = vmatprep.subr.bf16.mxu0 0
  %204 = vmatpush1.bf16.msra.mxu0 0
  %205 = vmatprep.subr.bf16.mxu0 0
  %206 = vmatpush1.bf16.msra.mxu0 0
  %207 = vmatprep.subr.bf16.mxu0 0
  %208 = vmatpush1.bf16.msra.mxu0 0
  %209 = vmatprep.subr.bf16.mxu0 0
  %210 = vmatpush1.bf16.msra.mxu0 0
  %211 = vmatprep.subr.bf16.mxu0 0
  %212 = vmatpush1.bf16.msra.mxu0 0
  %213 = vmatprep.subr.bf16.mxu0 0
  %214 = vmatpush1.bf16.msra.mxu0 0
  %215 = vmatprep.subr.bf16.mxu0 0
  %216 = vmatpush1.bf16.msra.mxu0 0
  %217 = vmatprep.subr.bf16.mxu0 0
  %218 = vmatpush1.bf16.msra.mxu0 0
  %219 = vmatprep.subr.bf16.mxu0 0
  %220 = vmatpush1.bf16.msra.mxu0 0
  %221 = vmatprep.mubr.bf16.mxu0 0
  %222 = vmatmul.mubr.bf16.gmra.mrb[0].mxu0 %v187
  %v223 = vpop.f32.mrb[0].mxu0
  %v224 = vadd.f32 %v159, %v223
  %v225 = vpop.f32.mrb[0].mxu0
  %v226 = vpop.f32.mrb[0].mxu0
  %v227 = vadd.f32 %v159, %v226
  %v228 = vpop.f32.mrb[0].mxu0
  %229 = vdwg.mxu0
  %v230 = vadd.f32 %v27, %v224
  %v231 = vadd.f32 %v28, %v227
  %232 = vst.msk [vmem:[%s7] sm:$0xff] %vm31, %v230
  %233 = vst.msk [vmem:[%s7 + $0x8] sm:$0xff] %vm31, %v231
  // Predicated region
  $region30: #{cross_attention_forward.20} parent=0 // pred_check
    _
  $region31: #{cross_attention_forward.20} parent=0 // pred_check_branch
    %235 = sbr.rel (0) target = $region33
  $region32: #{cross_attention_forward.20} parent=0 // pred_region
    _
  $region33: #{cross_attention_forward.20} parent=0 // pred_fallthru
    _
  // Predicated region
  $region34: #{cross_attention_forward.20} parent=0 // pred_check
    _
  $region35: #{cross_attention_forward.20} parent=0 // pred_check_branch
    %237 = sbr.rel (0) target = $region37
  $region36: #{cross_attention_forward.20} parent=0 // pred_region
    _
  $region37: #{cross_attention_forward.20} parent=0 // pred_fallthru
    _

// kernel: cross_attention_forward.19
$region0: #{cross_attention_forward.19}
  #allocation0 [shape = 'u32[]', space=smem, size = 0x4, offset = 0x4, fixed_abs, tag = 'smem constant byte address 0x4 - core index']
  #allocation1 [shape = 'u32[144,128]{1,0:T(1,128)}', space=vmem, size = 0x12000, scoped, tag = 'internal scratch']
  #allocation2 [shape = 'bf16[8,32]{1,0:T(8,128)(2,1)}', space=vmem, size = 0x800, scoped, tag = 'scratch operand']
  %s0 = inlined_call_operand.vmem [shape: bf16[2,8,32], index: 0, kind: input, shape index: {}]
  %s1 = inlined_call_operand.vmem [shape: bf16[2,16,32], index: 1, kind: input, shape index: {}]
  %s2 = inlined_call_operand.vmem [shape: bf16[2,16,32], index: 2, kind: input, shape index: {}]
  %s3 = inlined_call_operand.vmem [shape: f32[2,1,16], index: 3, kind: input, shape index: {}]
  %s4 = inlined_call_operand.vmem [shape: f32[2,8,32], index: 4, kind: input, shape index: {}]
  %s5 = inlined_call_operand.vmem [shape: bf16[32,32], index: 5, kind: input, shape index: {}]
  %s6 = inlined_call_operand.vmem [shape: f32[1,32], index: 6, kind: input, shape index: {}]
  %s7 = inlined_call_operand.vmem [shape: f32[2,8,32], index: 7, kind: output, shape index: {}]
  %s8 = sld [smem:[#allocation0]]
  $region61: #{cross_attention_forward.19} parent=0
    _
  %s10 = ssub.s32 1, %s8
  %s11 = scalar_select 0, %s10, %s8
  loop: start=0, step=1, limit=4
  $region2: #{cross_attention_forward.19} parent=0 // loop_pre_header
    _
  $region3: #{cross_attention_forward.19} parent=0 // loop_header
    %s13 = sphi 0, %s17
    %p14 = scmp.ge.s32.totalorder %s13, 4
    %s20 = sphi 0, %s32
    %s21 = sphi 0, %s28
    %s22 = sphi 0, %s20
    %s23 = sphi 0, %s21
    %s24 = sphi 0, %s22
    %s25 = sphi 0, %s23
    %s37 = sphi 0, %s39
    %s40 = sphi 0, %s37
    %s41 = sphi 0, %s40
    %s57 = sphi 0, %s41
    %s63 = sphi 0, %s65
    %s66 = sphi 0, %s63
    %s67 = sphi 0, %s66
    %s83 = sphi 0, %s67
    %s89 = sphi 0, %s91
    %s92 = sphi 0, %s89
    %s93 = sphi 0, %s92
    %s109 = sphi 0, %s93
    %s115 = sphi 0, %s117
    %s118 = sphi 0, %s115
    %s119 = sphi 0, %s118
    %s135 = sphi 0, %s119
    %s143 = sphi 0, %s145
    %s146 = sphi 0, %s143
    %s147 = sphi 0, %s146
    %s163 = sphi 0, %s147
    %s167 = sphi 0, %s167
    %s169 = sphi 0, %s167
    %s170 = sphi 0, %s169
    %s184 = sphi 0, %s170
    %s188 = sphi 0, %s188
    %s190 = sphi 0, %s188
    %s191 = sphi 0, %s190
    %s205 = sphi 0, %s191
    %s213 = sphi 0, %s215
    %s216 = sphi 0, %s213
    %s217 = sphi 0, %s216
    %s233 = sphi 0, %s217
  $region4: #{cross_attention_forward.19} parent=0 // loop_header_branch
    %16 = sbr.rel (%p14) target = $region8
  $region5: #{cross_attention_forward.19} parent=0 // loop_body
    %s18 = ssub.s32 %s13, 1
    %s19 = ssub.s32 %s13, 2
    %s26 = sadd.s32 1, %s21
    %p27 = scmp.ge.s32.totalorder %s26, 1
    %s28 = scalar_select %p27, 0, %s26
    %s29 = sadd.s32 1, %s20
    %s30 = scalar_select %p27, %s29, %s20
    %p31 = scmp.ge.s32.totalorder %s30, 2
    %s32 = scalar_select %p31, 0, %s30
    %s33 = ssub.s32 %s20, %s32
    %s34 = ssub.s32 %s21, %s28
    %s35 = sor.u32 %s33, %s34
    %p36 = scmp.eq.s32.totalorder %s35, 0
    %s38 = sadd.s32 %s37, 1
    %s39 = scalar_select %p36, %s37, %s38
    %p42 = pneg %p36
    %p43 = scmp.eq.s32.totalorder %s13, 1
    %p44 = por %p42, %p43
    %p45 = scmp.ne.s32.totalorder %s37, %s40
    %p46 = scmp.eq.s32.totalorder %s13, 0
    %p47 = por %p45, %p46
    %p48 = scmp.ne.s32.totalorder %s37, %s40
    %p49 = scmp.eq.s32.totalorder %s18, 1
    %p50 = por %p48, %p49
    %p51 = scmp.ne.s32.totalorder %s40, %s41
    %p52 = scmp.eq.s32.totalorder %s18, 0
    %p53 = por %p51, %p52
    %p54 = scmp.ne.s32.totalorder %s40, %s41
    %p55 = scmp.eq.s32.totalorder %s19, 1
    %p56 = por %p54, %p55
    %p58 = scmp.ne.s32.totalorder %s41, %s57
    %p59 = scmp.eq.s32.totalorder %s19, 0
    %p60 = por %p58, %p59
    %s61 = ssub.s32 %s20, %s32
    %p62 = scmp.eq.s32.totalorder %s61, 0
    %s64 = sadd.s32 %s63, 1
    %s65 = scalar_select %p62, %s63, %s64
    %p68 = pneg %p62
    %p69 = scmp.eq.s32.totalorder %s13, 1
    %p70 = por %p68, %p69
    %p71 = scmp.ne.s32.totalorder %s63, %s66
    %p72 = scmp.eq.s32.totalorder %s13, 0
    %p73 = por %p71, %p72
    %p74 = scmp.ne.s32.totalorder %s63, %s66
    %p75 = scmp.eq.s32.totalorder %s18, 1
    %p76 = por %p74, %p75
    %p77 = scmp.ne.s32.totalorder %s66, %s67
    %p78 = scmp.eq.s32.totalorder %s18, 0
    %p79 = por %p77, %p78
    %p80 = scmp.ne.s32.totalorder %s66, %s67
    %p81 = scmp.eq.s32.totalorder %s19, 1
    %p82 = por %p80, %p81
    %p84 = scmp.ne.s32.totalorder %s67, %s83
    %p85 = scmp.eq.s32.totalorder %s19, 0
    %p86 = por %p84, %p85
    %s87 = ssub.s32 %s20, %s32
    %p88 = scmp.eq.s32.totalorder %s87, 0
    %s90 = sadd.s32 %s89, 1
    %s91 = scalar_select %p88, %s89, %s90
    %p94 = pneg %p88
    %p95 = scmp.eq.s32.totalorder %s13, 1
    %p96 = por %p94, %p95
    %p97 = scmp.ne.s32.totalorder %s89, %s92
    %p98 = scmp.eq.s32.totalorder %s13, 0
    %p99 = por %p97, %p98
    %p100 = scmp.ne.s32.totalorder %s89, %s92
    %p101 = scmp.eq.s32.totalorder %s18, 1
    %p102 = por %p100, %p101
    %p103 = scmp.ne.s32.totalorder %s92, %s93
    %p104 = scmp.eq.s32.totalorder %s18, 0
    %p105 = por %p103, %p104
    %p106 = scmp.ne.s32.totalorder %s92, %s93
    %p107 = scmp.eq.s32.totalorder %s19, 1
    %p108 = por %p106, %p107
    %p110 = scmp.ne.s32.totalorder %s93, %s109
    %p111 = scmp.eq.s32.totalorder %s19, 0
    %p112 = por %p110, %p111
    %s113 = ssub.s32 %s20, %s32
    %p114 = scmp.eq.s32.totalorder %s113, 0
    %s116 = sadd.s32 %s115, 1
    %s117 = scalar_select %p114, %s115, %s116
    %p120 = pneg %p114
    %p121 = scmp.eq.s32.totalorder %s13, 1
    %p122 = por %p120, %p121
    %p123 = scmp.ne.s32.totalorder %s115, %s118
    %p124 = scmp.eq.s32.totalorder %s13, 0
    %p125 = por %p123, %p124
    %p126 = scmp.ne.s32.totalorder %s115, %s118
    %p127 = scmp.eq.s32.totalorder %s18, 1
    %p128 = por %p126, %p127
    %p129 = scmp.ne.s32.totalorder %s118, %s119
    %p130 = scmp.eq.s32.totalorder %s18, 0
    %p131 = por %p129, %p130
    %p132 = scmp.ne.s32.totalorder %s118, %s119
    %p133 = scmp.eq.s32.totalorder %s19, 1
    %p134 = por %p132, %p133
    %p136 = scmp.ne.s32.totalorder %s119, %s135
    %p137 = scmp.eq.s32.totalorder %s19, 0
    %p138 = por %p136, %p137
    %s139 = ssub.s32 %s20, %s32
    %s140 = ssub.s32 %s21, %s28
    %s141 = sor.u32 %s139, %s140
    %p142 = scmp.eq.s32.totalorder %s141, 0
    %s144 = sadd.s32 %s143, 1
    %s145 = scalar_select %p142, %s143, %s144
    %p148 = pneg %p142
    %p149 = scmp.eq.s32.totalorder %s13, 1
    %p150 = por %p148, %p149
    %p151 = scmp.ne.s32.totalorder %s143, %s146
    %p152 = scmp.eq.s32.totalorder %s13, 0
    %p153 = por %p151, %p152
    %p154 = scmp.ne.s32.totalorder %s143, %s146
    %p155 = scmp.eq.s32.totalorder %s18, 1
    %p156 = por %p154, %p155
    %p157 = scmp.ne.s32.totalorder %s146, %s147
    %p158 = scmp.eq.s32.totalorder %s18, 0
    %p159 = por %p157, %p158
    %p160 = scmp.ne.s32.totalorder %s146, %s147
    %p161 = scmp.eq.s32.totalorder %s19, 1
    %p162 = por %p160, %p161
    %p164 = scmp.ne.s32.totalorder %s147, %s163
    %p165 = scmp.eq.s32.totalorder %s19, 0
    %p166 = por %p164, %p165
    %s168 = sadd.s32 %s167, 1
    %p171 = scmp.eq.s32.totalorder %s13, 1
    %p172 = scmp.ne.s32.totalorder %s167, %s169
    %p173 = scmp.eq.s32.totalorder %s13, 0
    %p174 = por %p172, %p173
    %p175 = scmp.ne.s32.totalorder %s167, %s169
    %p176 = scmp.eq.s32.totalorder %s18, 1
    %p177 = por %p175, %p176
    %p178 = scmp.ne.s32.totalorder %s169, %s170
    %p179 = scmp.eq.s32.totalorder %s18, 0
    %p180 = por %p178, %p179
    %p181 = scmp.ne.s32.totalorder %s169, %s170
    %p182 = scmp.eq.s32.totalorder %s19, 1
    %p183 = por %p181, %p182
    %p185 = scmp.ne.s32.totalorder %s170, %s184
    %p186 = scmp.eq.s32.totalorder %s19, 0
    %p187 = por %p185, %p186
    %s189 = sadd.s32 %s188, 1
    %p192 = scmp.eq.s32.totalorder %s13, 1
    %p193 = scmp.ne.s32.totalorder %s188, %s190
    %p194 = scmp.eq.s32.totalorder %s13, 0
    %p195 = por %p193, %p194
    %p196 = scmp.ne.s32.totalorder %s188, %s190
    %p197 = scmp.eq.s32.totalorder %s18, 1
    %p198 = por %p196, %p197
    %p199 = scmp.ne.s32.totalorder %s190, %s191
    %p200 = scmp.eq.s32.totalorder %s18, 0
    %p201 = por %p199, %p200
    %p202 = scmp.ne.s32.totalorder %s190, %s191
    %p203 = scmp.eq.s32.totalorder %s19, 1
    %p204 = por %p202, %p203
    %p206 = scmp.ne.s32.totalorder %s191, %s205
    %p207 = scmp.eq.s32.totalorder %s19, 0
    %p208 = por %p206, %p207
    %s209 = ssub.s32 %s20, %s32
    %s210 = ssub.s32 %s21, %s28
    %s211 = sor.u32 %s209, %s210
    %p212 = scmp.eq.s32.totalorder %s211, 0
    %s214 = sadd.s32 %s213, 1
    %s215 = scalar_select %p212, %s213, %s214
    %p218 = pneg %p212
    %p219 = scmp.eq.s32.totalorder %s13, 1
    %p220 = por %p218, %p219
    %p221 = scmp.ne.s32.totalorder %s213, %s216
    %p222 = scmp.eq.s32.totalorder %s13, 0
    %p223 = por %p221, %p222
    %p224 = scmp.ne.s32.totalorder %s213, %s216
    %p225 = scmp.eq.s32.totalorder %s18, 1
    %p226 = por %p224, %p225
    %p227 = scmp.ne.s32.totalorder %s216, %s217
    %p228 = scmp.eq.s32.totalorder %s18, 0
    %p229 = por %p227, %p228
    %p230 = scmp.ne.s32.totalorder %s216, %s217
    %p231 = scmp.eq.s32.totalorder %s19, 1
    %p232 = por %p230, %p231
    %p234 = scmp.ne.s32.totalorder %s217, %s233
    %p235 = scmp.eq.s32.totalorder %s19, 0
    %p236 = por %p234, %p235
    %p237 = scmp.le.s32.totalorder 1, %s13
    %p238 = scmp.lt.s32.totalorder %s13, 3
    %p239 = pnand %p237, %p238
    %p240 = pneg %p239
    // Predicated region
    $region9: #{cross_attention_forward.19} parent=5 // pred_check
      _
    $region10: #{cross_attention_forward.19} parent=5 // pred_check_branch
      %242 = sbr.rel (%p239) target = $region12
    $region11: #{cross_attention_forward.19} parent=5 // pred_region
      %s243 = ssub.s32 %s13, 1
      // Predicated region
      $region13: #{cross_attention_forward.19} parent=11 // pred_check
        %p244 = pneg %p180
      $region14: #{cross_attention_forward.19} parent=11 // pred_check_branch
        %246 = sbr.rel (%p244) target = $region16
      $region15: #{cross_attention_forward.19} parent=11 // pred_region
        _
      $region16: #{cross_attention_forward.19} parent=11 // pred_fallthru
        _
      // Predicated region
      $region17: #{cross_attention_forward.19} parent=11 // pred_check
        %p247 = pneg %p201
      $region18: #{cross_attention_forward.19} parent=11 // pred_check_branch
        %249 = sbr.rel (%p247) target = $region20
      $region19: #{cross_attention_forward.19} parent=11 // pred_region
        _
      $region20: #{cross_attention_forward.19} parent=11 // pred_fallthru
        _
    $region12: #{cross_attention_forward.19} parent=5 // pred_fallthru
      _
    %p250 = scmp.lt.s32.totalorder %s13, 2
    // Predicated region
    $region21: #{cross_attention_forward.19} parent=5 // pred_check
      %p251 = pneg %p250
    $region22: #{cross_attention_forward.19} parent=5 // pred_check_branch
      %253 = sbr.rel (%p251) target = $region24
    $region23: #{cross_attention_forward.19} parent=5 // pred_region
      // Predicated region
      $region25: #{cross_attention_forward.19} parent=23 // pred_check
        %p254 = pneg %p47
      $region26: #{cross_attention_forward.19} parent=23 // pred_check_branch
        %256 = sbr.rel (%p254) target = $region28
      $region27: #{cross_attention_forward.19} parent=23 // pred_region
        %p257 = scmp.lt.s32.totalorder %s20, 1
        %s258 = scalar_select %p257, %s20, 1
        %p259 = scmp.lt.s32.totalorder %s21, 0
        %s260 = scalar_select %p259, %s21, 0
        %s261 = sadd.s32 %s260, %s258
        %s262 = smul.addr %s261, 4
        %s263 = scalar_lea.vmem %s0, %s262
      $region28: #{cross_attention_forward.19} parent=23 // pred_fallthru
        _
      // Predicated region
      $region29: #{cross_attention_forward.19} parent=23 // pred_check
        %p264 = pneg %p73
      $region30: #{cross_attention_forward.19} parent=23 // pred_check_branch
        %266 = sbr.rel (%p264) target = $region32
      $region31: #{cross_attention_forward.19} parent=23 // pred_region
        %p267 = scmp.lt.s32.totalorder %s20, 1
        %s268 = scalar_select %p267, %s20, 1
        %s269 = smul.addr %s268, 2
        %s270 = smul.addr %s269, 4
        %s271 = scalar_lea.vmem %s1, %s270
      $region32: #{cross_attention_forward.19} parent=23 // pred_fallthru
        _
      // Predicated region
      $region33: #{cross_attention_forward.19} parent=23 // pred_check
        %p272 = pneg %p99
      $region34: #{cross_attention_forward.19} parent=23 // pred_check_branch
        %274 = sbr.rel (%p272) target = $region36
      $region35: #{cross_attention_forward.19} parent=23 // pred_region
        %p275 = scmp.lt.s32.totalorder %s20, 1
        %s276 = scalar_select %p275, %s20, 1
        %s277 = smul.addr %s276, 2
        %s278 = smul.addr %s277, 4
        %s279 = scalar_lea.vmem %s2, %s278
      $region36: #{cross_attention_forward.19} parent=23 // pred_fallthru
        _
      // Predicated region
      $region37: #{cross_attention_forward.19} parent=23 // pred_check
        %p280 = pneg %p125
      $region38: #{cross_attention_forward.19} parent=23 // pred_check_branch
        %282 = sbr.rel (%p280) target = $region40
      $region39: #{cross_attention_forward.19} parent=23 // pred_region
        %p283 = scmp.lt.s32.totalorder %s20, 1
        %s284 = scalar_select %p283, %s20, 1
        %s285 = scalar_lea.vmem %s3, %s284
      $region40: #{cross_attention_forward.19} parent=23 // pred_fallthru
        _
      // Predicated region
      $region41: #{cross_attention_forward.19} parent=23 // pred_check
        %p286 = pneg %p153
      $region42: #{cross_attention_forward.19} parent=23 // pred_check_branch
        %288 = sbr.rel (%p286) target = $region44
      $region43: #{cross_attention_forward.19} parent=23 // pred_region
        %p289 = scmp.lt.s32.totalorder %s20, 1
        %s290 = scalar_select %p289, %s20, 1
        %p291 = scmp.lt.s32.totalorder %s21, 0
        %s292 = scalar_select %p291, %s21, 0
        %s293 = sadd.s32 %s292, %s290
        %s294 = smul.addr %s293, 8
        %s295 = scalar_lea.vmem %s4, %s294
      $region44: #{cross_attention_forward.19} parent=23 // pred_fallthru
        _
    $region24: #{cross_attention_forward.19} parent=5 // pred_fallthru
      _
    %p296 = scmp.le.s32.totalorder 1, %s13
    %p297 = scmp.lt.s32.totalorder %s13, 3
    %p298 = pnand %p296, %p297
    %p299 = pneg %p298
    // Predicated region
    $region45: #{cross_attention_forward.19} parent=5 // pred_check
      _
    $region46: #{cross_attention_forward.19} parent=5 // pred_check_branch
      %301 = sbr.rel (%p298) target = $region48
    $region47: #{cross_attention_forward.19} parent=5 // pred_region
      %s302 = ssub.s32 %s13, 1
      %p303 = scmp.lt.s32.totalorder %s22, 1
      %s304 = scalar_select %p303, %s22, 1
      %p305 = scmp.lt.s32.totalorder %s23, 0
      %s306 = scalar_select %p305, %s23, 0
      %s307 = sadd.s32 %s306, %s304
      %s308 = smul.addr %s307, 4
      %s309 = scalar_lea.vmem %s0, %s308
      %p310 = pneg %p53
      %p311 = pneg %p50
      %p312 = scmp.lt.s32.totalorder %s22, 1
      %s313 = scalar_select %p312, %s22, 1
      %s314 = smul.addr %s313, 2
      %s315 = smul.addr %s314, 4
      %s316 = scalar_lea.vmem %s1, %s315
      %p317 = pneg %p79
      %p318 = pneg %p76
      %p319 = scmp.lt.s32.totalorder %s22, 1
      %s320 = scalar_select %p319, %s22, 1
      %s321 = smul.addr %s320, 2
      %s322 = smul.addr %s321, 4
      %s323 = scalar_lea.vmem %s2, %s322
      %p324 = pneg %p105
      %p325 = pneg %p102
      %p326 = scmp.lt.s32.totalorder %s22, 1
      %s327 = scalar_select %p326, %s22, 1
      %s328 = scalar_lea.vmem %s3, %s327
      %p329 = pneg %p131
      %p330 = pneg %p128
      %p331 = scmp.lt.s32.totalorder %s22, 1
      %s332 = scalar_select %p331, %s22, 1
      %p333 = scmp.lt.s32.totalorder %s23, 0
      %s334 = scalar_select %p333, %s23, 0
      %s335 = sadd.s32 %s334, %s332
      %s336 = smul.addr %s335, 8
      %s337 = scalar_lea.vmem %s4, %s336
      %p338 = pneg %p159
      %p339 = pneg %p156
      %p340 = pneg %p180
      %p341 = pneg %p177
      %p342 = pneg %p201
      %p343 = pneg %p198
      %p344 = pneg %p229
      %p345 = pneg %p226
      %p346 = scmp.lt.s32.totalorder %s22, 1
      %s347 = scalar_select %p346, %s22, 1
      %p348 = scmp.lt.s32.totalorder %s23, 0
      %s349 = scalar_select %p348, %s23, 0
      %s350 = sadd.s32 %s349, %s347
      %s351 = smul.addr %s350, 8
      %s352 = scalar_lea.vmem %s7, %s351
      %p353 = scmp.lt.s32.totalorder %s22, 1
      %s354 = scalar_select %p353, %s22, 1
      %p355 = scmp.lt.s32.totalorder %s23, 0
      %s356 = scalar_select %p355, %s23, 0
      %s357 = sadd.s32 %s356, %s354
      %s358 = smul.addr %s357, 4
      %s359 = scalar_lea.vmem %s0, %s358
      %p360 = scmp.lt.s32.totalorder %s22, 1
      %s361 = scalar_select %p360, %s22, 1
      %s362 = smul.addr %s361, 2
      %s363 = smul.addr %s362, 4
      %s364 = scalar_lea.vmem %s1, %s363
      %p365 = scmp.lt.s32.totalorder %s22, 1
      %s366 = scalar_select %p365, %s22, 1
      %s367 = smul.addr %s366, 2
      %s368 = smul.addr %s367, 4
      %s369 = scalar_lea.vmem %s2, %s368
      %p370 = scmp.lt.s32.totalorder %s22, 1
      %s371 = scalar_select %p370, %s22, 1
      %s372 = scalar_lea.vmem %s3, %s371
      %p373 = scmp.lt.s32.totalorder %s22, 1
      %s374 = scalar_select %p373, %s22, 1
      %p375 = scmp.lt.s32.totalorder %s23, 0
      %s376 = scalar_select %p375, %s23, 0
      %s377 = sadd.s32 %s376, %s374
      %s378 = smul.addr %s377, 8
      %s379 = scalar_lea.vmem %s4, %s378
      %p380 = scmp.lt.s32.totalorder %s22, 1
      %s381 = scalar_select %p380, %s22, 1
      %p382 = scmp.lt.s32.totalorder %s23, 0
      %s383 = scalar_select %p382, %s23, 0
      %s384 = sadd.s32 %s383, %s381
      %s385 = smul.addr %s384, 8
      %s386 = scalar_lea.vmem %s7, %s385
      %v388 = vld [vmem:[%s372] sm:$0x1]
      %v390 = vlaneseq
      %v391 = vshrl.u32 %v390, 7
      %v392 = vsub.s32 0, %v391
      %v393 = vrot.slane %v388, %v392
      %v395 = vld [vmem:[%s359] sm:$0xf]
      %v396 = vld [vmem:[%s364] sm:$0xf]
      %v397 = vld [vmem:[%s364 + $0x4] sm:$0xf]
      %v398 = vld [vmem:[%s369] sm:$0xf]
      %v399 = vld [vmem:[%s369 + $0x4] sm:$0xf]
      %v402 = vunpack.c.l.b16 %v396
      %v403 = vunpack.c.l.b16 %v397
      %v404 = vpack.c.b16 %v403, %v402
      %vm405 = vcmask 64512
      %v407 = vsel %vm405, %v395, 0
      %v410 = vsel %vm405, %v404, 0
      %412 = vmatprep.subr.bf16.mxu0 0
      %413 = vmatpush1.bf16.xpose.msra.mxu0 %v410
      %414 = vmatprep.subr.bf16.mxu0 0
      %415 = vmatpush1.bf16.xpose.msra.mxu0 0
      %416 = vmatprep.subr.bf16.mxu0 0
      %417 = vmatpush1.bf16.xpose.msra.mxu0 0
      %418 = vmatprep.subr.bf16.mxu0 0
      %419 = vmatpush1.bf16.xpose.msra.mxu0 0
      %420 = vmatprep.subr.bf16.mxu0 0
      %421 = vmatpush1.bf16.xpose.msra.mxu0 0
      %422 = vmatprep.subr.bf16.mxu0 0
      %423 = vmatpush1.bf16.xpose.msra.mxu0 0
      %424 = vmatprep.subr.bf16.mxu0 0
      %425 = vmatpush1.bf16.xpose.msra.mxu0 0
      %426 = vmatprep.subr.bf16.mxu0 0
      %427 = vmatpush1.bf16.xpose.msra.mxu0 0
      %428 = vmatprep.subr.bf16.mxu0 0
      %429 = vmatpush1.bf16.xpose.msra.mxu0 0
      %430 = vmatprep.subr.bf16.mxu0 0
      %431 = vmatpush1.bf16.xpose.msra.mxu0 0
      %432 = vmatprep.subr.bf16.mxu0 0
      %433 = vmatpush1.bf16.xpose.msra.mxu0 0
      %434 = vmatprep.subr.bf16.mxu0 0
      %435 = vmatpush1.bf16.xpose.msra.mxu0 0
      %436 = vmatprep.subr.bf16.mxu0 0
      %437 = vmatpush1.bf16.xpose.msra.mxu0 0
      %438 = vmatprep.subr.bf16.mxu0 0
      %439 = vmatpush1.bf16.xpose.msra.mxu0 0
      %440 = vmatprep.subr.bf16.mxu0 0
      %441 = vmatpush1.bf16.xpose.msra.mxu0 0
      %442 = vmatprep.subr.bf16.mxu0 0
      %443 = vmatpush1.bf16.xpose.msra.mxu0 0
      %444 = vmatprep.mubr.bf16.mxu0 0
      %445 = vmatmul.mubr.bf16.gmra.mrb[0].mxu0 %v407
      %v446 = vpop.f32.mrb[0].mxu0
      %v447 = vadd.f32 %v393, %v446
      %v448 = vpop.f32.mrb[0].mxu0
      %v449 = vpop.f32.mrb[0].mxu0
      %v450 = vpop.f32.mrb[0].mxu0
      %451 = vdwg.mxu0
      %vm452 = vcmask 130048
      %v453 = vsel %vm452, %v447, -inf
      %454 = vmax.xlane.f32.xlu0 %v453
      %v455 = vpop.xlane.xlu0 %454
      %v456 = vsub.f32 %v447, %v455
      %v457 = vmul.f32 %v456, 1.442695
      %v458 = vpow.pop %v457
      %v459 = vsel %vm452, %v458, 0.0
      %460 = vadd.xlane.f32.xlu0 %v459
      %v461 = vpop.xlane.xlu0 %460
      %v462 = vrcp.pop %v461
      %v463 = vmul.f32 %v458, %v462
      %v464 = vpack.c.bf16 %v463, %v463
      %v467 = vunpack.c.l.b16 %v398
      %v468 = vunpack.c.l.b16 %v399
      %v469 = vpack.c.b16 %v468, %v467
      %v472 = vsel %vm452, %v464, 0
      %474 = vmatprep.subr.bf16.mxu0 0
      %475 = vmatpush1.bf16.msra.mxu0 %v469
      %476 = vmatprep.subr.bf16.mxu0 0
      %477 = vmatpush1.bf16.msra.mxu0 0
      %478 = vmatprep.subr.bf16.mxu0 0
      %479 = vmatpush1.bf16.msra.mxu0 0
      %480 = vmatprep.subr.bf16.mxu0 0
      %481 = vmatpush1.bf16.msra.mxu0 0
      %482 = vmatprep.subr.bf16.mxu0 0
      %483 = vmatpush1.bf16.msra.mxu0 0
      %484 = vmatprep.subr.bf16.mxu0 0
      %485 = vmatpush1.bf16.msra.mxu0 0
      %486 = vmatprep.subr.bf16.mxu0 0
      %487 = vmatpush1.bf16.msra.mxu0 0
      %488 = vmatprep.subr.bf16.mxu0 0
      %489 = vmatpush1.bf16.msra.mxu0 0
      %490 = vmatprep.subr.bf16.mxu0 0
      %491 = vmatpush1.bf16.msra.mxu0 0
      %492 = vmatprep.subr.bf16.mxu0 0
      %493 = vmatpush1.bf16.msra.mxu0 0
      %494 = vmatprep.subr.bf16.mxu0 0
      %495 = vmatpush1.bf16.msra.mxu0 0
      %496 = vmatprep.subr.bf16.mxu0 0
      %497 = vmatpush1.bf16.msra.mxu0 0
      %498 = vmatprep.subr.bf16.mxu0 0
      %499 = vmatpush1.bf16.msra.mxu0 0
      %500 = vmatprep.subr.bf16.mxu0 0
      %501 = vmatpush1.bf16.msra.mxu0 0
      %502 = vmatprep.subr.bf16.mxu0 0
      %503 = vmatpush1.bf16.msra.mxu0 0
      %504 = vmatprep.subr.bf16.mxu0 0
      %505 = vmatpush1.bf16.msra.mxu0 0
      %506 = vmatprep.mubr.bf16.mxu0 0
      %507 = vmatmul.mubr.bf16.gmra.mrb[0].mxu0 %v472
      %v508 = vpop.f32.mrb[0].mxu0
      %v509 = vadd.f32 0.0, %v508
      %v510 = vpop.f32.mrb[0].mxu0
      %v511 = vpop.f32.mrb[0].mxu0
      %v512 = vpop.f32.mrb[0].mxu0
      %513 = vdwg.mxu0
      %v514 = vpack.c.bf16 %v509, %v509
      %vm515 = vcmask 60416
      %516 = vst.msk [vmem:[#allocation2] sm:$0xf] %vm515, %v514
      %v517 = vld [vmem:[%s359] sm:$0xf]
      %v518 = vld [vmem:[%s364] sm:$0xf]
      %v519 = vld [vmem:[%s364 + $0x4] sm:$0xf]
      %v520 = vld [vmem:[%s369] sm:$0xf]
      %v521 = vld [vmem:[%s369 + $0x4] sm:$0xf]
      %v523 = vunpack.c.l.b16 %v517
      %v524 = vpack.c.b16 %v523, %v523
      %525 = vrot.lane.b32.xlu0 %v524, 120
      %v526 = vpop.permute.xlu0 %525
      %v529 = vunpack.c.l.b16 %v518
      %v530 = vunpack.c.l.b16 %v519
      %v531 = vpack.c.b16 %v530, %v529
      %532 = vrot.lane.b32.xlu0 %v531, 120
      %v533 = vpop.permute.xlu0 %532
      %v535 = vsel %vm405, %v526, 0
      %v538 = vsel %vm405, %v533, 0
      %540 = vmatprep.subr.bf16.mxu0 0
      %541 = vmatpush1.bf16.xpose.msra.mxu0 %v538
      %542 = vmatprep.subr.bf16.mxu0 0
      %543 = vmatpush1.bf16.xpose.msra.mxu0 0
      %544 = vmatprep.subr.bf16.mxu0 0
      %545 = vmatpush1.bf16.xpose.msra.mxu0 0
      %546 = vmatprep.subr.bf16.mxu0 0
      %547 = vmatpush1.bf16.xpose.msra.mxu0 0
      %548 = vmatprep.subr.bf16.mxu0 0
      %549 = vmatpush1.bf16.xpose.msra.mxu0 0
      %550 = vmatprep.subr.bf16.mxu0 0
      %551 = vmatpush1.bf16.xpose.msra.mxu0 0
      %552 = vmatprep.subr.bf16.mxu0 0
      %553 = vmatpush1.bf16.xpose.msra.mxu0 0
      %554 = vmatprep.subr.bf16.mxu0 0
      %555 = vmatpush1.bf16.xpose.msra.mxu0 0
      %556 = vmatprep.subr.bf16.mxu0 0
      %557 = vmatpush1.bf16.xpose.msra.mxu0 0
      %558 = vmatprep.subr.bf16.mxu0 0
      %559 = vmatpush1.bf16.xpose.msra.mxu0 0
      %560 = vmatprep.subr.bf16.mxu0 0
      %561 = vmatpush1.bf16.xpose.msra.mxu0 0
      %562 = vmatprep.subr.bf16.mxu0 0
      %563 = vmatpush1.bf16.xpose.msra.mxu0 0
      %564 = vmatprep.subr.bf16.mxu0 0
      %565 = vmatpush1.bf16.xpose.msra.mxu0 0
      %566 = vmatprep.subr.bf16.mxu0 0
      %567 = vmatpush1.bf16.xpose.msra.mxu0 0
      %568 = vmatprep.subr.bf16.mxu0 0
      %569 = vmatpush1.bf16.xpose.msra.mxu0 0
      %570 = vmatprep.subr.bf16.mxu0 0
      %571 = vmatpush1.bf16.xpose.msra.mxu0 0
      %572 = vmatprep.mubr.bf16.mxu0 0
      %573 = vmatmul.mubr.bf16.gmra.mrb[0].mxu0 %v535
      %v574 = vpop.f32.mrb[0].mxu0
      %v575 = vadd.f32 %v393, %v574
      %v576 = vpop.f32.mrb[0].mxu0
      %v577 = vpop.f32.mrb[0].mxu0
      %v578 = vpop.f32.mrb[0].mxu0
      %579 = vdwg.mxu0
      %v580 = vsel %vm452, %v575, -inf
      %581 = vmax.xlane.f32.xlu0 %v580
      %v582 = vpop.xlane.xlu0 %581
      %v583 = vsub.f32 %v575, %v582
      %v584 = vmul.f32 %v583, 1.442695
      %v585 = vpow.pop %v584
      %v586 = vsel %vm452, %v585, 0.0
      %587 = vadd.xlane.f32.xlu0 %v586
      %v588 = vpop.xlane.xlu0 %587
      %v589 = vrcp.pop %v588
      %v590 = vmul.f32 %v585, %v589
      %v591 = vpack.c.bf16 %v590, %v590
      %v594 = vunpack.c.l.b16 %v520
      %v595 = vunpack.c.l.b16 %v521
      %v596 = vpack.c.b16 %v595, %v594
      %597 = vrot.lane.b32.xlu0 %v596, 120
      %v598 = vpop.permute.xlu0 %597
      %v601 = vsel %vm452, %v591, 0
      %603 = vmatprep.subr.bf16.mxu0 0
      %604 = vmatpush1.bf16.msra.mxu0 %v598
      %605 = vmatprep.subr.bf16.mxu0 0
      %606 = vmatpush1.bf16.msra.mxu0 0
      %607 = vmatprep.subr.bf16.mxu0 0
      %608 = vmatpush1.bf16.msra.mxu0 0
      %609 = vmatprep.subr.bf16.mxu0 0
      %610 = vmatpush1.bf16.msra.mxu0 0
      %611 = vmatprep.subr.bf16.mxu0 0
      %612 = vmatpush1.bf16.msra.mxu0 0
      %613 = vmatprep.subr.bf16.mxu0 0
      %614 = vmatpush1.bf16.msra.mxu0 0
      %615 = vmatprep.subr.bf16.mxu0 0
      %616 = vmatpush1.bf16.msra.mxu0 0
      %617 = vmatprep.subr.bf16.mxu0 0
      %618 = vmatpush1.bf16.msra.mxu0 0
      %619 = vmatprep.subr.bf16.mxu0 0
      %620 = vmatpush1.bf16.msra.mxu0 0
      %621 = vmatprep.subr.bf16.mxu0 0
      %622 = vmatpush1.bf16.msra.mxu0 0
      %623 = vmatprep.subr.bf16.mxu0 0
      %624 = vmatpush1.bf16.msra.mxu0 0
      %625 = vmatprep.subr.bf16.mxu0 0
      %626 = vmatpush1.bf16.msra.mxu0 0
      %627 = vmatprep.subr.bf16.mxu0 0
      %628 = vmatpush1.bf16.msra.mxu0 0
      %629 = vmatprep.subr.bf16.mxu0 0
      %630 = vmatpush1.bf16.msra.mxu0 0
      %631 = vmatprep.subr.bf16.mxu0 0
      %632 = vmatpush1.bf16.msra.mxu0 0
      %633 = vmatprep.subr.bf16.mxu0 0
      %634 = vmatpush1.bf16.msra.mxu0 0
      %635 = vmatprep.mubr.bf16.mxu0 0
      %636 = vmatmul.mubr.bf16.gmra.mrb[0].mxu0 %v601
      %v637 = vpop.f32.mrb[0].mxu0
      %v638 = vadd.f32 0.0, %v637
      %v639 = vpop.f32.mrb[0].mxu0
      %v640 = vpop.f32.mrb[0].mxu0
      %v641 = vpop.f32.mrb[0].mxu0
      %642 = vdwg.mxu0
      %v643 = vpack.c.bf16 %v638, %v638
      %v645 = vunpack.c.l.b16 %v643
      %v646 = vpack.c.b16 %v645, %v645
      %647 = vrot.lane.b32.xlu0 %v646, 8
      %v648 = vpop.permute.xlu0 %647
      %vm650 = vcmask 126016
      %651 = vst.msk [vmem:[#allocation2] sm:$0xf] %vm650, %v648
      %v652 = vld [vmem:[%s359] sm:$0xf]
      %v653 = vld [vmem:[%s364] sm:$0xf]
      %v654 = vld [vmem:[%s364 + $0x4] sm:$0xf]
      %v655 = vld [vmem:[%s369] sm:$0xf]
      %v656 = vld [vmem:[%s369 + $0x4] sm:$0xf]
      %v658 = vunpack.c.l.b16 %v652
      %v659 = vpack.c.b16 %v658, %v658
      %660 = vrot.lane.b32.xlu0 %v659, 112
      %v661 = vpop.permute.xlu0 %660
      %v664 = vunpack.c.l.b16 %v653
      %v665 = vunpack.c.l.b16 %v654
      %v666 = vpack.c.b16 %v665, %v664
      %667 = vrot.lane.b32.xlu0 %v666, 112
      %v668 = vpop.permute.xlu0 %667
      %v670 = vsel %vm405, %v661, 0
      %v673 = vsel %vm405, %v668, 0
      %675 = vmatprep.subr.bf16.mxu0 0
      %676 = vmatpush1.bf16.xpose.msra.mxu0 %v673
      %677 = vmatprep.subr.bf16.mxu0 0
      %678 = vmatpush1.bf16.xpose.msra.mxu0 0
      %679 = vmatprep.subr.bf16.mxu0 0
      %680 = vmatpush1.bf16.xpose.msra.mxu0 0
      %681 = vmatprep.subr.bf16.mxu0 0
      %682 = vmatpush1.bf16.xpose.msra.mxu0 0
      %683 = vmatprep.subr.bf16.mxu0 0
      %684 = vmatpush1.bf16.xpose.msra.mxu0 0
      %685 = vmatprep.subr.bf16.mxu0 0
      %686 = vmatpush1.bf16.xpose.msra.mxu0 0
      %687 = vmatprep.subr.bf16.mxu0 0
      %688 = vmatpush1.bf16.xpose.msra.mxu0 0
      %689 = vmatprep.subr.bf16.mxu0 0
      %690 = vmatpush1.bf16.xpose.msra.mxu0 0
      %691 = vmatprep.subr.bf16.mxu0 0
      %692 = vmatpush1.bf16.xpose.msra.mxu0 0
      %693 = vmatprep.subr.bf16.mxu0 0
      %694 = vmatpush1.bf16.xpose.msra.mxu0 0
      %695 = vmatprep.subr.bf16.mxu0 0
      %696 = vmatpush1.bf16.xpose.msra.mxu0 0
      %697 = vmatprep.subr.bf16.mxu0 0
      %698 = vmatpush1.bf16.xpose.msra.mxu0 0
      %699 = vmatprep.subr.bf16.mxu0 0
      %700 = vmatpush1.bf16.xpose.msra.mxu0 0
      %701 = vmatprep.subr.bf16.mxu0 0
      %702 = vmatpush1.bf16.xpose.msra.mxu0 0
      %703 = vmatprep.subr.bf16.mxu0 0
      %704 = vmatpush1.bf16.xpose.msra.mxu0 0
      %705 = vmatprep.subr.bf16.mxu0 0
      %706 = vmatpush1.bf16.xpose.msra.mxu0 0
      %707 = vmatprep.mubr.bf16.mxu0 0
      %708 = vmatmul.mubr.bf16.gmra.mrb[0].mxu0 %v670
      %v709 = vpop.f32.mrb[0].mxu0
      %v710 = vadd.f32 %v393, %v709
      %v711 = vpop.f32.mrb[0].mxu0
      %v712 = vpop.f32.mrb[0].mxu0
      %v713 = vpop.f32.mrb[0].mxu0
      %714 = vdwg.mxu0
      %v715 = vsel %vm452, %v710, -inf
      %716 = vmax.xlane.f32.xlu0 %v715
      %v717 = vpop.xlane.xlu0 %716
      %v718 = vsub.f32 %v710, %v717
      %v719 = vmul.f32 %v718, 1.442695
      %v720 = vpow.pop %v719
      %v721 = vsel %vm452, %v720, 0.0
      %722 = vadd.xlane.f32.xlu0 %v721
      %v723 = vpop.xlane.xlu0 %722
      %v724 = vrcp.pop %v723
      %v725 = vmul.f32 %v720, %v724
      %v726 = vpack.c.bf16 %v725, %v725
      %v729 = vunpack.c.l.b16 %v655
      %v730 = vunpack.c.l.b16 %v656
      %v731 = vpack.c.b16 %v730, %v729
      %732 = vrot.lane.b32.xlu0 %v731, 112
      %v733 = vpop.permute.xlu0 %732
      %v736 = vsel %vm452, %v726, 0
      %738 = vmatprep.subr.bf16.mxu0 0
      %739 = vmatpush1.bf16.msra.mxu0 %v733
      %740 = vmatprep.subr.bf16.mxu0 0
      %741 = vmatpush1.bf16.msra.mxu0 0
      %742 = vmatprep.subr.bf16.mxu0 0
      %743 = vmatpush1.bf16.msra.mxu0 0
      %744 = vmatprep.subr.bf16.mxu0 0
      %745 = vmatpush1.bf16.msra.mxu0 0
      %746 = vmatprep.subr.bf16.mxu0 0
      %747 = vmatpush1.bf16.msra.mxu0 0
      %748 = vmatprep.subr.bf16.mxu0 0
      %749 = vmatpush1.bf16.msra.mxu0 0
      %750 = vmatprep.subr.bf16.mxu0 0
      %751 = vmatpush1.bf16.msra.mxu0 0
      %752 = vmatprep.subr.bf16.mxu0 0
      %753 = vmatpush1.bf16.msra.mxu0 0
      %754 = vmatprep.subr.bf16.mxu0 0
      %755 = vmatpush1.bf16.msra.mxu0 0
      %756 = vmatprep.subr.bf16.mxu0 0
      %757 = vmatpush1.bf16.msra.mxu0 0
      %758 = vmatprep.subr.bf16.mxu0 0
      %759 = vmatpush1.bf16.msra.mxu0 0
      %760 = vmatprep.subr.bf16.mxu0 0
      %761 = vmatpush1.bf16.msra.mxu0 0
      %762 = vmatprep.subr.bf16.mxu0 0
      %763 = vmatpush1.bf16.msra.mxu0 0
      %764 = vmatprep.subr.bf16.mxu0 0
      %765 = vmatpush1.bf16.msra.mxu0 0
      %766 = vmatprep.subr.bf16.mxu0 0
      %767 = vmatpush1.bf16.msra.mxu0 0
      %768 = vmatprep.subr.bf16.mxu0 0
      %769 = vmatpush1.bf16.msra.mxu0 0
      %770 = vmatprep.mubr.bf16.mxu0 0
      %771 = vmatmul.mubr.bf16.gmra.mrb[0].mxu0 %v736
      %v772 = vpop.f32.mrb[0].mxu0
      %v773 = vadd.f32 0.0, %v772
      %v774 = vpop.f32.mrb[0].mxu0
      %v775 = vpop.f32.mrb[0].mxu0
      %v776 = vpop.f32.mrb[0].mxu0
      %777 = vdwg.mxu0
      %v778 = vpack.c.bf16 %v773, %v773
      %v780 = vunpack.c.l.b16 %v778
      %v781 = vpack.c.b16 %v780, %v780
      %782 = vrot.lane.b32.xlu0 %v781, 16
      %v783 = vpop.permute.xlu0 %782
      %vm785 = vcmask 191616
      %786 = vst.msk [vmem:[#allocation2] sm:$0xf] %vm785, %v783
      %v787 = vld [vmem:[%s359] sm:$0xf]
      %v788 = vld [vmem:[%s364] sm:$0xf]
      %v789 = vld [vmem:[%s364 + $0x4] sm:$0xf]
      %v790 = vld [vmem:[%s369] sm:$0xf]
      %v791 = vld [vmem:[%s369 + $0x4] sm:$0xf]
      %v793 = vunpack.c.l.b16 %v787
      %v794 = vpack.c.b16 %v793, %v793
      %795 = vrot.lane.b32.xlu0 %v794, 104
      %v796 = vpop.permute.xlu0 %795
      %v799 = vunpack.c.l.b16 %v788
      %v800 = vunpack.c.l.b16 %v789
      %v801 = vpack.c.b16 %v800, %v799
      %802 = vrot.lane.b32.xlu0 %v801, 104
      %v803 = vpop.permute.xlu0 %802
      %v805 = vsel %vm405, %v796, 0
      %v808 = vsel %vm405, %v803, 0
      %810 = vmatprep.subr.bf16.mxu0 0
      %811 = vmatpush1.bf16.xpose.msra.mxu0 %v808
      %812 = vmatprep.subr.bf16.mxu0 0
      %813 = vmatpush1.bf16.xpose.msra.mxu0 0
      %814 = vmatprep.subr.bf16.mxu0 0
      %815 = vmatpush1.bf16.xpose.msra.mxu0 0
      %816 = vmatprep.subr.bf16.mxu0 0
      %817 = vmatpush1.bf16.xpose.msra.mxu0 0
      %818 = vmatprep.subr.bf16.mxu0 0
      %819 = vmatpush1.bf16.xpose.msra.mxu0 0
      %820 = vmatprep.subr.bf16.mxu0 0
      %821 = vmatpush1.bf16.xpose.msra.mxu0 0
      %822 = vmatprep.subr.bf16.mxu0 0
      %823 = vmatpush1.bf16.xpose.msra.mxu0 0
      %824 = vmatprep.subr.bf16.mxu0 0
      %825 = vmatpush1.bf16.xpose.msra.mxu0 0
      %826 = vmatprep.subr.bf16.mxu0 0
      %827 = vmatpush1.bf16.xpose.msra.mxu0 0
      %828 = vmatprep.subr.bf16.mxu0 0
      %829 = vmatpush1.bf16.xpose.msra.mxu0 0
      %830 = vmatprep.subr.bf16.mxu0 0
      %831 = vmatpush1.bf16.xpose.msra.mxu0 0
      %832 = vmatprep.subr.bf16.mxu0 0
      %833 = vmatpush1.bf16.xpose.msra.mxu0 0
      %834 = vmatprep.subr.bf16.mxu0 0
      %835 = vmatpush1.bf16.xpose.msra.mxu0 0
      %836 = vmatprep.subr.bf16.mxu0 0
      %837 = vmatpush1.bf16.xpose.msra.mxu0 0
      %838 = vmatprep.subr.bf16.mxu0 0
      %839 = vmatpush1.bf16.xpose.msra.mxu0 0
      %840 = vmatprep.subr.bf16.mxu0 0
      %841 = vmatpush1.bf16.xpose.msra.mxu0 0
      %842 = vmatprep.mubr.bf16.mxu0 0
      %843 = vmatmul.mubr.bf16.gmra.mrb[0].mxu0 %v805
      %v844 = vpop.f32.mrb[0].mxu0
      %v845 = vadd.f32 %v393, %v844
      %v846 = vpop.f32.mrb[0].mxu0
      %v847 = vpop.f32.mrb[0].mxu0
      %v848 = vpop.f32.mrb[0].mxu0
      %849 = vdwg.mxu0
      %v850 = vsel %vm452, %v845, -inf
      %851 = vmax.xlane.f32.xlu0 %v850
      %v852 = vpop.xlane.xlu0 %851
      %v853 = vsub.f32 %v845, %v852
      %v854 = vmul.f32 %v853, 1.442695
      %v855 = vpow.pop %v854
      %v856 = vsel %vm452, %v855, 0.0
      %857 = vadd.xlane.f32.xlu0 %v856
      %v858 = vpop.xlane.xlu0 %857
      %v859 = vrcp.pop %v858
      %v860 = vmul.f32 %v855, %v859
      %v861 = vpack.c.bf16 %v860, %v860
      %v864 = vunpack.c.l.b16 %v790
      %v865 = vunpack.c.l.b16 %v791
      %v866 = vpack.c.b16 %v865, %v864
      %867 = vrot.lane.b32.xlu0 %v866, 104
      %v868 = vpop.permute.xlu0 %867
      %v871 = vsel %vm452, %v861, 0
      %873 = vmatprep.subr.bf16.mxu0 0
      %874 = vmatpush1.bf16.msra.mxu0 %v868
      %875 = vmatprep.subr.bf16.mxu0 0
      %876 = vmatpush1.bf16.msra.mxu0 0
      %877 = vmatprep.subr.bf16.mxu0 0
      %878 = vmatpush1.bf16.msra.mxu0 0
      %879 = vmatprep.subr.bf16.mxu0 0
      %880 = vmatpush1.bf16.msra.mxu0 0
      %881 = vmatprep.subr.bf16.mxu0 0
      %882 = vmatpush1.bf16.msra.mxu0 0
      %883 = vmatprep.subr.bf16.mxu0 0
      %884 = vmatpush1.bf16.msra.mxu0 0
      %885 = vmatprep.subr.bf16.mxu0 0
      %886 = vmatpush1.bf16.msra.mxu0 0
      %887 = vmatprep.subr.bf16.mxu0 0
      %888 = vmatpush1.bf16.msra.mxu0 0
      %889 = vmatprep.subr.bf16.mxu0 0
      %890 = vmatpush1.bf16.msra.mxu0 0
      %891 = vmatprep.subr.bf16.mxu0 0
      %892 = vmatpush1.bf16.msra.mxu0 0
      %893 = vmatprep.subr.bf16.mxu0 0
      %894 = vmatpush1.bf16.msra.mxu0 0
      %895 = vmatprep.subr.bf16.mxu0 0
      %896 = vmatpush1.bf16.msra.mxu0 0
      %897 = vmatprep.subr.bf16.mxu0 0
      %898 = vmatpush1.bf16.msra.mxu0 0
      %899 = vmatprep.subr.bf16.mxu0 0
      %900 = vmatpush1.bf16.msra.mxu0 0
      %901 = vmatprep.subr.bf16.mxu0 0
      %902 = vmatpush1.bf16.msra.mxu0 0
      %903 = vmatprep.subr.bf16.mxu0 0
      %904 = vmatpush1.bf16.msra.mxu0 0
      %905 = vmatprep.mubr.bf16.mxu0 0
      %906 = vmatmul.mubr.bf16.gmra.mrb[0].mxu0 %v871
      %v907 = vpop.f32.mrb[0].mxu0
      %v908 = vadd.f32 0.0, %v907
      %v909 = vpop.f32.mrb[0].mxu0
      %v910 = vpop.f32.mrb[0].mxu0
      %v911 = vpop.f32.mrb[0].mxu0
      %912 = vdwg.mxu0
      %v913 = vpack.c.bf16 %v908, %v908
      %v915 = vunpack.c.l.b16 %v913
      %v916 = vpack.c.b16 %v915, %v915
      %917 = vrot.lane.b32.xlu0 %v916, 24
      %v918 = vpop.permute.xlu0 %917
      %vm920 = vcmask 257216
      %921 = vst.msk [vmem:[#allocation2] sm:$0xf] %vm920, %v918
      %v922 = vld [vmem:[%s379] sm:$0xff]
      %v923 = vld [vmem:[%s6] sm:$0x1]
      %v925 = vlaneseq
      %v926 = vshrl.u32 %v925, 7
      %v927 = vsub.s32 0, %v926
      %v928 = vrot.slane %v923, %v927
      %v930 = vadd.f32 %v922, %v928
      %v931 = vld [vmem:[#allocation2] sm:$0xf]
      %v932 = vld [vmem:[%s5] sm:$0xf]
      %v933 = vld [vmem:[%s5 + $0x4] sm:$0xf]
      %v934 = vld [vmem:[%s5 + $0x8] sm:$0xf]
      %v935 = vld [vmem:[%s5 + $0xc] sm:$0xf]
      %v940 = vunpack.c.l.b16 %v932
      %v941 = vunpack.c.l.b16 %v933
      %v942 = vunpack.c.l.b16 %v934
      %v943 = vunpack.c.l.b16 %v935
      %v944 = vpack.c.b16 %v941, %v940
      %v945 = vpack.c.b16 %v943, %v942
      %vm948 = vcmask 261120
      %v950 = vsel %vm948, %v931, 0
      %952 = vmatprep.subr.bf16.mxu0 0
      %953 = vmatpush1.bf16.msra.mxu0 %v944
      %954 = vmatprep.subr.bf16.mxu0 0
      %955 = vmatpush1.bf16.msra.mxu0 %v945
      %956 = vmatprep.subr.bf16.mxu0 0
      %957 = vmatpush1.bf16.msra.mxu0 0
      %958 = vmatprep.subr.bf16.mxu0 0
      %959 = vmatpush1.bf16.msra.mxu0 0
      %960 = vmatprep.subr.bf16.mxu0 0
      %961 = vmatpush1.bf16.msra.mxu0 0
      %962 = vmatprep.subr.bf16.mxu0 0
      %963 = vmatpush1.bf16.msra.mxu0 0
      %964 = vmatprep.subr.bf16.mxu0 0
      %965 = vmatpush1.bf16.msra.mxu0 0
      %966 = vmatprep.subr.bf16.mxu0 0
      %967 = vmatpush1.bf16.msra.mxu0 0
      %968 = vmatprep.subr.bf16.mxu0 0
      %969 = vmatpush1.bf16.msra.mxu0 0
      %970 = vmatprep.subr.bf16.mxu0 0
      %971 = vmatpush1.bf16.msra.mxu0 0
      %972 = vmatprep.subr.bf16.mxu0 0
      %973 = vmatpush1.bf16.msra.mxu0 0
      %974 = vmatprep.subr.bf16.mxu0 0
      %975 = vmatpush1.bf16.msra.mxu0 0
      %976 = vmatprep.subr.bf16.mxu0 0
      %977 = vmatpush1.bf16.msra.mxu0 0
      %978 = vmatprep.subr.bf16.mxu0 0
      %979 = vmatpush1.bf16.msra.mxu0 0
      %980 = vmatprep.subr.bf16.mxu0 0
      %981 = vmatpush1.bf16.msra.mxu0 0
      %982 = vmatprep.subr.bf16.mxu0 0
      %983 = vmatpush1.bf16.msra.mxu0 0
      %984 = vmatprep.mubr.bf16.mxu0 0
      %985 = vmatmul.mubr.bf16.gmra.mrb[0].mxu0 %v950
      %v986 = vpop.f32.mrb[0].mxu0
      %v987 = vadd.f32 0.0, %v986
      %v988 = vpop.f32.mrb[0].mxu0
      %v989 = vpop.f32.mrb[0].mxu0
      %v990 = vpop.f32.mrb[0].mxu0
      %991 = vdwg.mxu0
      %v992 = vadd.f32 %v930, %v987
      %993 = vst.msk [vmem:[%s386] sm:$0xff] %vm948, %v992
      %p994 = scmp.lt.s32.totalorder %s22, 1
      %s995 = scalar_select %p994, %s22, 1
      %p996 = scmp.lt.s32.totalorder %s23, 0
      %s997 = scalar_select %p996, %s23, 0
      %s998 = sadd.s32 %s997, %s995
      %s999 = smul.addr %s998, 8
      %s1000 = scalar_lea.vmem %s7, %s999
      // Predicated region
      $region49: #{cross_attention_forward.19} parent=47 // pred_check
        %p1001 = pneg %p226
      $region50: #{cross_attention_forward.19} parent=47 // pred_check_branch
        %1003 = sbr.rel (%p1001) target = $region52
      $region51: #{cross_attention_forward.19} parent=47 // pred_region
        _
      $region52: #{cross_attention_forward.19} parent=47 // pred_fallthru
        _
    $region48: #{cross_attention_forward.19} parent=5 // pred_fallthru
      _
    %p1004 = scmp.le.s32.totalorder 2, %s13
    // Predicated region
    $region53: #{cross_attention_forward.19} parent=5 // pred_check
      %p1005 = pneg %p1004
    $region54: #{cross_attention_forward.19} parent=5 // pred_check_branch
      %1007 = sbr.rel (%p1005) target = $region56
    $region55: #{cross_attention_forward.19} parent=5 // pred_region
      %s1008 = ssub.s32 %s13, 2
      // Predicated region
      $region57: #{cross_attention_forward.19} parent=55 // pred_check
        %p1009 = pneg %p232
      $region58: #{cross_attention_forward.19} parent=55 // pred_check_branch
        %1011 = sbr.rel (%p1009) target = $region60
      $region59: #{cross_attention_forward.19} parent=55 // pred_region
        %p1012 = scmp.lt.s32.totalorder %s24, 1
        %s1013 = scalar_select %p1012, %s24, 1
        %p1014 = scmp.lt.s32.totalorder %s25, 0
        %s1015 = scalar_select %p1014, %s25, 0
        %s1016 = sadd.s32 %s1015, %s1013
        %s1017 = smul.addr %s1016, 8
        %s1018 = scalar_lea.vmem %s7, %s1017
      $region60: #{cross_attention_forward.19} parent=55 // pred_fallthru
        _
    $region56: #{cross_attention_forward.19} parent=5 // pred_fallthru
      _
  $region6: #{cross_attention_forward.19} parent=0 // loop_footer
    %s17 = sadd.s32 1, %s13
  $region7: #{cross_attention_forward.19} parent=0 // loop_footer_branch
    %12 = sbr.rel target = $region3
  $region8: #{cross_attention_forward.19} parent=0 // loop_exit
    _

</llo_original>
